<compile_context>
chip_gen: v7x
topology: tpu7x:2x2x1
jax: 0.10.0
libtpu: 0.0.40
codegen_flags: <defaults>
</compile_context>

<pallas_src>
import functools

import jax
import jax.numpy as jnp
import numpy as np
from jax.experimental import pallas as pl
from jax.experimental.pallas import tpu as pltpu

# ----------------------------- model sizes ---------------------------------
T = 4            # number of time steps (matches weights1/2 shape (4, 1, 1024))
B = 8            # batch size (one sublane group -> free in-kernel reshape)
C_IMG, H_IMG, W_IMG = 3, 16, 16
F_RGB = C_IMG * H_IMG * W_IMG       # 768, flattened frame
F_KP = 128                          # keypoint feature dim
H_KP = 128                          # MLP hidden dim
D = 1024                            # joint feature dim (fixed by weights1/2)
NUM_CLASSES = 128                   # decoder head output dim


# ---------------------------- fused Pallas kernel ---------------------------
def _fused_kernel(*refs, reduction, t_steps, bsz):
    # Ref layout depends (statically) on the reduction mode.
    if reduction == "concat":
        (xr_ref, xk_ref, w_rgb_ref, b_rgb_ref, w_kp1_ref, b_kp1_ref,
         w_kp2_ref, b_kp2_ref, wc_ref, bc_ref, o_ref) = refs
    elif reduction in ("weight_sum", "weight_sum2"):
        (xr_ref, xk_ref, w_rgb_ref, b_rgb_ref, w_kp1_ref, b_kp1_ref,
         w_kp2_ref, b_kp2_ref, w1_ref, w2_ref, wc_ref, bc_ref, o_ref) = refs
    elif reduction in ("sum", "prod"):
        (xr_ref, xk_ref, w_rgb_ref, b_rgb_ref, w_kp1_ref, b_kp1_ref,
         w_kp2_ref, b_kp2_ref, wc_ref, bc_ref, o_ref) = refs
    else:
        raise Exception("wrong reduction")

    mxu_dtype = w_rgb_ref.dtype     # bf16 (weights pre-cast at prepare time)

    # --- RGB encoder: (TB, F_rgb) @ (F_rgb, D) + bias, ReLU (bf16 MXU, f32 acc)
    xr = jnp.dot(xr_ref[...].astype(mxu_dtype), w_rgb_ref[...],
                 preferred_element_type=jnp.float32)
    xr = jnp.maximum(xr + b_rgb_ref[...], 0.0)

    # --- KP encoder (MLP_FE): 2-layer MLP (TB,F_kp)->(TB,H)->(TB,D)
    h = jnp.dot(xk_ref[...].astype(mxu_dtype), w_kp1_ref[...],
                preferred_element_type=jnp.float32)
    h = jnp.maximum(h + b_kp1_ref[...], 0.0)
    xk = jnp.dot(h.astype(mxu_dtype), w_kp2_ref[...],
                 preferred_element_type=jnp.float32)
    xk = xk + b_kp2_ref[...]

    d = xr.shape[-1]

    # --- joint reduction (f32 VPU math) fused with decoder projection (MXU)
    if reduction == "concat":
        # No (TB, 2D) concat materialized: static ref slices of wc (zero-cost
        # VMEM views) and two clean MXU matmuls.
        out = (jnp.dot(xr.astype(mxu_dtype), wc_ref[:d, :],
                       preferred_element_type=jnp.float32) +
               jnp.dot(xk.astype(mxu_dtype), wc_ref[d:, :],
                       preferred_element_type=jnp.float32))
    else:
        if reduction == "sum":
            y = xr + xk
        elif reduction == "prod":
            y = xr * xk
        else:
            # In-kernel broadcast of the (T, D) per-timestep mixing weights.
            # (TB, D) -> (T, B, D) is tile-aligned (B == 8 == sublane group).
            xr3 = xr.reshape(t_steps, bsz, d)
            xk3 = xk.reshape(t_steps, bsz, d)
            w1 = w1_ref[...][:, None, :]           # (T, 1, D), f32
            if reduction == "weight_sum":
                # x_rgb * w1 + x_kp * w1 == (x_rgb + x_kp) * w1
                y3 = (xr3 + xk3) * w1
            else:  # weight_sum2
                w2 = w2_ref[...][:, None, :]
                y3 = xr3 * w1 + xk3 * w2
            y = y3.reshape(t_steps * bsz, d)
        out = jnp.dot(y.astype(mxu_dtype), wc_ref[...],
                      preferred_element_type=jnp.float32)

    o_ref[...] = out + bc_ref[...]


# ------------------------ one-time parameter prep ---------------------------
def prepare_params(params):
    """Load-time (not per-call) conversion: bf16 MXU weights, (T, D) mixers."""
    t = params["weights1"].shape[0]
    d = params["weights1"].shape[-1]
    return {
        "w_rgb": params["w_rgb"].astype(jnp.bfloat16),
        "b_rgb": params["b_rgb"].astype(jnp.float32),
        "w_kp1": params["w_kp1"].astype(jnp.bfloat16),
        "b_kp1": params["b_kp1"].astype(jnp.float32),
        "w_kp2": params["w_kp2"].astype(jnp.bfloat16),
        "b_kp2": params["b_kp2"].astype(jnp.float32),
        "w1": params["weights1"].reshape(t, d).astype(jnp.float32),
        "w2": params["weights2"].reshape(t, d).astype(jnp.float32),
        "wc": params["wc"].astype(jnp.bfloat16),
        "wc_concat": params["wc_concat"].astype(jnp.bfloat16),
        "bc": params["bc"].astype(jnp.float32),
    }


# ------------------------------ full model ---------------------------------
def joint_encoders_forward(x_rgb, x_kp, prepared, reduction="weight_sum2"):
    t, bsz = x_rgb.shape[:2]
    d = prepared["w1"].shape[-1]
    h = prepared["w_kp1"].shape[-1]
    num_classes = prepared["bc"].shape[-1]
    tb = t * bsz

    # Fold T into the batch dimension (metadata-only reshape); activations are
    # passed in f32 and cast to bf16 on the VPU inside the kernel.
    xr2 = x_rgb.reshape(tb, -1)      # (TB, F_rgb)
    xk2 = x_kp.reshape(tb, -1)       # (TB, F_kp)
    f_rgb, f_kp = xr2.shape[1], xk2.shape[1]

    common = (xr2, xk2, prepared["w_rgb"], prepared["b_rgb"],
              prepared["w_kp1"], prepared["b_kp1"],
              prepared["w_kp2"], prepared["b_kp2"])
    if reduction == "concat":
        args = common + (prepared["wc_concat"], prepared["bc"])
        head_in = 2 * d
    elif reduction in ("weight_sum", "weight_sum2"):
        args = common + (prepared["w1"], prepared["w2"],
                         prepared["wc"], prepared["bc"])
        head_in = d
    elif reduction in ("sum", "prod"):
        args = common + (prepared["wc"], prepared["bc"])
        head_in = d
    else:
        raise Exception("wrong reduction")

    # Advisory cost estimate so XLA can overlap the weight DMA of this tiny,
    # HBM-bound kernel with surrounding ops.
    flops = 2 * tb * (f_rgb * d + f_kp * h + h * d + head_in * num_classes)
    bytes_accessed = (sum(int(np.prod(a.shape)) * a.dtype.itemsize for a in args)
                      + tb * num_classes * 4)

    kernel = functools.partial(_fused_kernel, reduction=reduction,
                               t_steps=t, bsz=bsz)
    out = pl.pallas_call(
        kernel,
        out_shape=jax.ShapeDtypeStruct((tb, num_classes), jnp.float32),
        # No grid: whole working set (~2.4 MiB) lives in VMEM; no per-step
        # overhead, no double-buffering of constant weights.
        in_specs=[pl.BlockSpec(memory_space=pltpu.MemorySpace.VMEM)] * len(args),
        out_specs=pl.BlockSpec(memory_space=pltpu.MemorySpace.VMEM),
        cost_estimate=pl.CostEstimate(flops=flops, transcendentals=0,
                                      bytes_accessed=bytes_accessed),
    )(*args)
    return out.reshape(t, bsz, num_classes)


# ------------------------------ f32 reference -------------------------------
def ref_forward(x_rgb, x_kp, params, reduction="weight_sum2"):
    t, bsz = x_rgb.shape[:2]
    xr = x_rgb.reshape(t, bsz, -1)
    xr = jnp.maximum(
        jnp.einsum("tbf,fd->tbd", xr, params["w_rgb"]) + params["b_rgb"][0], 0.0)
    h = jnp.maximum(
        jnp.einsum("tbf,fh->tbh", x_kp, params["w_kp1"]) + params["b_kp1"][0], 0.0)
    xk = jnp.einsum("tbh,hd->tbd", h, params["w_kp2"]) + params["b_kp2"][0]
    w1, w2 = params["weights1"], params["weights2"]
    if reduction == "sum":
        y = xk + xr
    elif reduction == "concat":
        y = jnp.concatenate([xr, xk], -1)
    elif reduction == "prod":
        y = xr * xk
    elif reduction == "weight_sum":
        y = xr * w1 + xk * w1
    elif reduction == "weight_sum2":
        y = xr * w1 + xk * w2
    else:
        raise Exception("wrong reduction")
    wc = params["wc_concat"] if reduction == "concat" else params["wc"]
    return jnp.einsum("tbd,dc->tbc", y, wc) + params["bc"][0]


def init_params(key):
    ks = jax.random.split(key, 10)
    scale = 0.02
    return {
        "w_rgb": scale * jax.random.normal(ks[0], (F_RGB, D), jnp.float32),
        "b_rgb": scale * jax.random.normal(ks[1], (1, D), jnp.float32),
        "w_kp1": scale * jax.random.normal(ks[2], (F_KP, H_KP), jnp.float32),
        "b_kp1": scale * jax.random.normal(ks[3], (1, H_KP), jnp.float32),
        "w_kp2": scale * jax.random.normal(ks[4], (H_KP, D), jnp.float32),
        "b_kp2": scale * jax.random.normal(ks[5], (1, D), jnp.float32),
        # nn.Parameter(torch.randn(4, 1, 1024)) equivalents:
        "weights1": jax.random.normal(ks[6], (4, 1, D), jnp.float32),
        "weights2": jax.random.normal(ks[7], (4, 1, D), jnp.float32),
        # decoder_net (RNNHead) reduced to a linear classification head:
        "wc": scale * jax.random.normal(ks[8], (D, NUM_CLASSES), jnp.float32),
        "wc_concat": scale * jax.random.normal(ks[8], (2 * D, NUM_CLASSES),
                                               jnp.float32),
        "bc": scale * jax.random.normal(ks[9], (1, NUM_CLASSES), jnp.float32),
    }


if __name__ == "__main__":
    key = jax.random.PRNGKey(0)
    k_rgb, k_kp, k_par = jax.random.split(key, 3)

    x_rgb = jax.random.normal(k_rgb, (T, B, C_IMG, H_IMG, W_IMG), jnp.float32)
    x_kp = jax.random.normal(k_kp, (T, B, F_KP), jnp.float32)
    params = init_params(k_par)
    prepared = prepare_params(params)      # one-time bf16 cast, not per call

    for reduction in ("weight_sum2", "weight_sum", "sum", "prod", "concat"):
        out = jax.block_until_ready(
            joint_encoders_forward(x_rgb, x_kp, prepared, reduction))
        ref = jax.block_until_ready(ref_forward(x_rgb, x_kp, params, reduction))
        # bf16 MXU operands (f32 accumulation) vs. pure-f32 reference.
        np.testing.assert_allclose(np.asarray(out), np.asarray(ref),
                                   rtol=2e-2, atol=2e-2)
        assert out.shape == (T, B, NUM_CLASSES)
    print("KERNEL_OK")
</pallas_src>

<mosaic_0001>
module attributes {stable_mosaic.version = 11 : i64} {
  func.func @_fused_kernel(%arg0: memref<32x768xf32, #tpu.memory_space<vmem>>, %arg1: memref<32x128xf32, #tpu.memory_space<vmem>>, %arg2: memref<768x1024xbf16, #tpu.memory_space<vmem>>, %arg3: memref<1x1024xf32, #tpu.memory_space<vmem>>, %arg4: memref<128x128xbf16, #tpu.memory_space<vmem>>, %arg5: memref<1x128xf32, #tpu.memory_space<vmem>>, %arg6: memref<128x1024xbf16, #tpu.memory_space<vmem>>, %arg7: memref<1x1024xf32, #tpu.memory_space<vmem>>, %arg8: memref<4x1024xf32, #tpu.memory_space<vmem>>, %arg9: memref<4x1024xf32, #tpu.memory_space<vmem>>, %arg10: memref<1024x128xbf16, #tpu.memory_space<vmem>>, %arg11: memref<1x128xf32, #tpu.memory_space<vmem>>, %arg12: memref<32x128xf32, #tpu.memory_space<vmem>>) attributes {dimension_semantics = [], scalar_prefetch = 0 : i64, scratch_operands = 0 : i64, tpu.core_type = #tpu.core_type<tc>} {
    %c0 = arith.constant 0 : index
    %c0_0 = arith.constant 0 : index
    %0 = vector.load %arg0[%c0, %c0_0] : memref<32x768xf32, #tpu.memory_space<vmem>>, vector<32x768xf32>
    %1 = arith.truncf %0 : vector<32x768xf32> to vector<32x768xbf16>
    %c0_1 = arith.constant 0 : index
    %c0_2 = arith.constant 0 : index
    %2 = vector.load %arg2[%c0_1, %c0_2] : memref<768x1024xbf16, #tpu.memory_space<vmem>>, vector<768x1024xbf16>
    %cst = arith.constant dense<0.000000e+00> : vector<32x1024xf32>
    %3 = tpu.matmul %1, %2, %cst {dimension_numbers = #tpu.dot_dimension_numbers<[1], [0], [0], [1], [0, 0, 1, 1], [], []>} : vector<32x768xbf16>, vector<768x1024xbf16>, vector<32x1024xf32> -> vector<32x1024xf32>
    %c0_3 = arith.constant 0 : index
    %c0_4 = arith.constant 0 : index
    %4 = vector.load %arg3[%c0_3, %c0_4] : memref<1x1024xf32, #tpu.memory_space<vmem>>, vector<1x1024xf32>
    %5 = vector.broadcast %4 : vector<1x1024xf32> to vector<32x1024xf32>
    %6 = arith.addf %3, %5 : vector<32x1024xf32>
    %cst_5 = arith.constant 0.000000e+00 : f32
    %7 = vector.broadcast %cst_5 : f32 to vector<32x1024xf32>
    %8 = arith.maximumf %6, %7 : vector<32x1024xf32>
    %c0_6 = arith.constant 0 : index
    %c0_7 = arith.constant 0 : index
    %9 = vector.load %arg1[%c0_6, %c0_7] : memref<32x128xf32, #tpu.memory_space<vmem>>, vector<32x128xf32>
    %10 = arith.truncf %9 : vector<32x128xf32> to vector<32x128xbf16>
    %c0_8 = arith.constant 0 : index
    %c0_9 = arith.constant 0 : index
    %11 = vector.load %arg4[%c0_8, %c0_9] : memref<128x128xbf16, #tpu.memory_space<vmem>>, vector<128x128xbf16>
    %cst_10 = arith.constant dense<0.000000e+00> : vector<32x128xf32>
    %12 = tpu.matmul %10, %11, %cst_10 {dimension_numbers = #tpu.dot_dimension_numbers<[1], [0], [0], [1], [0, 0, 1, 1], [], []>} : vector<32x128xbf16>, vector<128x128xbf16>, vector<32x128xf32> -> vector<32x128xf32>
    %c0_11 = arith.constant 0 : index
    %c0_12 = arith.constant 0 : index
    %13 = vector.load %arg5[%c0_11, %c0_12] : memref<1x128xf32, #tpu.memory_space<vmem>>, vector<1x128xf32>
    %14 = vector.broadcast %13 : vector<1x128xf32> to vector<32x128xf32>
    %15 = arith.addf %12, %14 : vector<32x128xf32>
    %cst_13 = arith.constant 0.000000e+00 : f32
    %16 = vector.broadcast %cst_13 : f32 to vector<32x128xf32>
    %17 = arith.maximumf %15, %16 : vector<32x128xf32>
    %18 = arith.truncf %17 : vector<32x128xf32> to vector<32x128xbf16>
    %c0_14 = arith.constant 0 : index
    %c0_15 = arith.constant 0 : index
    %19 = vector.load %arg6[%c0_14, %c0_15] : memref<128x1024xbf16, #tpu.memory_space<vmem>>, vector<128x1024xbf16>
    %cst_16 = arith.constant dense<0.000000e+00> : vector<32x1024xf32>
    %20 = tpu.matmul %18, %19, %cst_16 {dimension_numbers = #tpu.dot_dimension_numbers<[1], [0], [0], [1], [0, 0, 1, 1], [], []>} : vector<32x128xbf16>, vector<128x1024xbf16>, vector<32x1024xf32> -> vector<32x1024xf32>
    %c0_17 = arith.constant 0 : index
    %c0_18 = arith.constant 0 : index
    %21 = vector.load %arg7[%c0_17, %c0_18] : memref<1x1024xf32, #tpu.memory_space<vmem>>, vector<1x1024xf32>
    %22 = vector.broadcast %21 : vector<1x1024xf32> to vector<32x1024xf32>
    %23 = arith.addf %20, %22 : vector<32x1024xf32>
    %24 = vector.shape_cast %8 : vector<32x1024xf32> to vector<4x8x1024xf32>
    %25 = vector.shape_cast %23 : vector<32x1024xf32> to vector<4x8x1024xf32>
    %c0_19 = arith.constant 0 : index
    %c0_20 = arith.constant 0 : index
    %26 = vector.load %arg8[%c0_19, %c0_20] : memref<4x1024xf32, #tpu.memory_space<vmem>>, vector<4x1024xf32>
    %27 = vector.shape_cast %26 : vector<4x1024xf32> to vector<4x1x1024xf32>
    %c0_21 = arith.constant 0 : index
    %c0_22 = arith.constant 0 : index
    %28 = vector.load %arg9[%c0_21, %c0_22] : memref<4x1024xf32, #tpu.memory_space<vmem>>, vector<4x1024xf32>
    %29 = vector.shape_cast %28 : vector<4x1024xf32> to vector<4x1x1024xf32>
    %30 = vector.broadcast %27 : vector<4x1x1024xf32> to vector<4x8x1024xf32>
    %31 = arith.mulf %24, %30 : vector<4x8x1024xf32>
    %32 = vector.broadcast %29 : vector<4x1x1024xf32> to vector<4x8x1024xf32>
    %33 = arith.mulf %25, %32 : vector<4x8x1024xf32>
    %34 = arith.addf %31, %33 : vector<4x8x1024xf32>
    %35 = vector.shape_cast %34 : vector<4x8x1024xf32> to vector<32x1024xf32>
    %36 = arith.truncf %35 : vector<32x1024xf32> to vector<32x1024xbf16>
    %c0_23 = arith.constant 0 : index
    %c0_24 = arith.constant 0 : index
    %37 = vector.load %arg10[%c0_23, %c0_24] : memref<1024x128xbf16, #tpu.memory_space<vmem>>, vector<1024x128xbf16>
    %cst_25 = arith.constant dense<0.000000e+00> : vector<32x128xf32>
    %38 = tpu.matmul %36, %37, %cst_25 {dimension_numbers = #tpu.dot_dimension_numbers<[1], [0], [0], [1], [0, 0, 1, 1], [], []>} : vector<32x1024xbf16>, vector<1024x128xbf16>, vector<32x128xf32> -> vector<32x128xf32>
    %c0_26 = arith.constant 0 : index
    %c0_27 = arith.constant 0 : index
    %39 = vector.load %arg11[%c0_26, %c0_27] : memref<1x128xf32, #tpu.memory_space<vmem>>, vector<1x128xf32>
    %40 = vector.broadcast %39 : vector<1x128xf32> to vector<32x128xf32>
    %41 = arith.addf %38, %40 : vector<32x128xf32>
    %c0_28 = arith.constant 0 : index
    %c0_29 = arith.constant 0 : index
    %42 = vector.load %arg12[%c0_28, %c0_29] : memref<32x128xf32, #tpu.memory_space<vmem>>, vector<32x128xf32>
    tpu.vector_store %arg12[%c0_28, %c0_29], %41 {strides = array<i32>} : memref<32x128xf32, #tpu.memory_space<vmem>>, vector<32x128xf32>,
    return
  }
}

</mosaic_0001>

<llo_original>
// kernel: tpu_custom_call.1
$region0: #{tpu_custom_call.1}
  #allocation0 [shape = 'u32[]', space=smem, size = 0x4, offset = 0x4, fixed_abs, tag = 'smem constant byte address 0x4 - core index']
  #allocation1 [shape = 'u32[144,128]{1,0:T(1,128)}', space=vmem, size = 0x12000, scoped, tag = 'internal scratch']
  %s0 = inlined_call_operand.hbm [shape: f32[32,768], index: 0, kind: input, shape index: {}]
  %s1 = inlined_call_operand.hbm [shape: f32[32,128], index: 1, kind: input, shape index: {}]
  %s2 = inlined_call_operand.hbm [shape: bf16[768,1024], index: 2, kind: input, shape index: {}]
  %s3 = inlined_call_operand.hbm [shape: f32[1,1024], index: 3, kind: input, shape index: {}]
  %s4 = inlined_call_operand.hbm [shape: bf16[128,128], index: 4, kind: input, shape index: {}]
  %s5 = inlined_call_operand.hbm [shape: f32[1,128], index: 5, kind: input, shape index: {}]
  %s6 = inlined_call_operand.hbm [shape: bf16[128,1024], index: 6, kind: input, shape index: {}]
  %s7 = inlined_call_operand.hbm [shape: f32[1,1024], index: 7, kind: input, shape index: {}]
  %s8 = inlined_call_operand.hbm [shape: f32[4,1024], index: 8, kind: input, shape index: {}]
  %s9 = inlined_call_operand.hbm [shape: f32[4,1024], index: 9, kind: input, shape index: {}]
  %s10 = inlined_call_operand.hbm [shape: bf16[1024,128], index: 10, kind: input, shape index: {}]
  %s11 = inlined_call_operand.hbm [shape: f32[1,128], index: 11, kind: input, shape index: {}]
  %s12 = inlined_call_operand.hbm [shape: f32[32,128], index: 12, kind: output, shape index: {}]
  %s13 = sld [smem:[#allocation0]]
  $region106: #{tpu_custom_call.1} parent=0
    _
  %s15 = ssub.s32 1, %s13
  %s16 = scalar_select 0, %s15, %s13
  $region1: #{tpu_custom_call.1} parent=0
    #allocation2 [shape = 'u8[98304]{0}', space=vmem, size = 0x18000, scoped, tag = 'input window, operand 0, single buffered']
    #allocation3 [shape = 's32[1]{0}', space=sflag, size = 0x4, scoped, tag = 'scoped memory for tpu_custom_call.1']
    #allocation4 [shape = 's32[1]{0}', space=sflag, size = 0x4, scoped, tag = 'scoped memory for tpu_custom_call.1']
    #allocation5 [shape = 'u8[16384]{0}', space=vmem, size = 0x4000, scoped, tag = 'input window, operand 1, single buffered']
    #allocation6 [shape = 's32[1]{0}', space=sflag, size = 0x4, scoped, tag = 'scoped memory for tpu_custom_call.1']
    #allocation7 [shape = 'u8[1572864]{0}', space=vmem, size = 0x180000, scoped, tag = 'input window, operand 2, single buffered']
    #allocation8 [shape = 'u8[4096]{0}', space=vmem, size = 0x1000, scoped, tag = 'input window, operand 3, single buffered']
    #allocation9 [shape = 's32[1]{0}', space=sflag, size = 0x4, scoped, tag = 'scoped memory for tpu_custom_call.1']
    #allocation10 [shape = 'u8[32768]{0}', space=vmem, size = 0x8000, scoped, tag = 'input window, operand 4, single buffered']
    #allocation11 [shape = 'u8[512]{0}', space=vmem, size = 0x400, scoped, tag = 'input window, operand 5, single buffered']
    #allocation12 [shape = 's32[1]{0}', space=sflag, size = 0x4, scoped, tag = 'scoped memory for tpu_custom_call.1']
    #allocation13 [shape = 'u8[262144]{0}', space=vmem, size = 0x40000, scoped, tag = 'input window, operand 6, single buffered']
    #allocation14 [shape = 'u8[4096]{0}', space=vmem, size = 0x1000, scoped, tag = 'input window, operand 7, single buffered']
    #allocation15 [shape = 's32[1]{0}', space=sflag, size = 0x4, scoped, tag = 'scoped memory for tpu_custom_call.1']
    #allocation16 [shape = 'u8[16384]{0}', space=vmem, size = 0x4000, scoped, tag = 'input window, operand 8, single buffered']
    #allocation17 [shape = 'u8[16384]{0}', space=vmem, size = 0x4000, scoped, tag = 'input window, operand 9, single buffered']
    #allocation18 [shape = 's32[1]{0}', space=sflag, size = 0x4, scoped, tag = 'scoped memory for tpu_custom_call.1']
    #allocation19 [shape = 'u8[262144]{0}', space=vmem, size = 0x40000, scoped, tag = 'input window, operand 10, single buffered']
    #allocation20 [shape = 'u8[512]{0}', space=vmem, size = 0x400, scoped, tag = 'input window, operand 11, single buffered']
    #allocation21 [shape = 's32[1]{0}', space=sflag, size = 0x4, scoped, tag = 'scoped memory for tpu_custom_call.1']
    #allocation22 [shape = 'u8[16384]{0}', space=vmem, size = 0x4000, scoped, tag = 'output window, operand 0, single buffered']
    %17 = vsyncpa [#allocation3], 0
    %18 = vsyncpa [#allocation6], 0
    %19 = vsyncpa [#allocation9], 0
    %20 = vsyncpa [#allocation12], 0
    %21 = vsyncpa [#allocation15], 0
    %22 = vsyncpa [#allocation18], 0
    %23 = vsyncpa [#allocation21], 0
    %24 = vsyncpa [#allocation4], 0
    // Predicated region
    $region2: #{tpu_custom_call.1} parent=1 // pred_check
      _
    $region3: #{tpu_custom_call.1} parent=1 // pred_check_branch
      %26 = sbr.rel (0) target = $region5
    $region4: #{tpu_custom_call.1} parent=1 // pred_region
      %s28 = ssub.s32 3072, 3072
      %29 = vsyncadd [#allocation3], %s28
      %s30 = sshll.u32 [#allocation2], 4
      %s31 = int_to_ptr.vmem [resolvable:$true] %s30
      %36 = dma.hbm_to_vmem [thread:$0]  %s0, 3072, %s31, [#allocation3], 768, 768, 48
    $region5: #{tpu_custom_call.1} parent=1 // pred_fallthru
      _
    // Predicated region
    $region6: #{tpu_custom_call.1} parent=1 // pred_check
      _
    $region7: #{tpu_custom_call.1} parent=1 // pred_check_branch
      %38 = sbr.rel (0) target = $region9
    $region8: #{tpu_custom_call.1} parent=1 // pred_region
      %s40 = ssub.s32 512, 512
      %41 = vsyncadd [#allocation6], %s40
      %s42 = sshll.u32 [#allocation5], 4
      %s43 = int_to_ptr.vmem [resolvable:$true] %s42
      %48 = dma.hbm_to_vmem [thread:$0]  %s1, 512, %s43, [#allocation6], 128, 128, 8
    $region9: #{tpu_custom_call.1} parent=1 // pred_fallthru
      _
    // Predicated region
    $region10: #{tpu_custom_call.1} parent=1 // pred_check
      _
    $region11: #{tpu_custom_call.1} parent=1 // pred_check_branch
      %50 = sbr.rel (0) target = $region13
    $region12: #{tpu_custom_call.1} parent=1 // pred_region
      %s52 = ssub.s32 49152, 49152
      %53 = vsyncadd [#allocation6], %s52
      %s54 = sshll.u32 [#allocation7], 4
      %s55 = int_to_ptr.vmem [resolvable:$true] %s54
      %60 = dma.hbm_to_vmem [thread:$0]  %s2, 49152, %s55, [#allocation6], 512, 512, 32
    $region13: #{tpu_custom_call.1} parent=1 // pred_fallthru
      _
    // Predicated region
    $region14: #{tpu_custom_call.1} parent=1 // pred_check
      _
    $region15: #{tpu_custom_call.1} parent=1 // pred_check_branch
      %62 = sbr.rel (0) target = $region17
    $region16: #{tpu_custom_call.1} parent=1 // pred_region
      %s64 = ssub.s32 128, 128
      %65 = vsyncadd [#allocation9], %s64
      %s67 = sshll.u32 [#allocation8], 4
      %s68 = int_to_ptr.vmem [resolvable:$true] %s67
      %70 = dma.hbm_to_vmem [thread:$0]  %s3, 128, %s68, [#allocation9]
    $region17: #{tpu_custom_call.1} parent=1 // pred_fallthru
      _
    // Predicated region
    $region18: #{tpu_custom_call.1} parent=1 // pred_check
      _
    $region19: #{tpu_custom_call.1} parent=1 // pred_check_branch
      %72 = sbr.rel (0) target = $region21
    $region20: #{tpu_custom_call.1} parent=1 // pred_region
      %s74 = ssub.s32 1024, 1024
      %75 = vsyncadd [#allocation9], %s74
      %s76 = sshll.u32 [#allocation10], 4
      %s77 = int_to_ptr.vmem [resolvable:$true] %s76
      %82 = dma.hbm_to_vmem [thread:$0]  %s4, 1024, %s77, [#allocation9], 64, 64, 4
    $region21: #{tpu_custom_call.1} parent=1 // pred_fallthru
      _
    // Predicated region
    $region22: #{tpu_custom_call.1} parent=1 // pred_check
      _
    $region23: #{tpu_custom_call.1} parent=1 // pred_check_branch
      %84 = sbr.rel (0) target = $region25
    $region24: #{tpu_custom_call.1} parent=1 // pred_region
      %s86 = ssub.s32 16, 16
      %87 = vsyncadd [#allocation12], %s86
      %s89 = sshll.u32 [#allocation11], 4
      %s90 = int_to_ptr.vmem [resolvable:$true] %s89
      %92 = dma.hbm_to_vmem [thread:$0]  %s5, 16, %s90, [#allocation12]
    $region25: #{tpu_custom_call.1} parent=1 // pred_fallthru
      _
    // Predicated region
    $region26: #{tpu_custom_call.1} parent=1 // pred_check
      _
    $region27: #{tpu_custom_call.1} parent=1 // pred_check_branch
      %94 = sbr.rel (0) target = $region29
    $region28: #{tpu_custom_call.1} parent=1 // pred_region
      %s96 = ssub.s32 8192, 8192
      %97 = vsyncadd [#allocation12], %s96
      %s98 = sshll.u32 [#allocation13], 4
      %s99 = int_to_ptr.vmem [resolvable:$true] %s98
      %104 = dma.hbm_to_vmem [thread:$0]  %s6, 8192, %s99, [#allocation12], 512, 512, 32
    $region29: #{tpu_custom_call.1} parent=1 // pred_fallthru
      _
    // Predicated region
    $region30: #{tpu_custom_call.1} parent=1 // pred_check
      _
    $region31: #{tpu_custom_call.1} parent=1 // pred_check_branch
      %106 = sbr.rel (0) target = $region33
    $region32: #{tpu_custom_call.1} parent=1 // pred_region
      %s108 = ssub.s32 128, 128
      %109 = vsyncadd [#allocation15], %s108
      %s111 = sshll.u32 [#allocation14], 4
      %s112 = int_to_ptr.vmem [resolvable:$true] %s111
      %114 = dma.hbm_to_vmem [thread:$0]  %s7, 128, %s112, [#allocation15]
    $region33: #{tpu_custom_call.1} parent=1 // pred_fallthru
      _
    // Predicated region
    $region34: #{tpu_custom_call.1} parent=1 // pred_check
      _
    $region35: #{tpu_custom_call.1} parent=1 // pred_check_branch
      %116 = sbr.rel (0) target = $region37
    $region36: #{tpu_custom_call.1} parent=1 // pred_region
      %s118 = ssub.s32 512, 512
      %119 = vsyncadd [#allocation15], %s118
      %s121 = sshll.u32 [#allocation16], 4
      %s122 = int_to_ptr.vmem [resolvable:$true] %s121
      %124 = dma.hbm_to_vmem [thread:$0]  %s8, 512, %s122, [#allocation15]
    $region37: #{tpu_custom_call.1} parent=1 // pred_fallthru
      _
    // Predicated region
    $region38: #{tpu_custom_call.1} parent=1 // pred_check
      _
    $region39: #{tpu_custom_call.1} parent=1 // pred_check_branch
      %126 = sbr.rel (0) target = $region41
    $region40: #{tpu_custom_call.1} parent=1 // pred_region
      %s128 = ssub.s32 512, 512
      %129 = vsyncadd [#allocation18], %s128
      %s131 = sshll.u32 [#allocation17], 4
      %s132 = int_to_ptr.vmem [resolvable:$true] %s131
      %134 = dma.hbm_to_vmem [thread:$0]  %s9, 512, %s132, [#allocation18]
    $region41: #{tpu_custom_call.1} parent=1 // pred_fallthru
      _
    // Predicated region
    $region42: #{tpu_custom_call.1} parent=1 // pred_check
      _
    $region43: #{tpu_custom_call.1} parent=1 // pred_check_branch
      %136 = sbr.rel (0) target = $region45
    $region44: #{tpu_custom_call.1} parent=1 // pred_region
      %s138 = ssub.s32 8192, 8192
      %139 = vsyncadd [#allocation18], %s138
      %s140 = sshll.u32 [#allocation19], 4
      %s141 = int_to_ptr.vmem [resolvable:$true] %s140
      %146 = dma.hbm_to_vmem [thread:$0]  %s10, 8192, %s141, [#allocation18], 64, 64, 4
    $region45: #{tpu_custom_call.1} parent=1 // pred_fallthru
      _
    // Predicated region
    $region46: #{tpu_custom_call.1} parent=1 // pred_check
      _
    $region47: #{tpu_custom_call.1} parent=1 // pred_check_branch
      %148 = sbr.rel (0) target = $region49
    $region48: #{tpu_custom_call.1} parent=1 // pred_region
      %s150 = ssub.s32 16, 16
      %151 = vsyncadd [#allocation21], %s150
      %s153 = sshll.u32 [#allocation20], 4
      %s154 = int_to_ptr.vmem [resolvable:$true] %s153
      %156 = dma.hbm_to_vmem [thread:$0]  %s11, 16, %s154, [#allocation21]
    $region49: #{tpu_custom_call.1} parent=1 // pred_fallthru
      _
    // Predicated region
    $region50: #{tpu_custom_call.1} parent=1 // pred_check
      _
    $region51: #{tpu_custom_call.1} parent=1 // pred_check_branch
      %158 = sbr.rel (0) target = $region53
    $region52: #{tpu_custom_call.1} parent=1 // pred_region
      %159 = dma.done [#allocation3], 3072
    $region53: #{tpu_custom_call.1} parent=1 // pred_fallthru
      _
    // Predicated region
    $region54: #{tpu_custom_call.1} parent=1 // pred_check
      _
    $region55: #{tpu_custom_call.1} parent=1 // pred_check_branch
      %161 = sbr.rel (0) target = $region57
    $region56: #{tpu_custom_call.1} parent=1 // pred_region
      %162 = dma.done [#allocation6], 512
    $region57: #{tpu_custom_call.1} parent=1 // pred_fallthru
      _
    // Predicated region
    $region58: #{tpu_custom_call.1} parent=1 // pred_check
      _
    $region59: #{tpu_custom_call.1} parent=1 // pred_check_branch
      %164 = sbr.rel (0) target = $region61
    $region60: #{tpu_custom_call.1} parent=1 // pred_region
      %165 = dma.done [#allocation6], 49152
    $region61: #{tpu_custom_call.1} parent=1 // pred_fallthru
      _
    // Predicated region
    $region62: #{tpu_custom_call.1} parent=1 // pred_check
      _
    $region63: #{tpu_custom_call.1} parent=1 // pred_check_branch
      %167 = sbr.rel (0) target = $region65
    $region64: #{tpu_custom_call.1} parent=1 // pred_region
      %168 = dma.done [#allocation9], 128
    $region65: #{tpu_custom_call.1} parent=1 // pred_fallthru
      _
    // Predicated region
    $region66: #{tpu_custom_call.1} parent=1 // pred_check
      _
    $region67: #{tpu_custom_call.1} parent=1 // pred_check_branch
      %170 = sbr.rel (0) target = $region69
    $region68: #{tpu_custom_call.1} parent=1 // pred_region
      %171 = dma.done [#allocation9], 1024
    $region69: #{tpu_custom_call.1} parent=1 // pred_fallthru
      _
    // Predicated region
    $region70: #{tpu_custom_call.1} parent=1 // pred_check
      _
    $region71: #{tpu_custom_call.1} parent=1 // pred_check_branch
      %173 = sbr.rel (0) target = $region73
    $region72: #{tpu_custom_call.1} parent=1 // pred_region
      %174 = dma.done [#allocation12], 16
    $region73: #{tpu_custom_call.1} parent=1 // pred_fallthru
      _
    // Predicated region
    $region74: #{tpu_custom_call.1} parent=1 // pred_check
      _
    $region75: #{tpu_custom_call.1} parent=1 // pred_check_branch
      %176 = sbr.rel (0) target = $region77
    $region76: #{tpu_custom_call.1} parent=1 // pred_region
      %177 = dma.done [#allocation12], 8192
    $region77: #{tpu_custom_call.1} parent=1 // pred_fallthru
      _
    // Predicated region
    $region78: #{tpu_custom_call.1} parent=1 // pred_check
      _
    $region79: #{tpu_custom_call.1} parent=1 // pred_check_branch
      %179 = sbr.rel (0) target = $region81
    $region80: #{tpu_custom_call.1} parent=1 // pred_region
      %180 = dma.done [#allocation15], 128
    $region81: #{tpu_custom_call.1} parent=1 // pred_fallthru
      _
    // Predicated region
    $region82: #{tpu_custom_call.1} parent=1 // pred_check
      _
    $region83: #{tpu_custom_call.1} parent=1 // pred_check_branch
      %182 = sbr.rel (0) target = $region85
    $region84: #{tpu_custom_call.1} parent=1 // pred_region
      %183 = dma.done [#allocation15], 512
    $region85: #{tpu_custom_call.1} parent=1 // pred_fallthru
      _
    // Predicated region
    $region86: #{tpu_custom_call.1} parent=1 // pred_check
      _
    $region87: #{tpu_custom_call.1} parent=1 // pred_check_branch
      %185 = sbr.rel (0) target = $region89
    $region88: #{tpu_custom_call.1} parent=1 // pred_region
      %186 = dma.done [#allocation18], 512
    $region89: #{tpu_custom_call.1} parent=1 // pred_fallthru
      _
    // Predicated region
    $region90: #{tpu_custom_call.1} parent=1 // pred_check
      _
    $region91: #{tpu_custom_call.1} parent=1 // pred_check_branch
      %188 = sbr.rel (0) target = $region93
    $region92: #{tpu_custom_call.1} parent=1 // pred_region
      %189 = dma.done [#allocation18], 8192
    $region93: #{tpu_custom_call.1} parent=1 // pred_fallthru
      _
    // Predicated region
    $region94: #{tpu_custom_call.1} parent=1 // pred_check
      _
    $region95: #{tpu_custom_call.1} parent=1 // pred_check_branch
      %191 = sbr.rel (0) target = $region97
    $region96: #{tpu_custom_call.1} parent=1 // pred_region
      %192 = dma.done [#allocation21], 16
    $region97: #{tpu_custom_call.1} parent=1 // pred_fallthru
      _
    %v194 = vld [vmem:[#allocation2] sm:$0xff]
    %v195 = vld [vmem:[#allocation2 + $0x8] sm:$0xff]
    %v196 = vld [vmem:[#allocation2 + $0x10] sm:$0xff]
    %v197 = vld [vmem:[#allocation2 + $0x18] sm:$0xff]
    %v198 = vld [vmem:[#allocation2 + $0x20] sm:$0xff]
    %v199 = vld [vmem:[#allocation2 + $0x28] sm:$0xff]
    %v200 = vld [vmem:[#allocation2 + $0x30] sm:$0xff]
    %v201 = vld [vmem:[#allocation2 + $0x38] sm:$0xff]
    %v202 = vld [vmem:[#allocation2 + $0x40] sm:$0xff]
    %v203 = vld [vmem:[#allocation2 + $0x48] sm:$0xff]
    %v204 = vld [vmem:[#allocation2 + $0x50] sm:$0xff]
    %v205 = vld [vmem:[#allocation2 + $0x58] sm:$0xff]
    %v206 = vld [vmem:[#allocation2 + $0x60] sm:$0xff]
    %v207 = vld [vmem:[#allocation2 + $0x68] sm:$0xff]
    %v208 = vld [vmem:[#allocation2 + $0x70] sm:$0xff]
    %v209 = vld [vmem:[#allocation2 + $0x78] sm:$0xff]
    %v210 = vld [vmem:[#allocation2 + $0x80] sm:$0xff]
    %v211 = vld [vmem:[#allocation2 + $0x88] sm:$0xff]
    %v212 = vld [vmem:[#allocation2 + $0x90] sm:$0xff]
    %v213 = vld [vmem:[#allocation2 + $0x98] sm:$0xff]
    %v214 = vld [vmem:[#allocation2 + $0xa0] sm:$0xff]
    %v215 = vld [vmem:[#allocation2 + $0xa8] sm:$0xff]
    %v216 = vld [vmem:[#allocation2 + $0xb0] sm:$0xff]
    %v217 = vld [vmem:[#allocation2 + $0xb8] sm:$0xff]
    %v218 = vpack.c.bf16 %v200, %v194
    %v219 = vpack.c.bf16 %v201, %v195
    %v220 = vpack.c.bf16 %v202, %v196
    %v221 = vpack.c.bf16 %v203, %v197
    %v222 = vpack.c.bf16 %v204, %v198
    %v223 = vpack.c.bf16 %v205, %v199
    %v224 = vpack.c.bf16 %v212, %v206
    %v225 = vpack.c.bf16 %v213, %v207
    %v226 = vpack.c.bf16 %v214, %v208
    %v227 = vpack.c.bf16 %v215, %v209
    %v228 = vpack.c.bf16 %v216, %v210
    %v229 = vpack.c.bf16 %v217, %v211
    %v230 = vld [vmem:[#allocation7] sm:$0xff]
    %v231 = vld [vmem:[#allocation7 + $0x8] sm:$0xff]
    %v232 = vld [vmem:[#allocation7 + $0x10] sm:$0xff]
    %v233 = vld [vmem:[#allocation7 + $0x18] sm:$0xff]
    %v234 = vld [vmem:[#allocation7 + $0x20] sm:$0xff]
    %v235 = vld [vmem:[#allocation7 + $0x28] sm:$0xff]
    %v236 = vld [vmem:[#allocation7 + $0x30] sm:$0xff]
    %v237 = vld [vmem:[#allocation7 + $0x38] sm:$0xff]
    %v238 = vld [vmem:[#allocation7 + $0x40] sm:$0xff]
    %v239 = vld [vmem:[#allocation7 + $0x48] sm:$0xff]
    %v240 = vld [vmem:[#allocation7 + $0x50] sm:$0xff]
    %v241 = vld [vmem:[#allocation7 + $0x58] sm:$0xff]
    %v242 = vld [vmem:[#allocation7 + $0x60] sm:$0xff]
    %v243 = vld [vmem:[#allocation7 + $0x68] sm:$0xff]
    %v244 = vld [vmem:[#allocation7 + $0x70] sm:$0xff]
    %v245 = vld [vmem:[#allocation7 + $0x78] sm:$0xff]
    %v246 = vld [vmem:[#allocation7 + $0x80] sm:$0xff]
    %v247 = vld [vmem:[#allocation7 + $0x88] sm:$0xff]
    %v248 = vld [vmem:[#allocation7 + $0x90] sm:$0xff]
    %v249 = vld [vmem:[#allocation7 + $0x98] sm:$0xff]
    %v250 = vld [vmem:[#allocation7 + $0xa0] sm:$0xff]
    %v251 = vld [vmem:[#allocation7 + $0xa8] sm:$0xff]
    %v252 = vld [vmem:[#allocation7 + $0xb0] sm:$0xff]
    %v253 = vld [vmem:[#allocation7 + $0xb8] sm:$0xff]
    %v254 = vld [vmem:[#allocation7 + $0xc0] sm:$0xff]
    %v255 = vld [vmem:[#allocation7 + $0xc8] sm:$0xff]
    %v256 = vld [vmem:[#allocation7 + $0xd0] sm:$0xff]
    %v257 = vld [vmem:[#allocation7 + $0xd8] sm:$0xff]
    %v258 = vld [vmem:[#allocation7 + $0xe0] sm:$0xff]
    %v259 = vld [vmem:[#allocation7 + $0xe8] sm:$0xff]
    %v260 = vld [vmem:[#allocation7 + $0xf0] sm:$0xff]
    %v261 = vld [vmem:[#allocation7 + $0xf8] sm:$0xff]
    %v262 = vld [vmem:[#allocation7 + $0x100] sm:$0xff]
    %v263 = vld [vmem:[#allocation7 + $0x108] sm:$0xff]
    %v264 = vld [vmem:[#allocation7 + $0x110] sm:$0xff]
    %v265 = vld [vmem:[#allocation7 + $0x118] sm:$0xff]
    %v266 = vld [vmem:[#allocation7 + $0x120] sm:$0xff]
    %v267 = vld [vmem:[#allocation7 + $0x128] sm:$0xff]
    %v268 = vld [vmem:[#allocation7 + $0x130] sm:$0xff]
    %v269 = vld [vmem:[#allocation7 + $0x138] sm:$0xff]
    %v270 = vld [vmem:[#allocation7 + $0x140] sm:$0xff]
    %v271 = vld [vmem:[#allocation7 + $0x148] sm:$0xff]
    %v272 = vld [vmem:[#allocation7 + $0x150] sm:$0xff]
    %v273 = vld [vmem:[#allocation7 + $0x158] sm:$0xff]
    %v274 = vld [vmem:[#allocation7 + $0x160] sm:$0xff]
    %v275 = vld [vmem:[#allocation7 + $0x168] sm:$0xff]
    %v276 = vld [vmem:[#allocation7 + $0x170] sm:$0xff]
    %v277 = vld [vmem:[#allocation7 + $0x178] sm:$0xff]
    %v278 = vld [vmem:[#allocation7 + $0x180] sm:$0xff]
    %v279 = vld [vmem:[#allocation7 + $0x188] sm:$0xff]
    %v280 = vld [vmem:[#allocation7 + $0x190] sm:$0xff]
    %v281 = vld [vmem:[#allocation7 + $0x198] sm:$0xff]
    %v282 = vld [vmem:[#allocation7 + $0x1a0] sm:$0xff]
    %v283 = vld [vmem:[#allocation7 + $0x1a8] sm:$0xff]
    %v284 = vld [vmem:[#allocation7 + $0x1b0] sm:$0xff]
    %v285 = vld [vmem:[#allocation7 + $0x1b8] sm:$0xff]
    %v286 = vld [vmem:[#allocation7 + $0x1c0] sm:$0xff]
    %v287 = vld [vmem:[#allocation7 + $0x1c8] sm:$0xff]
    %v288 = vld [vmem:[#allocation7 + $0x1d0] sm:$0xff]
    %v289 = vld [vmem:[#allocation7 + $0x1d8] sm:$0xff]
    %v290 = vld [vmem:[#allocation7 + $0x1e0] sm:$0xff]
    %v291 = vld [vmem:[#allocation7 + $0x1e8] sm:$0xff]
    %v292 = vld [vmem:[#allocation7 + $0x1f0] sm:$0xff]
    %v293 = vld [vmem:[#allocation7 + $0x1f8] sm:$0xff]
    %v294 = vld [vmem:[#allocation7 + $0x200] sm:$0xff]
    %v295 = vld [vmem:[#allocation7 + $0x208] sm:$0xff]
    %v296 = vld [vmem:[#allocation7 + $0x210] sm:$0xff]
    %v297 = vld [vmem:[#allocation7 + $0x218] sm:$0xff]
    %v298 = vld [vmem:[#allocation7 + $0x220] sm:$0xff]
    %v299 = vld [vmem:[#allocation7 + $0x228] sm:$0xff]
    %v300 = vld [vmem:[#allocation7 + $0x230] sm:$0xff]
    %v301 = vld [vmem:[#allocation7 + $0x238] sm:$0xff]
    %v302 = vld [vmem:[#allocation7 + $0x240] sm:$0xff]
    %v303 = vld [vmem:[#allocation7 + $0x248] sm:$0xff]
    %v304 = vld [vmem:[#allocation7 + $0x250] sm:$0xff]
    %v305 = vld [vmem:[#allocation7 + $0x258] sm:$0xff]
    %v306 = vld [vmem:[#allocation7 + $0x260] sm:$0xff]
    %v307 = vld [vmem:[#allocation7 + $0x268] sm:$0xff]
    %v308 = vld [vmem:[#allocation7 + $0x270] sm:$0xff]
    %v309 = vld [vmem:[#allocation7 + $0x278] sm:$0xff]
    %v310 = vld [vmem:[#allocation7 + $0x280] sm:$0xff]
    %v311 = vld [vmem:[#allocation7 + $0x288] sm:$0xff]
    %v312 = vld [vmem:[#allocation7 + $0x290] sm:$0xff]
    %v313 = vld [vmem:[#allocation7 + $0x298] sm:$0xff]
    %v314 = vld [vmem:[#allocation7 + $0x2a0] sm:$0xff]
    %v315 = vld [vmem:[#allocation7 + $0x2a8] sm:$0xff]
    %v316 = vld [vmem:[#allocation7 + $0x2b0] sm:$0xff]
    %v317 = vld [vmem:[#allocation7 + $0x2b8] sm:$0xff]
    %v318 = vld [vmem:[#allocation7 + $0x2c0] sm:$0xff]
    %v319 = vld [vmem:[#allocation7 + $0x2c8] sm:$0xff]
    %v320 = vld [vmem:[#allocation7 + $0x2d0] sm:$0xff]
    %v321 = vld [vmem:[#allocation7 + $0x2d8] sm:$0xff]
    %v322 = vld [vmem:[#allocation7 + $0x2e0] sm:$0xff]
    %v323 = vld [vmem:[#allocation7 + $0x2e8] sm:$0xff]
    %v324 = vld [vmem:[#allocation7 + $0x2f0] sm:$0xff]
    %v325 = vld [vmem:[#allocation7 + $0x2f8] sm:$0xff]
    %v326 = vld [vmem:[#allocation7 + $0x300] sm:$0xff]
    %v327 = vld [vmem:[#allocation7 + $0x308] sm:$0xff]
    %v328 = vld [vmem:[#allocation7 + $0x310] sm:$0xff]
    %v329 = vld [vmem:[#allocation7 + $0x318] sm:$0xff]
    %v330 = vld [vmem:[#allocation7 + $0x320] sm:$0xff]
    %v331 = vld [vmem:[#allocation7 + $0x328] sm:$0xff]
    %v332 = vld [vmem:[#allocation7 + $0x330] sm:$0xff]
    %v333 = vld [vmem:[#allocation7 + $0x338] sm:$0xff]
    %v334 = vld [vmem:[#allocation7 + $0x340] sm:$0xff]
    %v335 = vld [vmem:[#allocation7 + $0x348] sm:$0xff]
    %v336 = vld [vmem:[#allocation7 + $0x350] sm:$0xff]
    %v337 = vld [vmem:[#allocation7 + $0x358] sm:$0xff]
    %v338 = vld [vmem:[#allocation7 + $0x360] sm:$0xff]
    %v339 = vld [vmem:[#allocation7 + $0x368] sm:$0xff]
    %v340 = vld [vmem:[#allocation7 + $0x370] sm:$0xff]
    %v341 = vld [vmem:[#allocation7 + $0x378] sm:$0xff]
    %v342 = vld [vmem:[#allocation7 + $0x380] sm:$0xff]
    %v343 = vld [vmem:[#allocation7 + $0x388] sm:$0xff]
    %v344 = vld [vmem:[#allocation7 + $0x390] sm:$0xff]
    %v345 = vld [vmem:[#allocation7 + $0x398] sm:$0xff]
    %v346 = vld [vmem:[#allocation7 + $0x3a0] sm:$0xff]
    %v347 = vld [vmem:[#allocation7 + $0x3a8] sm:$0xff]
    %v348 = vld [vmem:[#allocation7 + $0x3b0] sm:$0xff]
    %v349 = vld [vmem:[#allocation7 + $0x3b8] sm:$0xff]
    %v350 = vld [vmem:[#allocation7 + $0x3c0] sm:$0xff]
    %v351 = vld [vmem:[#allocation7 + $0x3c8] sm:$0xff]
    %v352 = vld [vmem:[#allocation7 + $0x3d0] sm:$0xff]
    %v353 = vld [vmem:[#allocation7 + $0x3d8] sm:$0xff]
    %v354 = vld [vmem:[#allocation7 + $0x3e0] sm:$0xff]
    %v355 = vld [vmem:[#allocation7 + $0x3e8] sm:$0xff]
    %v356 = vld [vmem:[#allocation7 + $0x3f0] sm:$0xff]
    %v357 = vld [vmem:[#allocation7 + $0x3f8] sm:$0xff]
    %v358 = vld [vmem:[#allocation7 + $0x400] sm:$0xff]
    %v359 = vld [vmem:[#allocation7 + $0x408] sm:$0xff]
    %v360 = vld [vmem:[#allocation7 + $0x410] sm:$0xff]
    %v361 = vld [vmem:[#allocation7 + $0x418] sm:$0xff]
    %v362 = vld [vmem:[#allocation7 + $0x420] sm:$0xff]
    %v363 = vld [vmem:[#allocation7 + $0x428] sm:$0xff]
    %v364 = vld [vmem:[#allocation7 + $0x430] sm:$0xff]
    %v365 = vld [vmem:[#allocation7 + $0x438] sm:$0xff]
    %v366 = vld [vmem:[#allocation7 + $0x440] sm:$0xff]
    %v367 = vld [vmem:[#allocation7 + $0x448] sm:$0xff]
    %v368 = vld [vmem:[#allocation7 + $0x450] sm:$0xff]
    %v369 = vld [vmem:[#allocation7 + $0x458] sm:$0xff]
    %v370 = vld [vmem:[#allocation7 + $0x460] sm:$0xff]
    %v371 = vld [vmem:[#allocation7 + $0x468] sm:$0xff]
    %v372 = vld [vmem:[#allocation7 + $0x470] sm:$0xff]
    %v373 = vld [vmem:[#allocation7 + $0x478] sm:$0xff]
    %v374 = vld [vmem:[#allocation7 + $0x480] sm:$0xff]
    %v375 = vld [vmem:[#allocation7 + $0x488] sm:$0xff]
    %v376 = vld [vmem:[#allocation7 + $0x490] sm:$0xff]
    %v377 = vld [vmem:[#allocation7 + $0x498] sm:$0xff]
    %v378 = vld [vmem:[#allocation7 + $0x4a0] sm:$0xff]
    %v379 = vld [vmem:[#allocation7 + $0x4a8] sm:$0xff]
    %v380 = vld [vmem:[#allocation7 + $0x4b0] sm:$0xff]
    %v381 = vld [vmem:[#allocation7 + $0x4b8] sm:$0xff]
    %v382 = vld [vmem:[#allocation7 + $0x4c0] sm:$0xff]
    %v383 = vld [vmem:[#allocation7 + $0x4c8] sm:$0xff]
    %v384 = vld [vmem:[#allocation7 + $0x4d0] sm:$0xff]
    %v385 = vld [vmem:[#allocation7 + $0x4d8] sm:$0xff]
    %v386 = vld [vmem:[#allocation7 + $0x4e0] sm:$0xff]
    %v387 = vld [vmem:[#allocation7 + $0x4e8] sm:$0xff]
    %v388 = vld [vmem:[#allocation7 + $0x4f0] sm:$0xff]
    %v389 = vld [vmem:[#allocation7 + $0x4f8] sm:$0xff]
    %v390 = vld [vmem:[#allocation7 + $0x500] sm:$0xff]
    %v391 = vld [vmem:[#allocation7 + $0x508] sm:$0xff]
    %v392 = vld [vmem:[#allocation7 + $0x510] sm:$0xff]
    %v393 = vld [vmem:[#allocation7 + $0x518] sm:$0xff]
    %v394 = vld [vmem:[#allocation7 + $0x520] sm:$0xff]
    %v395 = vld [vmem:[#allocation7 + $0x528] sm:$0xff]
    %v396 = vld [vmem:[#allocation7 + $0x530] sm:$0xff]
    %v397 = vld [vmem:[#allocation7 + $0x538] sm:$0xff]
    %v398 = vld [vmem:[#allocation7 + $0x540] sm:$0xff]
    %v399 = vld [vmem:[#allocation7 + $0x548] sm:$0xff]
    %v400 = vld [vmem:[#allocation7 + $0x550] sm:$0xff]
    %v401 = vld [vmem:[#allocation7 + $0x558] sm:$0xff]
    %v402 = vld [vmem:[#allocation7 + $0x560] sm:$0xff]
    %v403 = vld [vmem:[#allocation7 + $0x568] sm:$0xff]
    %v404 = vld [vmem:[#allocation7 + $0x570] sm:$0xff]
    %v405 = vld [vmem:[#allocation7 + $0x578] sm:$0xff]
    %v406 = vld [vmem:[#allocation7 + $0x580] sm:$0xff]
    %v407 = vld [vmem:[#allocation7 + $0x588] sm:$0xff]
    %v408 = vld [vmem:[#allocation7 + $0x590] sm:$0xff]
    %v409 = vld [vmem:[#allocation7 + $0x598] sm:$0xff]
    %v410 = vld [vmem:[#allocation7 + $0x5a0] sm:$0xff]
    %v411 = vld [vmem:[#allocation7 + $0x5a8] sm:$0xff]
    %v412 = vld [vmem:[#allocation7 + $0x5b0] sm:$0xff]
    %v413 = vld [vmem:[#allocation7 + $0x5b8] sm:$0xff]
    %v414 = vld [vmem:[#allocation7 + $0x5c0] sm:$0xff]
    %v415 = vld [vmem:[#allocation7 + $0x5c8] sm:$0xff]
    %v416 = vld [vmem:[#allocation7 + $0x5d0] sm:$0xff]
    %v417 = vld [vmem:[#allocation7 + $0x5d8] sm:$0xff]
    %v418 = vld [vmem:[#allocation7 + $0x5e0] sm:$0xff]
    %v419 = vld [vmem:[#allocation7 + $0x5e8] sm:$0xff]
    %v420 = vld [vmem:[#allocation7 + $0x5f0] sm:$0xff]
    %v421 = vld [vmem:[#allocation7 + $0x5f8] sm:$0xff]
    %v422 = vld [vmem:[#allocation7 + $0x600] sm:$0xff]
    %v423 = vld [vmem:[#allocation7 + $0x608] sm:$0xff]
    %v424 = vld [vmem:[#allocation7 + $0x610] sm:$0xff]
    %v425 = vld [vmem:[#allocation7 + $0x618] sm:$0xff]
    %v426 = vld [vmem:[#allocation7 + $0x620] sm:$0xff]
    %v427 = vld [vmem:[#allocation7 + $0x628] sm:$0xff]
    %v428 = vld [vmem:[#allocation7 + $0x630] sm:$0xff]
    %v429 = vld [vmem:[#allocation7 + $0x638] sm:$0xff]
    %v430 = vld [vmem:[#allocation7 + $0x640] sm:$0xff]
    %v431 = vld [vmem:[#allocation7 + $0x648] sm:$0xff]
    %v432 = vld [vmem:[#allocation7 + $0x650] sm:$0xff]
    %v433 = vld [vmem:[#allocation7 + $0x658] sm:$0xff]
    %v434 = vld [vmem:[#allocation7 + $0x660] sm:$0xff]
    %v435 = vld [vmem:[#allocation7 + $0x668] sm:$0xff]
    %v436 = vld [vmem:[#allocation7 + $0x670] sm:$0xff]
    %v437 = vld [vmem:[#allocation7 + $0x678] sm:$0xff]
    %v438 = vld [vmem:[#allocation7 + $0x680] sm:$0xff]
    %v439 = vld [vmem:[#allocation7 + $0x688] sm:$0xff]
    %v440 = vld [vmem:[#allocation7 + $0x690] sm:$0xff]
    %v441 = vld [vmem:[#allocation7 + $0x698] sm:$0xff]
    %v442 = vld [vmem:[#allocation7 + $0x6a0] sm:$0xff]
    %v443 = vld [vmem:[#allocation7 + $0x6a8] sm:$0xff]
    %v444 = vld [vmem:[#allocation7 + $0x6b0] sm:$0xff]
    %v445 = vld [vmem:[#allocation7 + $0x6b8] sm:$0xff]
    %v446 = vld [vmem:[#allocation7 + $0x6c0] sm:$0xff]
    %v447 = vld [vmem:[#allocation7 + $0x6c8] sm:$0xff]
    %v448 = vld [vmem:[#allocation7 + $0x6d0] sm:$0xff]
    %v449 = vld [vmem:[#allocation7 + $0x6d8] sm:$0xff]
    %v450 = vld [vmem:[#allocation7 + $0x6e0] sm:$0xff]
    %v451 = vld [vmem:[#allocation7 + $0x6e8] sm:$0xff]
    %v452 = vld [vmem:[#allocation7 + $0x6f0] sm:$0xff]
    %v453 = vld [vmem:[#allocation7 + $0x6f8] sm:$0xff]
    %v454 = vld [vmem:[#allocation7 + $0x700] sm:$0xff]
    %v455 = vld [vmem:[#allocation7 + $0x708] sm:$0xff]
    %v456 = vld [vmem:[#allocation7 + $0x710] sm:$0xff]
    %v457 = vld [vmem:[#allocation7 + $0x718] sm:$0xff]
    %v458 = vld [vmem:[#allocation7 + $0x720] sm:$0xff]
    %v459 = vld [vmem:[#allocation7 + $0x728] sm:$0xff]
    %v460 = vld [vmem:[#allocation7 + $0x730] sm:$0xff]
    %v461 = vld [vmem:[#allocation7 + $0x738] sm:$0xff]
    %v462 = vld [vmem:[#allocation7 + $0x740] sm:$0xff]
    %v463 = vld [vmem:[#allocation7 + $0x748] sm:$0xff]
    %v464 = vld [vmem:[#allocation7 + $0x750] sm:$0xff]
    %v465 = vld [vmem:[#allocation7 + $0x758] sm:$0xff]
    %v466 = vld [vmem:[#allocation7 + $0x760] sm:$0xff]
    %v467 = vld [vmem:[#allocation7 + $0x768] sm:$0xff]
    %v468 = vld [vmem:[#allocation7 + $0x770] sm:$0xff]
    %v469 = vld [vmem:[#allocation7 + $0x778] sm:$0xff]
    %v470 = vld [vmem:[#allocation7 + $0x780] sm:$0xff]
    %v471 = vld [vmem:[#allocation7 + $0x788] sm:$0xff]
    %v472 = vld [vmem:[#allocation7 + $0x790] sm:$0xff]
    %v473 = vld [vmem:[#allocation7 + $0x798] sm:$0xff]
    %v474 = vld [vmem:[#allocation7 + $0x7a0] sm:$0xff]
    %v475 = vld [vmem:[#allocation7 + $0x7a8] sm:$0xff]
    %v476 = vld [vmem:[#allocation7 + $0x7b0] sm:$0xff]
    %v477 = vld [vmem:[#allocation7 + $0x7b8] sm:$0xff]
    %v478 = vld [vmem:[#allocation7 + $0x7c0] sm:$0xff]
    %v479 = vld [vmem:[#allocation7 + $0x7c8] sm:$0xff]
    %v480 = vld [vmem:[#allocation7 + $0x7d0] sm:$0xff]
    %v481 = vld [vmem:[#allocation7 + $0x7d8] sm:$0xff]
    %v482 = vld [vmem:[#allocation7 + $0x7e0] sm:$0xff]
    %v483 = vld [vmem:[#allocation7 + $0x7e8] sm:$0xff]
    %v484 = vld [vmem:[#allocation7 + $0x7f0] sm:$0xff]
    %v485 = vld [vmem:[#allocation7 + $0x7f8] sm:$0xff]
    %v486 = vld [vmem:[#allocation7 + $0x800] sm:$0xff]
    %v487 = vld [vmem:[#allocation7 + $0x808] sm:$0xff]
    %v488 = vld [vmem:[#allocation7 + $0x810] sm:$0xff]
    %v489 = vld [vmem:[#allocation7 + $0x818] sm:$0xff]
    %v490 = vld [vmem:[#allocation7 + $0x820] sm:$0xff]
    %v491 = vld [vmem:[#allocation7 + $0x828] sm:$0xff]
    %v492 = vld [vmem:[#allocation7 + $0x830] sm:$0xff]
    %v493 = vld [vmem:[#allocation7 + $0x838] sm:$0xff]
    %v494 = vld [vmem:[#allocation7 + $0x840] sm:$0xff]
    %v495 = vld [vmem:[#allocation7 + $0x848] sm:$0xff]
    %v496 = vld [vmem:[#allocation7 + $0x850] sm:$0xff]
    %v497 = vld [vmem:[#allocation7 + $0x858] sm:$0xff]
    %v498 = vld [vmem:[#allocation7 + $0x860] sm:$0xff]
    %v499 = vld [vmem:[#allocation7 + $0x868] sm:$0xff]
    %v500 = vld [vmem:[#allocation7 + $0x870] sm:$0xff]
    %v501 = vld [vmem:[#allocation7 + $0x878] sm:$0xff]
    %v502 = vld [vmem:[#allocation7 + $0x880] sm:$0xff]
    %v503 = vld [vmem:[#allocation7 + $0x888] sm:$0xff]
    %v504 = vld [vmem:[#allocation7 + $0x890] sm:$0xff]
    %v505 = vld [vmem:[#allocation7 + $0x898] sm:$0xff]
    %v506 = vld [vmem:[#allocation7 + $0x8a0] sm:$0xff]
    %v507 = vld [vmem:[#allocation7 + $0x8a8] sm:$0xff]
    %v508 = vld [vmem:[#allocation7 + $0x8b0] sm:$0xff]
    %v509 = vld [vmem:[#allocation7 + $0x8b8] sm:$0xff]
    %v510 = vld [vmem:[#allocation7 + $0x8c0] sm:$0xff]
    %v511 = vld [vmem:[#allocation7 + $0x8c8] sm:$0xff]
    %v512 = vld [vmem:[#allocation7 + $0x8d0] sm:$0xff]
    %v513 = vld [vmem:[#allocation7 + $0x8d8] sm:$0xff]
    %v514 = vld [vmem:[#allocation7 + $0x8e0] sm:$0xff]
    %v515 = vld [vmem:[#allocation7 + $0x8e8] sm:$0xff]
    %v516 = vld [vmem:[#allocation7 + $0x8f0] sm:$0xff]
    %v517 = vld [vmem:[#allocation7 + $0x8f8] sm:$0xff]
    %v518 = vld [vmem:[#allocation7 + $0x900] sm:$0xff]
    %v519 = vld [vmem:[#allocation7 + $0x908] sm:$0xff]
    %v520 = vld [vmem:[#allocation7 + $0x910] sm:$0xff]
    %v521 = vld [vmem:[#allocation7 + $0x918] sm:$0xff]
    %v522 = vld [vmem:[#allocation7 + $0x920] sm:$0xff]
    %v523 = vld [vmem:[#allocation7 + $0x928] sm:$0xff]
    %v524 = vld [vmem:[#allocation7 + $0x930] sm:$0xff]
    %v525 = vld [vmem:[#allocation7 + $0x938] sm:$0xff]
    %v526 = vld [vmem:[#allocation7 + $0x940] sm:$0xff]
    %v527 = vld [vmem:[#allocation7 + $0x948] sm:$0xff]
    %v528 = vld [vmem:[#allocation7 + $0x950] sm:$0xff]
    %v529 = vld [vmem:[#allocation7 + $0x958] sm:$0xff]
    %v530 = vld [vmem:[#allocation7 + $0x960] sm:$0xff]
    %v531 = vld [vmem:[#allocation7 + $0x968] sm:$0xff]
    %v532 = vld [vmem:[#allocation7 + $0x970] sm:$0xff]
    %v533 = vld [vmem:[#allocation7 + $0x978] sm:$0xff]
    %v534 = vld [vmem:[#allocation7 + $0x980] sm:$0xff]
    %v535 = vld [vmem:[#allocation7 + $0x988] sm:$0xff]
    %v536 = vld [vmem:[#allocation7 + $0x990] sm:$0xff]
    %v537 = vld [vmem:[#allocation7 + $0x998] sm:$0xff]
    %v538 = vld [vmem:[#allocation7 + $0x9a0] sm:$0xff]
    %v539 = vld [vmem:[#allocation7 + $0x9a8] sm:$0xff]
    %v540 = vld [vmem:[#allocation7 + $0x9b0] sm:$0xff]
    %v541 = vld [vmem:[#allocation7 + $0x9b8] sm:$0xff]
    %v542 = vld [vmem:[#allocation7 + $0x9c0] sm:$0xff]
    %v543 = vld [vmem:[#allocation7 + $0x9c8] sm:$0xff]
    %v544 = vld [vmem:[#allocation7 + $0x9d0] sm:$0xff]
    %v545 = vld [vmem:[#allocation7 + $0x9d8] sm:$0xff]
    %v546 = vld [vmem:[#allocation7 + $0x9e0] sm:$0xff]
    %v547 = vld [vmem:[#allocation7 + $0x9e8] sm:$0xff]
    %v548 = vld [vmem:[#allocation7 + $0x9f0] sm:$0xff]
    %v549 = vld [vmem:[#allocation7 + $0x9f8] sm:$0xff]
    %v550 = vld [vmem:[#allocation7 + $0xa00] sm:$0xff]
    %v551 = vld [vmem:[#allocation7 + $0xa08] sm:$0xff]
    %v552 = vld [vmem:[#allocation7 + $0xa10] sm:$0xff]
    %v553 = vld [vmem:[#allocation7 + $0xa18] sm:$0xff]
    %v554 = vld [vmem:[#allocation7 + $0xa20] sm:$0xff]
    %v555 = vld [vmem:[#allocation7 + $0xa28] sm:$0xff]
    %v556 = vld [vmem:[#allocation7 + $0xa30] sm:$0xff]
    %v557 = vld [vmem:[#allocation7 + $0xa38] sm:$0xff]
    %v558 = vld [vmem:[#allocation7 + $0xa40] sm:$0xff]
    %v559 = vld [vmem:[#allocation7 + $0xa48] sm:$0xff]
    %v560 = vld [vmem:[#allocation7 + $0xa50] sm:$0xff]
    %v561 = vld [vmem:[#allocation7 + $0xa58] sm:$0xff]
    %v562 = vld [vmem:[#allocation7 + $0xa60] sm:$0xff]
    %v563 = vld [vmem:[#allocation7 + $0xa68] sm:$0xff]
    %v564 = vld [vmem:[#allocation7 + $0xa70] sm:$0xff]
    %v565 = vld [vmem:[#allocation7 + $0xa78] sm:$0xff]
    %v566 = vld [vmem:[#allocation7 + $0xa80] sm:$0xff]
    %v567 = vld [vmem:[#allocation7 + $0xa88] sm:$0xff]
    %v568 = vld [vmem:[#allocation7 + $0xa90] sm:$0xff]
    %v569 = vld [vmem:[#allocation7 + $0xa98] sm:$0xff]
    %v570 = vld [vmem:[#allocation7 + $0xaa0] sm:$0xff]
    %v571 = vld [vmem:[#allocation7 + $0xaa8] sm:$0xff]
    %v572 = vld [vmem:[#allocation7 + $0xab0] sm:$0xff]
    %v573 = vld [vmem:[#allocation7 + $0xab8] sm:$0xff]
    %v574 = vld [vmem:[#allocation7 + $0xac0] sm:$0xff]
    %v575 = vld [vmem:[#allocation7 + $0xac8] sm:$0xff]
    %v576 = vld [vmem:[#allocation7 + $0xad0] sm:$0xff]
    %v577 = vld [vmem:[#allocation7 + $0xad8] sm:$0xff]
    %v578 = vld [vmem:[#allocation7 + $0xae0] sm:$0xff]
    %v579 = vld [vmem:[#allocation7 + $0xae8] sm:$0xff]
    %v580 = vld [vmem:[#allocation7 + $0xaf0] sm:$0xff]
    %v581 = vld [vmem:[#allocation7 + $0xaf8] sm:$0xff]
    %v582 = vld [vmem:[#allocation7 + $0xb00] sm:$0xff]
    %v583 = vld [vmem:[#allocation7 + $0xb08] sm:$0xff]
    %v584 = vld [vmem:[#allocation7 + $0xb10] sm:$0xff]
    %v585 = vld [vmem:[#allocation7 + $0xb18] sm:$0xff]
    %v586 = vld [vmem:[#allocation7 + $0xb20] sm:$0xff]
    %v587 = vld [vmem:[#allocation7 + $0xb28] sm:$0xff]
    %v588 = vld [vmem:[#allocation7 + $0xb30] sm:$0xff]
    %v589 = vld [vmem:[#allocation7 + $0xb38] sm:$0xff]
    %v590 = vld [vmem:[#allocation7 + $0xb40] sm:$0xff]
    %v591 = vld [vmem:[#allocation7 + $0xb48] sm:$0xff]
    %v592 = vld [vmem:[#allocation7 + $0xb50] sm:$0xff]
    %v593 = vld [vmem:[#allocation7 + $0xb58] sm:$0xff]
    %v594 = vld [vmem:[#allocation7 + $0xb60] sm:$0xff]
    %v595 = vld [vmem:[#allocation7 + $0xb68] sm:$0xff]
    %v596 = vld [vmem:[#allocation7 + $0xb70] sm:$0xff]
    %v597 = vld [vmem:[#allocation7 + $0xb78] sm:$0xff]
    %v598 = vld [vmem:[#allocation7 + $0xb80] sm:$0xff]
    %v599 = vld [vmem:[#allocation7 + $0xb88] sm:$0xff]
    %v600 = vld [vmem:[#allocation7 + $0xb90] sm:$0xff]
    %v601 = vld [vmem:[#allocation7 + $0xb98] sm:$0xff]
    %v602 = vld [vmem:[#allocation7 + $0xba0] sm:$0xff]
    %v603 = vld [vmem:[#allocation7 + $0xba8] sm:$0xff]
    %v604 = vld [vmem:[#allocation7 + $0xbb0] sm:$0xff]
    %v605 = vld [vmem:[#allocation7 + $0xbb8] sm:$0xff]
    %v606 = vld [vmem:[#allocation7 + $0xbc0] sm:$0xff]
    %v607 = vld [vmem:[#allocation7 + $0xbc8] sm:$0xff]
    %v608 = vld [vmem:[#allocation7 + $0xbd0] sm:$0xff]
    %v609 = vld [vmem:[#allocation7 + $0xbd8] sm:$0xff]
    %v610 = vld [vmem:[#allocation7 + $0xbe0] sm:$0xff]
    %v611 = vld [vmem:[#allocation7 + $0xbe8] sm:$0xff]
    %v612 = vld [vmem:[#allocation7 + $0xbf0] sm:$0xff]
    %v613 = vld [vmem:[#allocation7 + $0xbf8] sm:$0xff]
    %v614 = vld [vmem:[#allocation8] sm:$0xff]
    %v616 = vlaneseq
    %v617 = vshrl.u32 %v616, 7
    %v618 = vsub.s32 0, %v617
    %v619 = vrot.slane %v614, %v618
    %v620 = vlaneseq
    %v621 = vshrl.u32 %v620, 7
    %v622 = vsub.s32 1, %v621
    %v623 = vrot.slane %v614, %v622
    %v624 = vlaneseq
    %v625 = vshrl.u32 %v624, 7
    %v626 = vsub.s32 2, %v625
    %v627 = vrot.slane %v614, %v626
    %v628 = vlaneseq
    %v629 = vshrl.u32 %v628, 7
    %v630 = vsub.s32 3, %v629
    %v631 = vrot.slane %v614, %v630
    %v632 = vlaneseq
    %v633 = vshrl.u32 %v632, 7
    %v634 = vsub.s32 4, %v633
    %v635 = vrot.slane %v614, %v634
    %v636 = vlaneseq
    %v637 = vshrl.u32 %v636, 7
    %v638 = vsub.s32 5, %v637
    %v639 = vrot.slane %v614, %v638
    %v640 = vlaneseq
    %v641 = vshrl.u32 %v640, 7
    %v642 = vsub.s32 6, %v641
    %v643 = vrot.slane %v614, %v642
    %v644 = vlaneseq
    %v645 = vshrl.u32 %v644, 7
    %v646 = vsub.s32 7, %v645
    %v647 = vrot.slane %v614, %v646
    %v1040 = vunpack.c.l.b16 %v230
    %v1041 = vunpack.c.h.b16 %v230
    %v1042 = vunpack.c.l.b16 %v231
    %v1043 = vunpack.c.h.b16 %v231
    %v1044 = vunpack.c.l.b16 %v232
    %v1045 = vunpack.c.h.b16 %v232
    %v1046 = vunpack.c.l.b16 %v233
    %v1047 = vunpack.c.h.b16 %v233
    %v1048 = vunpack.c.l.b16 %v234
    %v1049 = vunpack.c.h.b16 %v234
    %v1050 = vunpack.c.l.b16 %v235
    %v1051 = vunpack.c.h.b16 %v235
    %v1052 = vunpack.c.l.b16 %v236
    %v1053 = vunpack.c.h.b16 %v236
    %v1054 = vunpack.c.l.b16 %v237
    %v1055 = vunpack.c.h.b16 %v237
    %v1056 = vunpack.c.l.b16 %v238
    %v1057 = vunpack.c.h.b16 %v238
    %v1058 = vunpack.c.l.b16 %v239
    %v1059 = vunpack.c.h.b16 %v239
    %v1060 = vunpack.c.l.b16 %v240
    %v1061 = vunpack.c.h.b16 %v240
    %v1062 = vunpack.c.l.b16 %v241
    %v1063 = vunpack.c.h.b16 %v241
    %v1064 = vunpack.c.l.b16 %v242
    %v1065 = vunpack.c.h.b16 %v242
    %v1066 = vunpack.c.l.b16 %v243
    %v1067 = vunpack.c.h.b16 %v243
    %v1068 = vunpack.c.l.b16 %v244
    %v1069 = vunpack.c.h.b16 %v244
    %v1070 = vunpack.c.l.b16 %v245
    %v1071 = vunpack.c.h.b16 %v245
    %v1072 = vunpack.c.l.b16 %v246
    %v1073 = vunpack.c.h.b16 %v246
    %v1074 = vunpack.c.l.b16 %v247
    %v1075 = vunpack.c.h.b16 %v247
    %v1076 = vunpack.c.l.b16 %v248
    %v1077 = vunpack.c.h.b16 %v248
    %v1078 = vunpack.c.l.b16 %v249
    %v1079 = vunpack.c.h.b16 %v249
    %v1080 = vunpack.c.l.b16 %v250
    %v1081 = vunpack.c.h.b16 %v250
    %v1082 = vunpack.c.l.b16 %v251
    %v1083 = vunpack.c.h.b16 %v251
    %v1084 = vunpack.c.l.b16 %v252
    %v1085 = vunpack.c.h.b16 %v252
    %v1086 = vunpack.c.l.b16 %v253
    %v1087 = vunpack.c.h.b16 %v253
    %v1088 = vunpack.c.l.b16 %v254
    %v1089 = vunpack.c.h.b16 %v254
    %v1090 = vunpack.c.l.b16 %v255
    %v1091 = vunpack.c.h.b16 %v255
    %v1092 = vunpack.c.l.b16 %v256
    %v1093 = vunpack.c.h.b16 %v256
    %v1094 = vunpack.c.l.b16 %v257
    %v1095 = vunpack.c.h.b16 %v257
    %v1096 = vunpack.c.l.b16 %v258
    %v1097 = vunpack.c.h.b16 %v258
    %v1098 = vunpack.c.l.b16 %v259
    %v1099 = vunpack.c.h.b16 %v259
    %v1100 = vunpack.c.l.b16 %v260
    %v1101 = vunpack.c.h.b16 %v260
    %v1102 = vunpack.c.l.b16 %v261
    %v1103 = vunpack.c.h.b16 %v261
    %v1104 = vunpack.c.l.b16 %v262
    %v1105 = vunpack.c.h.b16 %v262
    %v1106 = vunpack.c.l.b16 %v263
    %v1107 = vunpack.c.h.b16 %v263
    %v1108 = vunpack.c.l.b16 %v264
    %v1109 = vunpack.c.h.b16 %v264
    %v1110 = vunpack.c.l.b16 %v265
    %v1111 = vunpack.c.h.b16 %v265
    %v1112 = vunpack.c.l.b16 %v266
    %v1113 = vunpack.c.h.b16 %v266
    %v1114 = vunpack.c.l.b16 %v267
    %v1115 = vunpack.c.h.b16 %v267
    %v1116 = vunpack.c.l.b16 %v268
    %v1117 = vunpack.c.h.b16 %v268
    %v1118 = vunpack.c.l.b16 %v269
    %v1119 = vunpack.c.h.b16 %v269
    %v1120 = vunpack.c.l.b16 %v270
    %v1121 = vunpack.c.h.b16 %v270
    %v1122 = vunpack.c.l.b16 %v271
    %v1123 = vunpack.c.h.b16 %v271
    %v1124 = vunpack.c.l.b16 %v272
    %v1125 = vunpack.c.h.b16 %v272
    %v1126 = vunpack.c.l.b16 %v273
    %v1127 = vunpack.c.h.b16 %v273
    %v1128 = vunpack.c.l.b16 %v274
    %v1129 = vunpack.c.h.b16 %v274
    %v1130 = vunpack.c.l.b16 %v275
    %v1131 = vunpack.c.h.b16 %v275
    %v1132 = vunpack.c.l.b16 %v276
    %v1133 = vunpack.c.h.b16 %v276
    %v1134 = vunpack.c.l.b16 %v277
    %v1135 = vunpack.c.h.b16 %v277
    %v1136 = vunpack.c.l.b16 %v278
    %v1137 = vunpack.c.h.b16 %v278
    %v1138 = vunpack.c.l.b16 %v279
    %v1139 = vunpack.c.h.b16 %v279
    %v1140 = vunpack.c.l.b16 %v280
    %v1141 = vunpack.c.h.b16 %v280
    %v1142 = vunpack.c.l.b16 %v281
    %v1143 = vunpack.c.h.b16 %v281
    %v1144 = vunpack.c.l.b16 %v282
    %v1145 = vunpack.c.h.b16 %v282
    %v1146 = vunpack.c.l.b16 %v283
    %v1147 = vunpack.c.h.b16 %v283
    %v1148 = vunpack.c.l.b16 %v284
    %v1149 = vunpack.c.h.b16 %v284
    %v1150 = vunpack.c.l.b16 %v285
    %v1151 = vunpack.c.h.b16 %v285
    %v1152 = vunpack.c.l.b16 %v286
    %v1153 = vunpack.c.h.b16 %v286
    %v1154 = vunpack.c.l.b16 %v287
    %v1155 = vunpack.c.h.b16 %v287
    %v1156 = vunpack.c.l.b16 %v288
    %v1157 = vunpack.c.h.b16 %v288
    %v1158 = vunpack.c.l.b16 %v289
    %v1159 = vunpack.c.h.b16 %v289
    %v1160 = vunpack.c.l.b16 %v290
    %v1161 = vunpack.c.h.b16 %v290
    %v1162 = vunpack.c.l.b16 %v291
    %v1163 = vunpack.c.h.b16 %v291
    %v1164 = vunpack.c.l.b16 %v292
    %v1165 = vunpack.c.h.b16 %v292
    %v1166 = vunpack.c.l.b16 %v293
    %v1167 = vunpack.c.h.b16 %v293
    %v1168 = vunpack.c.l.b16 %v294
    %v1169 = vunpack.c.h.b16 %v294
    %v1170 = vunpack.c.l.b16 %v295
    %v1171 = vunpack.c.h.b16 %v295
    %v1172 = vunpack.c.l.b16 %v296
    %v1173 = vunpack.c.h.b16 %v296
    %v1174 = vunpack.c.l.b16 %v297
    %v1175 = vunpack.c.h.b16 %v297
    %v1176 = vunpack.c.l.b16 %v298
    %v1177 = vunpack.c.h.b16 %v298
    %v1178 = vunpack.c.l.b16 %v299
    %v1179 = vunpack.c.h.b16 %v299
    %v1180 = vunpack.c.l.b16 %v300
    %v1181 = vunpack.c.h.b16 %v300
    %v1182 = vunpack.c.l.b16 %v301
    %v1183 = vunpack.c.h.b16 %v301
    %v1184 = vunpack.c.l.b16 %v302
    %v1185 = vunpack.c.h.b16 %v302
    %v1186 = vunpack.c.l.b16 %v303
    %v1187 = vunpack.c.h.b16 %v303
    %v1188 = vunpack.c.l.b16 %v304
    %v1189 = vunpack.c.h.b16 %v304
    %v1190 = vunpack.c.l.b16 %v305
    %v1191 = vunpack.c.h.b16 %v305
    %v1192 = vunpack.c.l.b16 %v306
    %v1193 = vunpack.c.h.b16 %v306
    %v1194 = vunpack.c.l.b16 %v307
    %v1195 = vunpack.c.h.b16 %v307
    %v1196 = vunpack.c.l.b16 %v308
    %v1197 = vunpack.c.h.b16 %v308
    %v1198 = vunpack.c.l.b16 %v309
    %v1199 = vunpack.c.h.b16 %v309
    %v1200 = vunpack.c.l.b16 %v310
    %v1201 = vunpack.c.h.b16 %v310
    %v1202 = vunpack.c.l.b16 %v311
    %v1203 = vunpack.c.h.b16 %v311
    %v1204 = vunpack.c.l.b16 %v312
    %v1205 = vunpack.c.h.b16 %v312
    %v1206 = vunpack.c.l.b16 %v313
    %v1207 = vunpack.c.h.b16 %v313
    %v1208 = vunpack.c.l.b16 %v314
    %v1209 = vunpack.c.h.b16 %v314
    %v1210 = vunpack.c.l.b16 %v315
    %v1211 = vunpack.c.h.b16 %v315
    %v1212 = vunpack.c.l.b16 %v316
    %v1213 = vunpack.c.h.b16 %v316
    %v1214 = vunpack.c.l.b16 %v317
    %v1215 = vunpack.c.h.b16 %v317
    %v1216 = vunpack.c.l.b16 %v318
    %v1217 = vunpack.c.h.b16 %v318
    %v1218 = vunpack.c.l.b16 %v319
    %v1219 = vunpack.c.h.b16 %v319
    %v1220 = vunpack.c.l.b16 %v320
    %v1221 = vunpack.c.h.b16 %v320
    %v1222 = vunpack.c.l.b16 %v321
    %v1223 = vunpack.c.h.b16 %v321
    %v1224 = vunpack.c.l.b16 %v322
    %v1225 = vunpack.c.h.b16 %v322
    %v1226 = vunpack.c.l.b16 %v323
    %v1227 = vunpack.c.h.b16 %v323
    %v1228 = vunpack.c.l.b16 %v324
    %v1229 = vunpack.c.h.b16 %v324
    %v1230 = vunpack.c.l.b16 %v325
    %v1231 = vunpack.c.h.b16 %v325
    %v1232 = vunpack.c.l.b16 %v326
    %v1233 = vunpack.c.h.b16 %v326
    %v1234 = vunpack.c.l.b16 %v327
    %v1235 = vunpack.c.h.b16 %v327
    %v1236 = vunpack.c.l.b16 %v328
    %v1237 = vunpack.c.h.b16 %v328
    %v1238 = vunpack.c.l.b16 %v329
    %v1239 = vunpack.c.h.b16 %v329
    %v1240 = vunpack.c.l.b16 %v330
    %v1241 = vunpack.c.h.b16 %v330
    %v1242 = vunpack.c.l.b16 %v331
    %v1243 = vunpack.c.h.b16 %v331
    %v1244 = vunpack.c.l.b16 %v332
    %v1245 = vunpack.c.h.b16 %v332
    %v1246 = vunpack.c.l.b16 %v333
    %v1247 = vunpack.c.h.b16 %v333
    %v1248 = vunpack.c.l.b16 %v334
    %v1249 = vunpack.c.h.b16 %v334
    %v1250 = vunpack.c.l.b16 %v335
    %v1251 = vunpack.c.h.b16 %v335
    %v1252 = vunpack.c.l.b16 %v336
    %v1253 = vunpack.c.h.b16 %v336
    %v1254 = vunpack.c.l.b16 %v337
    %v1255 = vunpack.c.h.b16 %v337
    %v1256 = vunpack.c.l.b16 %v338
    %v1257 = vunpack.c.h.b16 %v338
    %v1258 = vunpack.c.l.b16 %v339
    %v1259 = vunpack.c.h.b16 %v339
    %v1260 = vunpack.c.l.b16 %v340
    %v1261 = vunpack.c.h.b16 %v340
    %v1262 = vunpack.c.l.b16 %v341
    %v1263 = vunpack.c.h.b16 %v341
    %v1264 = vunpack.c.l.b16 %v342
    %v1265 = vunpack.c.h.b16 %v342
    %v1266 = vunpack.c.l.b16 %v343
    %v1267 = vunpack.c.h.b16 %v343
    %v1268 = vunpack.c.l.b16 %v344
    %v1269 = vunpack.c.h.b16 %v344
    %v1270 = vunpack.c.l.b16 %v345
    %v1271 = vunpack.c.h.b16 %v345
    %v1272 = vunpack.c.l.b16 %v346
    %v1273 = vunpack.c.h.b16 %v346
    %v1274 = vunpack.c.l.b16 %v347
    %v1275 = vunpack.c.h.b16 %v347
    %v1276 = vunpack.c.l.b16 %v348
    %v1277 = vunpack.c.h.b16 %v348
    %v1278 = vunpack.c.l.b16 %v349
    %v1279 = vunpack.c.h.b16 %v349
    %v1280 = vunpack.c.l.b16 %v350
    %v1281 = vunpack.c.h.b16 %v350
    %v1282 = vunpack.c.l.b16 %v351
    %v1283 = vunpack.c.h.b16 %v351
    %v1284 = vunpack.c.l.b16 %v352
    %v1285 = vunpack.c.h.b16 %v352
    %v1286 = vunpack.c.l.b16 %v353
    %v1287 = vunpack.c.h.b16 %v353
    %v1288 = vunpack.c.l.b16 %v354
    %v1289 = vunpack.c.h.b16 %v354
    %v1290 = vunpack.c.l.b16 %v355
    %v1291 = vunpack.c.h.b16 %v355
    %v1292 = vunpack.c.l.b16 %v356
    %v1293 = vunpack.c.h.b16 %v356
    %v1294 = vunpack.c.l.b16 %v357
    %v1295 = vunpack.c.h.b16 %v357
    %v1296 = vunpack.c.l.b16 %v358
    %v1297 = vunpack.c.h.b16 %v358
    %v1298 = vunpack.c.l.b16 %v359
    %v1299 = vunpack.c.h.b16 %v359
    %v1300 = vunpack.c.l.b16 %v360
    %v1301 = vunpack.c.h.b16 %v360
    %v1302 = vunpack.c.l.b16 %v361
    %v1303 = vunpack.c.h.b16 %v361
    %v1304 = vunpack.c.l.b16 %v362
    %v1305 = vunpack.c.h.b16 %v362
    %v1306 = vunpack.c.l.b16 %v363
    %v1307 = vunpack.c.h.b16 %v363
    %v1308 = vunpack.c.l.b16 %v364
    %v1309 = vunpack.c.h.b16 %v364
    %v1310 = vunpack.c.l.b16 %v365
    %v1311 = vunpack.c.h.b16 %v365
    %v1312 = vunpack.c.l.b16 %v366
    %v1313 = vunpack.c.h.b16 %v366
    %v1314 = vunpack.c.l.b16 %v367
    %v1315 = vunpack.c.h.b16 %v367
    %v1316 = vunpack.c.l.b16 %v368
    %v1317 = vunpack.c.h.b16 %v368
    %v1318 = vunpack.c.l.b16 %v369
    %v1319 = vunpack.c.h.b16 %v369
    %v1320 = vunpack.c.l.b16 %v370
    %v1321 = vunpack.c.h.b16 %v370
    %v1322 = vunpack.c.l.b16 %v371
    %v1323 = vunpack.c.h.b16 %v371
    %v1324 = vunpack.c.l.b16 %v372
    %v1325 = vunpack.c.h.b16 %v372
    %v1326 = vunpack.c.l.b16 %v373
    %v1327 = vunpack.c.h.b16 %v373
    %v1328 = vunpack.c.l.b16 %v374
    %v1329 = vunpack.c.h.b16 %v374
    %v1330 = vunpack.c.l.b16 %v375
    %v1331 = vunpack.c.h.b16 %v375
    %v1332 = vunpack.c.l.b16 %v376
    %v1333 = vunpack.c.h.b16 %v376
    %v1334 = vunpack.c.l.b16 %v377
    %v1335 = vunpack.c.h.b16 %v377
    %v1336 = vunpack.c.l.b16 %v378
    %v1337 = vunpack.c.h.b16 %v378
    %v1338 = vunpack.c.l.b16 %v379
    %v1339 = vunpack.c.h.b16 %v379
    %v1340 = vunpack.c.l.b16 %v380
    %v1341 = vunpack.c.h.b16 %v380
    %v1342 = vunpack.c.l.b16 %v381
    %v1343 = vunpack.c.h.b16 %v381
    %v1344 = vunpack.c.l.b16 %v382
    %v1345 = vunpack.c.h.b16 %v382
    %v1346 = vunpack.c.l.b16 %v383
    %v1347 = vunpack.c.h.b16 %v383
    %v1348 = vunpack.c.l.b16 %v384
    %v1349 = vunpack.c.h.b16 %v384
    %v1350 = vunpack.c.l.b16 %v385
    %v1351 = vunpack.c.h.b16 %v385
    %v1352 = vunpack.c.l.b16 %v386
    %v1353 = vunpack.c.h.b16 %v386
    %v1354 = vunpack.c.l.b16 %v387
    %v1355 = vunpack.c.h.b16 %v387
    %v1356 = vunpack.c.l.b16 %v388
    %v1357 = vunpack.c.h.b16 %v388
    %v1358 = vunpack.c.l.b16 %v389
    %v1359 = vunpack.c.h.b16 %v389
    %v1360 = vunpack.c.l.b16 %v390
    %v1361 = vunpack.c.h.b16 %v390
    %v1362 = vunpack.c.l.b16 %v391
    %v1363 = vunpack.c.h.b16 %v391
    %v1364 = vunpack.c.l.b16 %v392
    %v1365 = vunpack.c.h.b16 %v392
    %v1366 = vunpack.c.l.b16 %v393
    %v1367 = vunpack.c.h.b16 %v393
    %v1368 = vunpack.c.l.b16 %v394
    %v1369 = vunpack.c.h.b16 %v394
    %v1370 = vunpack.c.l.b16 %v395
    %v1371 = vunpack.c.h.b16 %v395
    %v1372 = vunpack.c.l.b16 %v396
    %v1373 = vunpack.c.h.b16 %v396
    %v1374 = vunpack.c.l.b16 %v397
    %v1375 = vunpack.c.h.b16 %v397
    %v1376 = vunpack.c.l.b16 %v398
    %v1377 = vunpack.c.h.b16 %v398
    %v1378 = vunpack.c.l.b16 %v399
    %v1379 = vunpack.c.h.b16 %v399
    %v1380 = vunpack.c.l.b16 %v400
    %v1381 = vunpack.c.h.b16 %v400
    %v1382 = vunpack.c.l.b16 %v401
    %v1383 = vunpack.c.h.b16 %v401
    %v1384 = vunpack.c.l.b16 %v402
    %v1385 = vunpack.c.h.b16 %v402
    %v1386 = vunpack.c.l.b16 %v403
    %v1387 = vunpack.c.h.b16 %v403
    %v1388 = vunpack.c.l.b16 %v404
    %v1389 = vunpack.c.h.b16 %v404
    %v1390 = vunpack.c.l.b16 %v405
    %v1391 = vunpack.c.h.b16 %v405
    %v1392 = vunpack.c.l.b16 %v406
    %v1393 = vunpack.c.h.b16 %v406
    %v1394 = vunpack.c.l.b16 %v407
    %v1395 = vunpack.c.h.b16 %v407
    %v1396 = vunpack.c.l.b16 %v408
    %v1397 = vunpack.c.h.b16 %v408
    %v1398 = vunpack.c.l.b16 %v409
    %v1399 = vunpack.c.h.b16 %v409
    %v1400 = vunpack.c.l.b16 %v410
    %v1401 = vunpack.c.h.b16 %v410
    %v1402 = vunpack.c.l.b16 %v411
    %v1403 = vunpack.c.h.b16 %v411
    %v1404 = vunpack.c.l.b16 %v412
    %v1405 = vunpack.c.h.b16 %v412
    %v1406 = vunpack.c.l.b16 %v413
    %v1407 = vunpack.c.h.b16 %v413
    %v1408 = vunpack.c.l.b16 %v414
    %v1409 = vunpack.c.h.b16 %v414
    %v1410 = vunpack.c.l.b16 %v415
    %v1411 = vunpack.c.h.b16 %v415
    %v1412 = vunpack.c.l.b16 %v416
    %v1413 = vunpack.c.h.b16 %v416
    %v1414 = vunpack.c.l.b16 %v417
    %v1415 = vunpack.c.h.b16 %v417
    %v1416 = vunpack.c.l.b16 %v418
    %v1417 = vunpack.c.h.b16 %v418
    %v1418 = vunpack.c.l.b16 %v419
    %v1419 = vunpack.c.h.b16 %v419
    %v1420 = vunpack.c.l.b16 %v420
    %v1421 = vunpack.c.h.b16 %v420
    %v1422 = vunpack.c.l.b16 %v421
    %v1423 = vunpack.c.h.b16 %v421
    %v1424 = vunpack.c.l.b16 %v422
    %v1425 = vunpack.c.h.b16 %v422
    %v1426 = vunpack.c.l.b16 %v423
    %v1427 = vunpack.c.h.b16 %v423
    %v1428 = vunpack.c.l.b16 %v424
    %v1429 = vunpack.c.h.b16 %v424
    %v1430 = vunpack.c.l.b16 %v425
    %v1431 = vunpack.c.h.b16 %v425
    %v1432 = vunpack.c.l.b16 %v426
    %v1433 = vunpack.c.h.b16 %v426
    %v1434 = vunpack.c.l.b16 %v427
    %v1435 = vunpack.c.h.b16 %v427
    %v1436 = vunpack.c.l.b16 %v428
    %v1437 = vunpack.c.h.b16 %v428
    %v1438 = vunpack.c.l.b16 %v429
    %v1439 = vunpack.c.h.b16 %v429
    %v1440 = vunpack.c.l.b16 %v430
    %v1441 = vunpack.c.h.b16 %v430
    %v1442 = vunpack.c.l.b16 %v431
    %v1443 = vunpack.c.h.b16 %v431
    %v1444 = vunpack.c.l.b16 %v432
    %v1445 = vunpack.c.h.b16 %v432
    %v1446 = vunpack.c.l.b16 %v433
    %v1447 = vunpack.c.h.b16 %v433
    %v1448 = vunpack.c.l.b16 %v434
    %v1449 = vunpack.c.h.b16 %v434
    %v1450 = vunpack.c.l.b16 %v435
    %v1451 = vunpack.c.h.b16 %v435
    %v1452 = vunpack.c.l.b16 %v436
    %v1453 = vunpack.c.h.b16 %v436
    %v1454 = vunpack.c.l.b16 %v437
    %v1455 = vunpack.c.h.b16 %v437
    %v1456 = vunpack.c.l.b16 %v438
    %v1457 = vunpack.c.h.b16 %v438
    %v1458 = vunpack.c.l.b16 %v439
    %v1459 = vunpack.c.h.b16 %v439
    %v1460 = vunpack.c.l.b16 %v440
    %v1461 = vunpack.c.h.b16 %v440
    %v1462 = vunpack.c.l.b16 %v441
    %v1463 = vunpack.c.h.b16 %v441
    %v1464 = vunpack.c.l.b16 %v442
    %v1465 = vunpack.c.h.b16 %v442
    %v1466 = vunpack.c.l.b16 %v443
    %v1467 = vunpack.c.h.b16 %v443
    %v1468 = vunpack.c.l.b16 %v444
    %v1469 = vunpack.c.h.b16 %v444
    %v1470 = vunpack.c.l.b16 %v445
    %v1471 = vunpack.c.h.b16 %v445
    %v1472 = vunpack.c.l.b16 %v446
    %v1473 = vunpack.c.h.b16 %v446
    %v1474 = vunpack.c.l.b16 %v447
    %v1475 = vunpack.c.h.b16 %v447
    %v1476 = vunpack.c.l.b16 %v448
    %v1477 = vunpack.c.h.b16 %v448
    %v1478 = vunpack.c.l.b16 %v449
    %v1479 = vunpack.c.h.b16 %v449
    %v1480 = vunpack.c.l.b16 %v450
    %v1481 = vunpack.c.h.b16 %v450
    %v1482 = vunpack.c.l.b16 %v451
    %v1483 = vunpack.c.h.b16 %v451
    %v1484 = vunpack.c.l.b16 %v452
    %v1485 = vunpack.c.h.b16 %v452
    %v1486 = vunpack.c.l.b16 %v453
    %v1487 = vunpack.c.h.b16 %v453
    %v1488 = vunpack.c.l.b16 %v454
    %v1489 = vunpack.c.h.b16 %v454
    %v1490 = vunpack.c.l.b16 %v455
    %v1491 = vunpack.c.h.b16 %v455
    %v1492 = vunpack.c.l.b16 %v456
    %v1493 = vunpack.c.h.b16 %v456
    %v1494 = vunpack.c.l.b16 %v457
    %v1495 = vunpack.c.h.b16 %v457
    %v1496 = vunpack.c.l.b16 %v458
    %v1497 = vunpack.c.h.b16 %v458
    %v1498 = vunpack.c.l.b16 %v459
    %v1499 = vunpack.c.h.b16 %v459
    %v1500 = vunpack.c.l.b16 %v460
    %v1501 = vunpack.c.h.b16 %v460
    %v1502 = vunpack.c.l.b16 %v461
    %v1503 = vunpack.c.h.b16 %v461
    %v1504 = vunpack.c.l.b16 %v462
    %v1505 = vunpack.c.h.b16 %v462
    %v1506 = vunpack.c.l.b16 %v463
    %v1507 = vunpack.c.h.b16 %v463
    %v1508 = vunpack.c.l.b16 %v464
    %v1509 = vunpack.c.h.b16 %v464
    %v1510 = vunpack.c.l.b16 %v465
    %v1511 = vunpack.c.h.b16 %v465
    %v1512 = vunpack.c.l.b16 %v466
    %v1513 = vunpack.c.h.b16 %v466
    %v1514 = vunpack.c.l.b16 %v467
    %v1515 = vunpack.c.h.b16 %v467
    %v1516 = vunpack.c.l.b16 %v468
    %v1517 = vunpack.c.h.b16 %v468
    %v1518 = vunpack.c.l.b16 %v469
    %v1519 = vunpack.c.h.b16 %v469
    %v1520 = vunpack.c.l.b16 %v470
    %v1521 = vunpack.c.h.b16 %v470
    %v1522 = vunpack.c.l.b16 %v471
    %v1523 = vunpack.c.h.b16 %v471
    %v1524 = vunpack.c.l.b16 %v472
    %v1525 = vunpack.c.h.b16 %v472
    %v1526 = vunpack.c.l.b16 %v473
    %v1527 = vunpack.c.h.b16 %v473
    %v1528 = vunpack.c.l.b16 %v474
    %v1529 = vunpack.c.h.b16 %v474
    %v1530 = vunpack.c.l.b16 %v475
    %v1531 = vunpack.c.h.b16 %v475
    %v1532 = vunpack.c.l.b16 %v476
    %v1533 = vunpack.c.h.b16 %v476
    %v1534 = vunpack.c.l.b16 %v477
    %v1535 = vunpack.c.h.b16 %v477
    %v1536 = vunpack.c.l.b16 %v478
    %v1537 = vunpack.c.h.b16 %v478
    %v1538 = vunpack.c.l.b16 %v479
    %v1539 = vunpack.c.h.b16 %v479
    %v1540 = vunpack.c.l.b16 %v480
    %v1541 = vunpack.c.h.b16 %v480
    %v1542 = vunpack.c.l.b16 %v481
    %v1543 = vunpack.c.h.b16 %v481
    %v1544 = vunpack.c.l.b16 %v482
    %v1545 = vunpack.c.h.b16 %v482
    %v1546 = vunpack.c.l.b16 %v483
    %v1547 = vunpack.c.h.b16 %v483
    %v1548 = vunpack.c.l.b16 %v484
    %v1549 = vunpack.c.h.b16 %v484
    %v1550 = vunpack.c.l.b16 %v485
    %v1551 = vunpack.c.h.b16 %v485
    %v1552 = vunpack.c.l.b16 %v486
    %v1553 = vunpack.c.h.b16 %v486
    %v1554 = vunpack.c.l.b16 %v487
    %v1555 = vunpack.c.h.b16 %v487
    %v1556 = vunpack.c.l.b16 %v488
    %v1557 = vunpack.c.h.b16 %v488
    %v1558 = vunpack.c.l.b16 %v489
    %v1559 = vunpack.c.h.b16 %v489
    %v1560 = vunpack.c.l.b16 %v490
    %v1561 = vunpack.c.h.b16 %v490
    %v1562 = vunpack.c.l.b16 %v491
    %v1563 = vunpack.c.h.b16 %v491
    %v1564 = vunpack.c.l.b16 %v492
    %v1565 = vunpack.c.h.b16 %v492
    %v1566 = vunpack.c.l.b16 %v493
    %v1567 = vunpack.c.h.b16 %v493
    %v1568 = vunpack.c.l.b16 %v494
    %v1569 = vunpack.c.h.b16 %v494
    %v1570 = vunpack.c.l.b16 %v495
    %v1571 = vunpack.c.h.b16 %v495
    %v1572 = vunpack.c.l.b16 %v496
    %v1573 = vunpack.c.h.b16 %v496
    %v1574 = vunpack.c.l.b16 %v497
    %v1575 = vunpack.c.h.b16 %v497
    %v1576 = vunpack.c.l.b16 %v498
    %v1577 = vunpack.c.h.b16 %v498
    %v1578 = vunpack.c.l.b16 %v499
    %v1579 = vunpack.c.h.b16 %v499
    %v1580 = vunpack.c.l.b16 %v500
    %v1581 = vunpack.c.h.b16 %v500
    %v1582 = vunpack.c.l.b16 %v501
    %v1583 = vunpack.c.h.b16 %v501
    %v1584 = vunpack.c.l.b16 %v502
    %v1585 = vunpack.c.h.b16 %v502
    %v1586 = vunpack.c.l.b16 %v503
    %v1587 = vunpack.c.h.b16 %v503
    %v1588 = vunpack.c.l.b16 %v504
    %v1589 = vunpack.c.h.b16 %v504
    %v1590 = vunpack.c.l.b16 %v505
    %v1591 = vunpack.c.h.b16 %v505
    %v1592 = vunpack.c.l.b16 %v506
    %v1593 = vunpack.c.h.b16 %v506
    %v1594 = vunpack.c.l.b16 %v507
    %v1595 = vunpack.c.h.b16 %v507
    %v1596 = vunpack.c.l.b16 %v508
    %v1597 = vunpack.c.h.b16 %v508
    %v1598 = vunpack.c.l.b16 %v509
    %v1599 = vunpack.c.h.b16 %v509
    %v1600 = vunpack.c.l.b16 %v510
    %v1601 = vunpack.c.h.b16 %v510
    %v1602 = vunpack.c.l.b16 %v511
    %v1603 = vunpack.c.h.b16 %v511
    %v1604 = vunpack.c.l.b16 %v512
    %v1605 = vunpack.c.h.b16 %v512
    %v1606 = vunpack.c.l.b16 %v513
    %v1607 = vunpack.c.h.b16 %v513
    %v1608 = vunpack.c.l.b16 %v514
    %v1609 = vunpack.c.h.b16 %v514
    %v1610 = vunpack.c.l.b16 %v515
    %v1611 = vunpack.c.h.b16 %v515
    %v1612 = vunpack.c.l.b16 %v516
    %v1613 = vunpack.c.h.b16 %v516
    %v1614 = vunpack.c.l.b16 %v517
    %v1615 = vunpack.c.h.b16 %v517
    %v1616 = vunpack.c.l.b16 %v518
    %v1617 = vunpack.c.h.b16 %v518
    %v1618 = vunpack.c.l.b16 %v519
    %v1619 = vunpack.c.h.b16 %v519
    %v1620 = vunpack.c.l.b16 %v520
    %v1621 = vunpack.c.h.b16 %v520
    %v1622 = vunpack.c.l.b16 %v521
    %v1623 = vunpack.c.h.b16 %v521
    %v1624 = vunpack.c.l.b16 %v522
    %v1625 = vunpack.c.h.b16 %v522
    %v1626 = vunpack.c.l.b16 %v523
    %v1627 = vunpack.c.h.b16 %v523
    %v1628 = vunpack.c.l.b16 %v524
    %v1629 = vunpack.c.h.b16 %v524
    %v1630 = vunpack.c.l.b16 %v525
    %v1631 = vunpack.c.h.b16 %v525
    %v1632 = vunpack.c.l.b16 %v526
    %v1633 = vunpack.c.h.b16 %v526
    %v1634 = vunpack.c.l.b16 %v527
    %v1635 = vunpack.c.h.b16 %v527
    %v1636 = vunpack.c.l.b16 %v528
    %v1637 = vunpack.c.h.b16 %v528
    %v1638 = vunpack.c.l.b16 %v529
    %v1639 = vunpack.c.h.b16 %v529
    %v1640 = vunpack.c.l.b16 %v530
    %v1641 = vunpack.c.h.b16 %v530
    %v1642 = vunpack.c.l.b16 %v531
    %v1643 = vunpack.c.h.b16 %v531
    %v1644 = vunpack.c.l.b16 %v532
    %v1645 = vunpack.c.h.b16 %v532
    %v1646 = vunpack.c.l.b16 %v533
    %v1647 = vunpack.c.h.b16 %v533
    %v1648 = vunpack.c.l.b16 %v534
    %v1649 = vunpack.c.h.b16 %v534
    %v1650 = vunpack.c.l.b16 %v535
    %v1651 = vunpack.c.h.b16 %v535
    %v1652 = vunpack.c.l.b16 %v536
    %v1653 = vunpack.c.h.b16 %v536
    %v1654 = vunpack.c.l.b16 %v537
    %v1655 = vunpack.c.h.b16 %v537
    %v1656 = vunpack.c.l.b16 %v538
    %v1657 = vunpack.c.h.b16 %v538
    %v1658 = vunpack.c.l.b16 %v539
    %v1659 = vunpack.c.h.b16 %v539
    %v1660 = vunpack.c.l.b16 %v540
    %v1661 = vunpack.c.h.b16 %v540
    %v1662 = vunpack.c.l.b16 %v541
    %v1663 = vunpack.c.h.b16 %v541
    %v1664 = vunpack.c.l.b16 %v542
    %v1665 = vunpack.c.h.b16 %v542
    %v1666 = vunpack.c.l.b16 %v543
    %v1667 = vunpack.c.h.b16 %v543
    %v1668 = vunpack.c.l.b16 %v544
    %v1669 = vunpack.c.h.b16 %v544
    %v1670 = vunpack.c.l.b16 %v545
    %v1671 = vunpack.c.h.b16 %v545
    %v1672 = vunpack.c.l.b16 %v546
    %v1673 = vunpack.c.h.b16 %v546
    %v1674 = vunpack.c.l.b16 %v547
    %v1675 = vunpack.c.h.b16 %v547
    %v1676 = vunpack.c.l.b16 %v548
    %v1677 = vunpack.c.h.b16 %v548
    %v1678 = vunpack.c.l.b16 %v549
    %v1679 = vunpack.c.h.b16 %v549
    %v1680 = vunpack.c.l.b16 %v550
    %v1681 = vunpack.c.h.b16 %v550
    %v1682 = vunpack.c.l.b16 %v551
    %v1683 = vunpack.c.h.b16 %v551
    %v1684 = vunpack.c.l.b16 %v552
    %v1685 = vunpack.c.h.b16 %v552
    %v1686 = vunpack.c.l.b16 %v553
    %v1687 = vunpack.c.h.b16 %v553
    %v1688 = vunpack.c.l.b16 %v554
    %v1689 = vunpack.c.h.b16 %v554
    %v1690 = vunpack.c.l.b16 %v555
    %v1691 = vunpack.c.h.b16 %v555
    %v1692 = vunpack.c.l.b16 %v556
    %v1693 = vunpack.c.h.b16 %v556
    %v1694 = vunpack.c.l.b16 %v557
    %v1695 = vunpack.c.h.b16 %v557
    %v1696 = vunpack.c.l.b16 %v558
    %v1697 = vunpack.c.h.b16 %v558
    %v1698 = vunpack.c.l.b16 %v559
    %v1699 = vunpack.c.h.b16 %v559
    %v1700 = vunpack.c.l.b16 %v560
    %v1701 = vunpack.c.h.b16 %v560
    %v1702 = vunpack.c.l.b16 %v561
    %v1703 = vunpack.c.h.b16 %v561
    %v1704 = vunpack.c.l.b16 %v562
    %v1705 = vunpack.c.h.b16 %v562
    %v1706 = vunpack.c.l.b16 %v563
    %v1707 = vunpack.c.h.b16 %v563
    %v1708 = vunpack.c.l.b16 %v564
    %v1709 = vunpack.c.h.b16 %v564
    %v1710 = vunpack.c.l.b16 %v565
    %v1711 = vunpack.c.h.b16 %v565
    %v1712 = vunpack.c.l.b16 %v566
    %v1713 = vunpack.c.h.b16 %v566
    %v1714 = vunpack.c.l.b16 %v567
    %v1715 = vunpack.c.h.b16 %v567
    %v1716 = vunpack.c.l.b16 %v568
    %v1717 = vunpack.c.h.b16 %v568
    %v1718 = vunpack.c.l.b16 %v569
    %v1719 = vunpack.c.h.b16 %v569
    %v1720 = vunpack.c.l.b16 %v570
    %v1721 = vunpack.c.h.b16 %v570
    %v1722 = vunpack.c.l.b16 %v571
    %v1723 = vunpack.c.h.b16 %v571
    %v1724 = vunpack.c.l.b16 %v572
    %v1725 = vunpack.c.h.b16 %v572
    %v1726 = vunpack.c.l.b16 %v573
    %v1727 = vunpack.c.h.b16 %v573
    %v1728 = vunpack.c.l.b16 %v574
    %v1729 = vunpack.c.h.b16 %v574
    %v1730 = vunpack.c.l.b16 %v575
    %v1731 = vunpack.c.h.b16 %v575
    %v1732 = vunpack.c.l.b16 %v576
    %v1733 = vunpack.c.h.b16 %v576
    %v1734 = vunpack.c.l.b16 %v577
    %v1735 = vunpack.c.h.b16 %v577
    %v1736 = vunpack.c.l.b16 %v578
    %v1737 = vunpack.c.h.b16 %v578
    %v1738 = vunpack.c.l.b16 %v579
    %v1739 = vunpack.c.h.b16 %v579
    %v1740 = vunpack.c.l.b16 %v580
    %v1741 = vunpack.c.h.b16 %v580
    %v1742 = vunpack.c.l.b16 %v581
    %v1743 = vunpack.c.h.b16 %v581
    %v1744 = vunpack.c.l.b16 %v582
    %v1745 = vunpack.c.h.b16 %v582
    %v1746 = vunpack.c.l.b16 %v583
    %v1747 = vunpack.c.h.b16 %v583
    %v1748 = vunpack.c.l.b16 %v584
    %v1749 = vunpack.c.h.b16 %v584
    %v1750 = vunpack.c.l.b16 %v585
    %v1751 = vunpack.c.h.b16 %v585
    %v1752 = vunpack.c.l.b16 %v586
    %v1753 = vunpack.c.h.b16 %v586
    %v1754 = vunpack.c.l.b16 %v587
    %v1755 = vunpack.c.h.b16 %v587
    %v1756 = vunpack.c.l.b16 %v588
    %v1757 = vunpack.c.h.b16 %v588
    %v1758 = vunpack.c.l.b16 %v589
    %v1759 = vunpack.c.h.b16 %v589
    %v1760 = vunpack.c.l.b16 %v590
    %v1761 = vunpack.c.h.b16 %v590
    %v1762 = vunpack.c.l.b16 %v591
    %v1763 = vunpack.c.h.b16 %v591
    %v1764 = vunpack.c.l.b16 %v592
    %v1765 = vunpack.c.h.b16 %v592
    %v1766 = vunpack.c.l.b16 %v593
    %v1767 = vunpack.c.h.b16 %v593
    %v1768 = vunpack.c.l.b16 %v594
    %v1769 = vunpack.c.h.b16 %v594
    %v1770 = vunpack.c.l.b16 %v595
    %v1771 = vunpack.c.h.b16 %v595
    %v1772 = vunpack.c.l.b16 %v596
    %v1773 = vunpack.c.h.b16 %v596
    %v1774 = vunpack.c.l.b16 %v597
    %v1775 = vunpack.c.h.b16 %v597
    %v1776 = vunpack.c.l.b16 %v598
    %v1777 = vunpack.c.h.b16 %v598
    %v1778 = vunpack.c.l.b16 %v599
    %v1779 = vunpack.c.h.b16 %v599
    %v1780 = vunpack.c.l.b16 %v600
    %v1781 = vunpack.c.h.b16 %v600
    %v1782 = vunpack.c.l.b16 %v601
    %v1783 = vunpack.c.h.b16 %v601
    %v1784 = vunpack.c.l.b16 %v602
    %v1785 = vunpack.c.h.b16 %v602
    %v1786 = vunpack.c.l.b16 %v603
    %v1787 = vunpack.c.h.b16 %v603
    %v1788 = vunpack.c.l.b16 %v604
    %v1789 = vunpack.c.h.b16 %v604
    %v1790 = vunpack.c.l.b16 %v605
    %v1791 = vunpack.c.h.b16 %v605
    %v1792 = vunpack.c.l.b16 %v606
    %v1793 = vunpack.c.h.b16 %v606
    %v1794 = vunpack.c.l.b16 %v607
    %v1795 = vunpack.c.h.b16 %v607
    %v1796 = vunpack.c.l.b16 %v608
    %v1797 = vunpack.c.h.b16 %v608
    %v1798 = vunpack.c.l.b16 %v609
    %v1799 = vunpack.c.h.b16 %v609
    %v1800 = vunpack.c.l.b16 %v610
    %v1801 = vunpack.c.h.b16 %v610
    %v1802 = vunpack.c.l.b16 %v611
    %v1803 = vunpack.c.h.b16 %v611
    %v1804 = vunpack.c.l.b16 %v612
    %v1805 = vunpack.c.h.b16 %v612
    %v1806 = vunpack.c.l.b16 %v613
    %v1807 = vunpack.c.h.b16 %v613
    %v1808 = vpack.c.b16 %v1048, %v1040
    %v1809 = vpack.c.b16 %v1049, %v1041
    %v1810 = vpack.c.b16 %v1050, %v1042
    %v1811 = vpack.c.b16 %v1051, %v1043
    %v1812 = vpack.c.b16 %v1052, %v1044
    %v1813 = vpack.c.b16 %v1053, %v1045
    %v1814 = vpack.c.b16 %v1054, %v1046
    %v1815 = vpack.c.b16 %v1055, %v1047
    %v1816 = vpack.c.b16 %v1064, %v1056
    %v1817 = vpack.c.b16 %v1065, %v1057
    %v1818 = vpack.c.b16 %v1066, %v1058
    %v1819 = vpack.c.b16 %v1067, %v1059
    %v1820 = vpack.c.b16 %v1068, %v1060
    %v1821 = vpack.c.b16 %v1069, %v1061
    %v1822 = vpack.c.b16 %v1070, %v1062
    %v1823 = vpack.c.b16 %v1071, %v1063
    %v1824 = vpack.c.b16 %v1080, %v1072
    %v1825 = vpack.c.b16 %v1081, %v1073
    %v1826 = vpack.c.b16 %v1082, %v1074
    %v1827 = vpack.c.b16 %v1083, %v1075
    %v1828 = vpack.c.b16 %v1084, %v1076
    %v1829 = vpack.c.b16 %v1085, %v1077
    %v1830 = vpack.c.b16 %v1086, %v1078
    %v1831 = vpack.c.b16 %v1087, %v1079
    %v1832 = vpack.c.b16 %v1096, %v1088
    %v1833 = vpack.c.b16 %v1097, %v1089
    %v1834 = vpack.c.b16 %v1098, %v1090
    %v1835 = vpack.c.b16 %v1099, %v1091
    %v1836 = vpack.c.b16 %v1100, %v1092
    %v1837 = vpack.c.b16 %v1101, %v1093
    %v1838 = vpack.c.b16 %v1102, %v1094
    %v1839 = vpack.c.b16 %v1103, %v1095
    %v1840 = vpack.c.b16 %v1112, %v1104
    %v1841 = vpack.c.b16 %v1113, %v1105
    %v1842 = vpack.c.b16 %v1114, %v1106
    %v1843 = vpack.c.b16 %v1115, %v1107
    %v1844 = vpack.c.b16 %v1116, %v1108
    %v1845 = vpack.c.b16 %v1117, %v1109
    %v1846 = vpack.c.b16 %v1118, %v1110
    %v1847 = vpack.c.b16 %v1119, %v1111
    %v1848 = vpack.c.b16 %v1128, %v1120
    %v1849 = vpack.c.b16 %v1129, %v1121
    %v1850 = vpack.c.b16 %v1130, %v1122
    %v1851 = vpack.c.b16 %v1131, %v1123
    %v1852 = vpack.c.b16 %v1132, %v1124
    %v1853 = vpack.c.b16 %v1133, %v1125
    %v1854 = vpack.c.b16 %v1134, %v1126
    %v1855 = vpack.c.b16 %v1135, %v1127
    %v1856 = vpack.c.b16 %v1144, %v1136
    %v1857 = vpack.c.b16 %v1145, %v1137
    %v1858 = vpack.c.b16 %v1146, %v1138
    %v1859 = vpack.c.b16 %v1147, %v1139
    %v1860 = vpack.c.b16 %v1148, %v1140
    %v1861 = vpack.c.b16 %v1149, %v1141
    %v1862 = vpack.c.b16 %v1150, %v1142
    %v1863 = vpack.c.b16 %v1151, %v1143
    %v1864 = vpack.c.b16 %v1160, %v1152
    %v1865 = vpack.c.b16 %v1161, %v1153
    %v1866 = vpack.c.b16 %v1162, %v1154
    %v1867 = vpack.c.b16 %v1163, %v1155
    %v1868 = vpack.c.b16 %v1164, %v1156
    %v1869 = vpack.c.b16 %v1165, %v1157
    %v1870 = vpack.c.b16 %v1166, %v1158
    %v1871 = vpack.c.b16 %v1167, %v1159
    %v1872 = vpack.c.b16 %v1176, %v1168
    %v1873 = vpack.c.b16 %v1177, %v1169
    %v1874 = vpack.c.b16 %v1178, %v1170
    %v1875 = vpack.c.b16 %v1179, %v1171
    %v1876 = vpack.c.b16 %v1180, %v1172
    %v1877 = vpack.c.b16 %v1181, %v1173
    %v1878 = vpack.c.b16 %v1182, %v1174
    %v1879 = vpack.c.b16 %v1183, %v1175
    %v1880 = vpack.c.b16 %v1192, %v1184
    %v1881 = vpack.c.b16 %v1193, %v1185
    %v1882 = vpack.c.b16 %v1194, %v1186
    %v1883 = vpack.c.b16 %v1195, %v1187
    %v1884 = vpack.c.b16 %v1196, %v1188
    %v1885 = vpack.c.b16 %v1197, %v1189
    %v1886 = vpack.c.b16 %v1198, %v1190
    %v1887 = vpack.c.b16 %v1199, %v1191
    %v1888 = vpack.c.b16 %v1208, %v1200
    %v1889 = vpack.c.b16 %v1209, %v1201
    %v1890 = vpack.c.b16 %v1210, %v1202
    %v1891 = vpack.c.b16 %v1211, %v1203
    %v1892 = vpack.c.b16 %v1212, %v1204
    %v1893 = vpack.c.b16 %v1213, %v1205
    %v1894 = vpack.c.b16 %v1214, %v1206
    %v1895 = vpack.c.b16 %v1215, %v1207
    %v1896 = vpack.c.b16 %v1224, %v1216
    %v1897 = vpack.c.b16 %v1225, %v1217
    %v1898 = vpack.c.b16 %v1226, %v1218
    %v1899 = vpack.c.b16 %v1227, %v1219
    %v1900 = vpack.c.b16 %v1228, %v1220
    %v1901 = vpack.c.b16 %v1229, %v1221
    %v1902 = vpack.c.b16 %v1230, %v1222
    %v1903 = vpack.c.b16 %v1231, %v1223
    %v1904 = vpack.c.b16 %v1240, %v1232
    %v1905 = vpack.c.b16 %v1241, %v1233
    %v1906 = vpack.c.b16 %v1242, %v1234
    %v1907 = vpack.c.b16 %v1243, %v1235
    %v1908 = vpack.c.b16 %v1244, %v1236
    %v1909 = vpack.c.b16 %v1245, %v1237
    %v1910 = vpack.c.b16 %v1246, %v1238
    %v1911 = vpack.c.b16 %v1247, %v1239
    %v1912 = vpack.c.b16 %v1256, %v1248
    %v1913 = vpack.c.b16 %v1257, %v1249
    %v1914 = vpack.c.b16 %v1258, %v1250
    %v1915 = vpack.c.b16 %v1259, %v1251
    %v1916 = vpack.c.b16 %v1260, %v1252
    %v1917 = vpack.c.b16 %v1261, %v1253
    %v1918 = vpack.c.b16 %v1262, %v1254
    %v1919 = vpack.c.b16 %v1263, %v1255
    %v1920 = vpack.c.b16 %v1272, %v1264
    %v1921 = vpack.c.b16 %v1273, %v1265
    %v1922 = vpack.c.b16 %v1274, %v1266
    %v1923 = vpack.c.b16 %v1275, %v1267
    %v1924 = vpack.c.b16 %v1276, %v1268
    %v1925 = vpack.c.b16 %v1277, %v1269
    %v1926 = vpack.c.b16 %v1278, %v1270
    %v1927 = vpack.c.b16 %v1279, %v1271
    %v1928 = vpack.c.b16 %v1288, %v1280
    %v1929 = vpack.c.b16 %v1289, %v1281
    %v1930 = vpack.c.b16 %v1290, %v1282
    %v1931 = vpack.c.b16 %v1291, %v1283
    %v1932 = vpack.c.b16 %v1292, %v1284
    %v1933 = vpack.c.b16 %v1293, %v1285
    %v1934 = vpack.c.b16 %v1294, %v1286
    %v1935 = vpack.c.b16 %v1295, %v1287
    %v1936 = vpack.c.b16 %v1304, %v1296
    %v1937 = vpack.c.b16 %v1305, %v1297
    %v1938 = vpack.c.b16 %v1306, %v1298
    %v1939 = vpack.c.b16 %v1307, %v1299
    %v1940 = vpack.c.b16 %v1308, %v1300
    %v1941 = vpack.c.b16 %v1309, %v1301
    %v1942 = vpack.c.b16 %v1310, %v1302
    %v1943 = vpack.c.b16 %v1311, %v1303
    %v1944 = vpack.c.b16 %v1320, %v1312
    %v1945 = vpack.c.b16 %v1321, %v1313
    %v1946 = vpack.c.b16 %v1322, %v1314
    %v1947 = vpack.c.b16 %v1323, %v1315
    %v1948 = vpack.c.b16 %v1324, %v1316
    %v1949 = vpack.c.b16 %v1325, %v1317
    %v1950 = vpack.c.b16 %v1326, %v1318
    %v1951 = vpack.c.b16 %v1327, %v1319
    %v1952 = vpack.c.b16 %v1336, %v1328
    %v1953 = vpack.c.b16 %v1337, %v1329
    %v1954 = vpack.c.b16 %v1338, %v1330
    %v1955 = vpack.c.b16 %v1339, %v1331
    %v1956 = vpack.c.b16 %v1340, %v1332
    %v1957 = vpack.c.b16 %v1341, %v1333
    %v1958 = vpack.c.b16 %v1342, %v1334
    %v1959 = vpack.c.b16 %v1343, %v1335
    %v1960 = vpack.c.b16 %v1352, %v1344
    %v1961 = vpack.c.b16 %v1353, %v1345
    %v1962 = vpack.c.b16 %v1354, %v1346
    %v1963 = vpack.c.b16 %v1355, %v1347
    %v1964 = vpack.c.b16 %v1356, %v1348
    %v1965 = vpack.c.b16 %v1357, %v1349
    %v1966 = vpack.c.b16 %v1358, %v1350
    %v1967 = vpack.c.b16 %v1359, %v1351
    %v1968 = vpack.c.b16 %v1368, %v1360
    %v1969 = vpack.c.b16 %v1369, %v1361
    %v1970 = vpack.c.b16 %v1370, %v1362
    %v1971 = vpack.c.b16 %v1371, %v1363
    %v1972 = vpack.c.b16 %v1372, %v1364
    %v1973 = vpack.c.b16 %v1373, %v1365
    %v1974 = vpack.c.b16 %v1374, %v1366
    %v1975 = vpack.c.b16 %v1375, %v1367
    %v1976 = vpack.c.b16 %v1384, %v1376
    %v1977 = vpack.c.b16 %v1385, %v1377
    %v1978 = vpack.c.b16 %v1386, %v1378
    %v1979 = vpack.c.b16 %v1387, %v1379
    %v1980 = vpack.c.b16 %v1388, %v1380
    %v1981 = vpack.c.b16 %v1389, %v1381
    %v1982 = vpack.c.b16 %v1390, %v1382
    %v1983 = vpack.c.b16 %v1391, %v1383
    %v1984 = vpack.c.b16 %v1400, %v1392
    %v1985 = vpack.c.b16 %v1401, %v1393
    %v1986 = vpack.c.b16 %v1402, %v1394
    %v1987 = vpack.c.b16 %v1403, %v1395
    %v1988 = vpack.c.b16 %v1404, %v1396
    %v1989 = vpack.c.b16 %v1405, %v1397
    %v1990 = vpack.c.b16 %v1406, %v1398
    %v1991 = vpack.c.b16 %v1407, %v1399
    %v1992 = vpack.c.b16 %v1416, %v1408
    %v1993 = vpack.c.b16 %v1417, %v1409
    %v1994 = vpack.c.b16 %v1418, %v1410
    %v1995 = vpack.c.b16 %v1419, %v1411
    %v1996 = vpack.c.b16 %v1420, %v1412
    %v1997 = vpack.c.b16 %v1421, %v1413
    %v1998 = vpack.c.b16 %v1422, %v1414
    %v1999 = vpack.c.b16 %v1423, %v1415
    %v2000 = vpack.c.b16 %v1432, %v1424
    %v2001 = vpack.c.b16 %v1433, %v1425
    %v2002 = vpack.c.b16 %v1434, %v1426
    %v2003 = vpack.c.b16 %v1435, %v1427
    %v2004 = vpack.c.b16 %v1436, %v1428
    %v2005 = vpack.c.b16 %v1437, %v1429
    %v2006 = vpack.c.b16 %v1438, %v1430
    %v2007 = vpack.c.b16 %v1439, %v1431
    %v2008 = vpack.c.b16 %v1448, %v1440
    %v2009 = vpack.c.b16 %v1449, %v1441
    %v2010 = vpack.c.b16 %v1450, %v1442
    %v2011 = vpack.c.b16 %v1451, %v1443
    %v2012 = vpack.c.b16 %v1452, %v1444
    %v2013 = vpack.c.b16 %v1453, %v1445
    %v2014 = vpack.c.b16 %v1454, %v1446
    %v2015 = vpack.c.b16 %v1455, %v1447
    %v2016 = vpack.c.b16 %v1464, %v1456
    %v2017 = vpack.c.b16 %v1465, %v1457
    %v2018 = vpack.c.b16 %v1466, %v1458
    %v2019 = vpack.c.b16 %v1467, %v1459
    %v2020 = vpack.c.b16 %v1468, %v1460
    %v2021 = vpack.c.b16 %v1469, %v1461
    %v2022 = vpack.c.b16 %v1470, %v1462
    %v2023 = vpack.c.b16 %v1471, %v1463
    %v2024 = vpack.c.b16 %v1480, %v1472
    %v2025 = vpack.c.b16 %v1481, %v1473
    %v2026 = vpack.c.b16 %v1482, %v1474
    %v2027 = vpack.c.b16 %v1483, %v1475
    %v2028 = vpack.c.b16 %v1484, %v1476
    %v2029 = vpack.c.b16 %v1485, %v1477
    %v2030 = vpack.c.b16 %v1486, %v1478
    %v2031 = vpack.c.b16 %v1487, %v1479
    %v2032 = vpack.c.b16 %v1496, %v1488
    %v2033 = vpack.c.b16 %v1497, %v1489
    %v2034 = vpack.c.b16 %v1498, %v1490
    %v2035 = vpack.c.b16 %v1499, %v1491
    %v2036 = vpack.c.b16 %v1500, %v1492
    %v2037 = vpack.c.b16 %v1501, %v1493
    %v2038 = vpack.c.b16 %v1502, %v1494
    %v2039 = vpack.c.b16 %v1503, %v1495
    %v2040 = vpack.c.b16 %v1512, %v1504
    %v2041 = vpack.c.b16 %v1513, %v1505
    %v2042 = vpack.c.b16 %v1514, %v1506
    %v2043 = vpack.c.b16 %v1515, %v1507
    %v2044 = vpack.c.b16 %v1516, %v1508
    %v2045 = vpack.c.b16 %v1517, %v1509
    %v2046 = vpack.c.b16 %v1518, %v1510
    %v2047 = vpack.c.b16 %v1519, %v1511
    %v2048 = vpack.c.b16 %v1528, %v1520
    %v2049 = vpack.c.b16 %v1529, %v1521
    %v2050 = vpack.c.b16 %v1530, %v1522
    %v2051 = vpack.c.b16 %v1531, %v1523
    %v2052 = vpack.c.b16 %v1532, %v1524
    %v2053 = vpack.c.b16 %v1533, %v1525
    %v2054 = vpack.c.b16 %v1534, %v1526
    %v2055 = vpack.c.b16 %v1535, %v1527
    %v2056 = vpack.c.b16 %v1544, %v1536
    %v2057 = vpack.c.b16 %v1545, %v1537
    %v2058 = vpack.c.b16 %v1546, %v1538
    %v2059 = vpack.c.b16 %v1547, %v1539
    %v2060 = vpack.c.b16 %v1548, %v1540
    %v2061 = vpack.c.b16 %v1549, %v1541
    %v2062 = vpack.c.b16 %v1550, %v1542
    %v2063 = vpack.c.b16 %v1551, %v1543
    %v2064 = vpack.c.b16 %v1560, %v1552
    %v2065 = vpack.c.b16 %v1561, %v1553
    %v2066 = vpack.c.b16 %v1562, %v1554
    %v2067 = vpack.c.b16 %v1563, %v1555
    %v2068 = vpack.c.b16 %v1564, %v1556
    %v2069 = vpack.c.b16 %v1565, %v1557
    %v2070 = vpack.c.b16 %v1566, %v1558
    %v2071 = vpack.c.b16 %v1567, %v1559
    %v2072 = vpack.c.b16 %v1576, %v1568
    %v2073 = vpack.c.b16 %v1577, %v1569
    %v2074 = vpack.c.b16 %v1578, %v1570
    %v2075 = vpack.c.b16 %v1579, %v1571
    %v2076 = vpack.c.b16 %v1580, %v1572
    %v2077 = vpack.c.b16 %v1581, %v1573
    %v2078 = vpack.c.b16 %v1582, %v1574
    %v2079 = vpack.c.b16 %v1583, %v1575
    %v2080 = vpack.c.b16 %v1592, %v1584
    %v2081 = vpack.c.b16 %v1593, %v1585
    %v2082 = vpack.c.b16 %v1594, %v1586
    %v2083 = vpack.c.b16 %v1595, %v1587
    %v2084 = vpack.c.b16 %v1596, %v1588
    %v2085 = vpack.c.b16 %v1597, %v1589
    %v2086 = vpack.c.b16 %v1598, %v1590
    %v2087 = vpack.c.b16 %v1599, %v1591
    %v2088 = vpack.c.b16 %v1608, %v1600
    %v2089 = vpack.c.b16 %v1609, %v1601
    %v2090 = vpack.c.b16 %v1610, %v1602
    %v2091 = vpack.c.b16 %v1611, %v1603
    %v2092 = vpack.c.b16 %v1612, %v1604
    %v2093 = vpack.c.b16 %v1613, %v1605
    %v2094 = vpack.c.b16 %v1614, %v1606
    %v2095 = vpack.c.b16 %v1615, %v1607
    %v2096 = vpack.c.b16 %v1624, %v1616
    %v2097 = vpack.c.b16 %v1625, %v1617
    %v2098 = vpack.c.b16 %v1626, %v1618
    %v2099 = vpack.c.b16 %v1627, %v1619
    %v2100 = vpack.c.b16 %v1628, %v1620
    %v2101 = vpack.c.b16 %v1629, %v1621
    %v2102 = vpack.c.b16 %v1630, %v1622
    %v2103 = vpack.c.b16 %v1631, %v1623
    %v2104 = vpack.c.b16 %v1640, %v1632
    %v2105 = vpack.c.b16 %v1641, %v1633
    %v2106 = vpack.c.b16 %v1642, %v1634
    %v2107 = vpack.c.b16 %v1643, %v1635
    %v2108 = vpack.c.b16 %v1644, %v1636
    %v2109 = vpack.c.b16 %v1645, %v1637
    %v2110 = vpack.c.b16 %v1646, %v1638
    %v2111 = vpack.c.b16 %v1647, %v1639
    %v2112 = vpack.c.b16 %v1656, %v1648
    %v2113 = vpack.c.b16 %v1657, %v1649
    %v2114 = vpack.c.b16 %v1658, %v1650
    %v2115 = vpack.c.b16 %v1659, %v1651
    %v2116 = vpack.c.b16 %v1660, %v1652
    %v2117 = vpack.c.b16 %v1661, %v1653
    %v2118 = vpack.c.b16 %v1662, %v1654
    %v2119 = vpack.c.b16 %v1663, %v1655
    %v2120 = vpack.c.b16 %v1672, %v1664
    %v2121 = vpack.c.b16 %v1673, %v1665
    %v2122 = vpack.c.b16 %v1674, %v1666
    %v2123 = vpack.c.b16 %v1675, %v1667
    %v2124 = vpack.c.b16 %v1676, %v1668
    %v2125 = vpack.c.b16 %v1677, %v1669
    %v2126 = vpack.c.b16 %v1678, %v1670
    %v2127 = vpack.c.b16 %v1679, %v1671
    %v2128 = vpack.c.b16 %v1688, %v1680
    %v2129 = vpack.c.b16 %v1689, %v1681
    %v2130 = vpack.c.b16 %v1690, %v1682
    %v2131 = vpack.c.b16 %v1691, %v1683
    %v2132 = vpack.c.b16 %v1692, %v1684
    %v2133 = vpack.c.b16 %v1693, %v1685
    %v2134 = vpack.c.b16 %v1694, %v1686
    %v2135 = vpack.c.b16 %v1695, %v1687
    %v2136 = vpack.c.b16 %v1704, %v1696
    %v2137 = vpack.c.b16 %v1705, %v1697
    %v2138 = vpack.c.b16 %v1706, %v1698
    %v2139 = vpack.c.b16 %v1707, %v1699
    %v2140 = vpack.c.b16 %v1708, %v1700
    %v2141 = vpack.c.b16 %v1709, %v1701
    %v2142 = vpack.c.b16 %v1710, %v1702
    %v2143 = vpack.c.b16 %v1711, %v1703
    %v2144 = vpack.c.b16 %v1720, %v1712
    %v2145 = vpack.c.b16 %v1721, %v1713
    %v2146 = vpack.c.b16 %v1722, %v1714
    %v2147 = vpack.c.b16 %v1723, %v1715
    %v2148 = vpack.c.b16 %v1724, %v1716
    %v2149 = vpack.c.b16 %v1725, %v1717
    %v2150 = vpack.c.b16 %v1726, %v1718
    %v2151 = vpack.c.b16 %v1727, %v1719
    %v2152 = vpack.c.b16 %v1736, %v1728
    %v2153 = vpack.c.b16 %v1737, %v1729
    %v2154 = vpack.c.b16 %v1738, %v1730
    %v2155 = vpack.c.b16 %v1739, %v1731
    %v2156 = vpack.c.b16 %v1740, %v1732
    %v2157 = vpack.c.b16 %v1741, %v1733
    %v2158 = vpack.c.b16 %v1742, %v1734
    %v2159 = vpack.c.b16 %v1743, %v1735
    %v2160 = vpack.c.b16 %v1752, %v1744
    %v2161 = vpack.c.b16 %v1753, %v1745
    %v2162 = vpack.c.b16 %v1754, %v1746
    %v2163 = vpack.c.b16 %v1755, %v1747
    %v2164 = vpack.c.b16 %v1756, %v1748
    %v2165 = vpack.c.b16 %v1757, %v1749
    %v2166 = vpack.c.b16 %v1758, %v1750
    %v2167 = vpack.c.b16 %v1759, %v1751
    %v2168 = vpack.c.b16 %v1768, %v1760
    %v2169 = vpack.c.b16 %v1769, %v1761
    %v2170 = vpack.c.b16 %v1770, %v1762
    %v2171 = vpack.c.b16 %v1771, %v1763
    %v2172 = vpack.c.b16 %v1772, %v1764
    %v2173 = vpack.c.b16 %v1773, %v1765
    %v2174 = vpack.c.b16 %v1774, %v1766
    %v2175 = vpack.c.b16 %v1775, %v1767
    %v2176 = vpack.c.b16 %v1784, %v1776
    %v2177 = vpack.c.b16 %v1785, %v1777
    %v2178 = vpack.c.b16 %v1786, %v1778
    %v2179 = vpack.c.b16 %v1787, %v1779
    %v2180 = vpack.c.b16 %v1788, %v1780
    %v2181 = vpack.c.b16 %v1789, %v1781
    %v2182 = vpack.c.b16 %v1790, %v1782
    %v2183 = vpack.c.b16 %v1791, %v1783
    %v2184 = vpack.c.b16 %v1800, %v1792
    %v2185 = vpack.c.b16 %v1801, %v1793
    %v2186 = vpack.c.b16 %v1802, %v1794
    %v2187 = vpack.c.b16 %v1803, %v1795
    %v2188 = vpack.c.b16 %v1804, %v1796
    %v2189 = vpack.c.b16 %v1805, %v1797
    %v2190 = vpack.c.b16 %v1806, %v1798
    %v2191 = vpack.c.b16 %v1807, %v1799
    %2576 = vmatprep.subr.bf16.mxu0 %v1809
    %2577 = vmatpush1.bf16.msra.mxu0 %v1808
    %2578 = vmatprep.subr.bf16.mxu0 %v1817
    %2579 = vmatpush1.bf16.msra.mxu0 %v1816
    %2580 = vmatprep.subr.bf16.mxu0 %v1825
    %2581 = vmatpush1.bf16.msra.mxu0 %v1824
    %2582 = vmatprep.subr.bf16.mxu0 %v1833
    %2583 = vmatpush1.bf16.msra.mxu0 %v1832
    %2584 = vmatprep.subr.bf16.mxu0 %v1841
    %2585 = vmatpush1.bf16.msra.mxu0 %v1840
    %2586 = vmatprep.subr.bf16.mxu0 %v1849
    %2587 = vmatpush1.bf16.msra.mxu0 %v1848
    %2588 = vmatprep.subr.bf16.mxu0 %v1857
    %2589 = vmatpush1.bf16.msra.mxu0 %v1856
    %2590 = vmatprep.subr.bf16.mxu0 %v1865
    %2591 = vmatpush1.bf16.msra.mxu0 %v1864
    %2592 = vmatprep.subr.bf16.mxu0 %v1873
    %2593 = vmatpush1.bf16.msra.mxu0 %v1872
    %2594 = vmatprep.subr.bf16.mxu0 %v1881
    %2595 = vmatpush1.bf16.msra.mxu0 %v1880
    %2596 = vmatprep.subr.bf16.mxu0 %v1889
    %2597 = vmatpush1.bf16.msra.mxu0 %v1888
    %2598 = vmatprep.subr.bf16.mxu0 %v1897
    %2599 = vmatpush1.bf16.msra.mxu0 %v1896
    %2600 = vmatprep.subr.bf16.mxu0 %v1905
    %2601 = vmatpush1.bf16.msra.mxu0 %v1904
    %2602 = vmatprep.subr.bf16.mxu0 %v1913
    %2603 = vmatpush1.bf16.msra.mxu0 %v1912
    %2604 = vmatprep.subr.bf16.mxu0 %v1921
    %2605 = vmatpush1.bf16.msra.mxu0 %v1920
    %2606 = vmatprep.subr.bf16.mxu0 %v1929
    %2607 = vmatpush1.bf16.msra.mxu0 %v1928
    %2608 = vmatprep.mubr.bf16.mxu0 %v219
    %2609 = vmatmul.mubr.bf16.gmra.mrb[0].mxu0 %v218
    %v2610 = vpop.f32.mrb[0].mxu0
    %v2611 = vadd.f32 %v619, %v2610
    %v2612 = vpop.f32.mrb[0].mxu0
    %v2613 = vadd.f32 %v623, %v2612
    %v2614 = vpop.f32.mrb[0].mxu0
    %v2615 = vadd.f32 %v619, %v2614
    %v2616 = vpop.f32.mrb[0].mxu0
    %v2617 = vadd.f32 %v623, %v2616
    %2618 = vmatprep.mubr.bf16.mxu0 %v225
    %2619 = vmatmul.mubr.bf16.gmra.mrb[0].mxu0 %v224
    %v2620 = vpop.f32.mrb[0].mxu0
    %v2621 = vadd.f32 %v619, %v2620
    %v2622 = vpop.f32.mrb[0].mxu0
    %v2623 = vadd.f32 %v623, %v2622
    %v2624 = vpop.f32.mrb[0].mxu0
    %v2625 = vadd.f32 %v619, %v2624
    %v2626 = vpop.f32.mrb[0].mxu0
    %v2627 = vadd.f32 %v623, %v2626
    %2628 = vdwg.mxu0
    %2629 = vmatprep.subr.bf16.mxu0 %v1937
    %2630 = vmatpush1.bf16.msra.mxu0 %v1936
    %2631 = vmatprep.subr.bf16.mxu0 %v1945
    %2632 = vmatpush1.bf16.msra.mxu0 %v1944
    %2633 = vmatprep.subr.bf16.mxu0 %v1953
    %2634 = vmatpush1.bf16.msra.mxu0 %v1952
    %2635 = vmatprep.subr.bf16.mxu0 %v1961
    %2636 = vmatpush1.bf16.msra.mxu0 %v1960
    %2637 = vmatprep.subr.bf16.mxu0 %v1969
    %2638 = vmatpush1.bf16.msra.mxu0 %v1968
    %2639 = vmatprep.subr.bf16.mxu0 %v1977
    %2640 = vmatpush1.bf16.msra.mxu0 %v1976
    %2641 = vmatprep.subr.bf16.mxu0 %v1985
    %2642 = vmatpush1.bf16.msra.mxu0 %v1984
    %2643 = vmatprep.subr.bf16.mxu0 %v1993
    %2644 = vmatpush1.bf16.msra.mxu0 %v1992
    %2645 = vmatprep.subr.bf16.mxu0 %v2001
    %2646 = vmatpush1.bf16.msra.mxu0 %v2000
    %2647 = vmatprep.subr.bf16.mxu0 %v2009
    %2648 = vmatpush1.bf16.msra.mxu0 %v2008
    %2649 = vmatprep.subr.bf16.mxu0 %v2017
    %2650 = vmatpush1.bf16.msra.mxu0 %v2016
    %2651 = vmatprep.subr.bf16.mxu0 %v2025
    %2652 = vmatpush1.bf16.msra.mxu0 %v2024
    %2653 = vmatprep.subr.bf16.mxu0 %v2033
    %2654 = vmatpush1.bf16.msra.mxu0 %v2032
    %2655 = vmatprep.subr.bf16.mxu0 %v2041
    %2656 = vmatpush1.bf16.msra.mxu0 %v2040
    %2657 = vmatprep.subr.bf16.mxu0 %v2049
    %2658 = vmatpush1.bf16.msra.mxu0 %v2048
    %2659 = vmatprep.subr.bf16.mxu0 %v2057
    %2660 = vmatpush1.bf16.msra.mxu0 %v2056
    %2661 = vmatprep.mubr.bf16.mxu0 %v221
    %2662 = vmatmul.mubr.bf16.gmra.mrb[0].mxu0 %v220
    %v2663 = vpop.f32.mrb[0].mxu0
    %v2664 = vadd.f32 %v2611, %v2663
    %v2665 = vpop.f32.mrb[0].mxu0
    %v2666 = vadd.f32 %v2613, %v2665
    %v2667 = vpop.f32.mrb[0].mxu0
    %v2668 = vadd.f32 %v2615, %v2667
    %v2669 = vpop.f32.mrb[0].mxu0
    %v2670 = vadd.f32 %v2617, %v2669
    %2671 = vmatprep.mubr.bf16.mxu0 %v227
    %2672 = vmatmul.mubr.bf16.gmra.mrb[0].mxu0 %v226
    %v2673 = vpop.f32.mrb[0].mxu0
    %v2674 = vadd.f32 %v2621, %v2673
    %v2675 = vpop.f32.mrb[0].mxu0
    %v2676 = vadd.f32 %v2623, %v2675
    %v2677 = vpop.f32.mrb[0].mxu0
    %v2678 = vadd.f32 %v2625, %v2677
    %v2679 = vpop.f32.mrb[0].mxu0
    %v2680 = vadd.f32 %v2627, %v2679
    %2681 = vdwg.mxu0
    %2682 = vmatprep.subr.bf16.mxu0 %v2065
    %2683 = vmatpush1.bf16.msra.mxu0 %v2064
    %2684 = vmatprep.subr.bf16.mxu0 %v2073
    %2685 = vmatpush1.bf16.msra.mxu0 %v2072
    %2686 = vmatprep.subr.bf16.mxu0 %v2081
    %2687 = vmatpush1.bf16.msra.mxu0 %v2080
    %2688 = vmatprep.subr.bf16.mxu0 %v2089
    %2689 = vmatpush1.bf16.msra.mxu0 %v2088
    %2690 = vmatprep.subr.bf16.mxu0 %v2097
    %2691 = vmatpush1.bf16.msra.mxu0 %v2096
    %2692 = vmatprep.subr.bf16.mxu0 %v2105
    %2693 = vmatpush1.bf16.msra.mxu0 %v2104
    %2694 = vmatprep.subr.bf16.mxu0 %v2113
    %2695 = vmatpush1.bf16.msra.mxu0 %v2112
    %2696 = vmatprep.subr.bf16.mxu0 %v2121
    %2697 = vmatpush1.bf16.msra.mxu0 %v2120
    %2698 = vmatprep.subr.bf16.mxu0 %v2129
    %2699 = vmatpush1.bf16.msra.mxu0 %v2128
    %2700 = vmatprep.subr.bf16.mxu0 %v2137
    %2701 = vmatpush1.bf16.msra.mxu0 %v2136
    %2702 = vmatprep.subr.bf16.mxu0 %v2145
    %2703 = vmatpush1.bf16.msra.mxu0 %v2144
    %2704 = vmatprep.subr.bf16.mxu0 %v2153
    %2705 = vmatpush1.bf16.msra.mxu0 %v2152
    %2706 = vmatprep.subr.bf16.mxu0 %v2161
    %2707 = vmatpush1.bf16.msra.mxu0 %v2160
    %2708 = vmatprep.subr.bf16.mxu0 %v2169
    %2709 = vmatpush1.bf16.msra.mxu0 %v2168
    %2710 = vmatprep.subr.bf16.mxu0 %v2177
    %2711 = vmatpush1.bf16.msra.mxu0 %v2176
    %2712 = vmatprep.subr.bf16.mxu0 %v2185
    %2713 = vmatpush1.bf16.msra.mxu0 %v2184
    %2714 = vmatprep.mubr.bf16.mxu0 %v223
    %2715 = vmatmul.mubr.bf16.gmra.mrb[0].mxu0 %v222
    %v2716 = vpop.f32.mrb[0].mxu0
    %v2717 = vadd.f32 %v2664, %v2716
    %v2718 = vpop.f32.mrb[0].mxu0
    %v2719 = vadd.f32 %v2666, %v2718
    %v2720 = vpop.f32.mrb[0].mxu0
    %v2721 = vadd.f32 %v2668, %v2720
    %v2722 = vpop.f32.mrb[0].mxu0
    %v2723 = vadd.f32 %v2670, %v2722
    %2724 = vmatprep.mubr.bf16.mxu0 %v229
    %2725 = vmatmul.mubr.bf16.gmra.mrb[0].mxu0 %v228
    %v2726 = vpop.f32.mrb[0].mxu0
    %v2727 = vadd.f32 %v2674, %v2726
    %v2728 = vpop.f32.mrb[0].mxu0
    %v2729 = vadd.f32 %v2676, %v2728
    %v2730 = vpop.f32.mrb[0].mxu0
    %v2731 = vadd.f32 %v2678, %v2730
    %v2732 = vpop.f32.mrb[0].mxu0
    %v2733 = vadd.f32 %v2680, %v2732
    %2734 = vdwg.mxu0
    %2735 = vmatprep.subr.bf16.mxu0 %v1811
    %2736 = vmatpush1.bf16.msra.mxu0 %v1810
    %2737 = vmatprep.subr.bf16.mxu0 %v1819
    %2738 = vmatpush1.bf16.msra.mxu0 %v1818
    %2739 = vmatprep.subr.bf16.mxu0 %v1827
    %2740 = vmatpush1.bf16.msra.mxu0 %v1826
    %2741 = vmatprep.subr.bf16.mxu0 %v1835
    %2742 = vmatpush1.bf16.msra.mxu0 %v1834
    %2743 = vmatprep.subr.bf16.mxu0 %v1843
    %2744 = vmatpush1.bf16.msra.mxu0 %v1842
    %2745 = vmatprep.subr.bf16.mxu0 %v1851
    %2746 = vmatpush1.bf16.msra.mxu0 %v1850
    %2747 = vmatprep.subr.bf16.mxu0 %v1859
    %2748 = vmatpush1.bf16.msra.mxu0 %v1858
    %2749 = vmatprep.subr.bf16.mxu0 %v1867
    %2750 = vmatpush1.bf16.msra.mxu0 %v1866
    %2751 = vmatprep.subr.bf16.mxu0 %v1875
    %2752 = vmatpush1.bf16.msra.mxu0 %v1874
    %2753 = vmatprep.subr.bf16.mxu0 %v1883
    %2754 = vmatpush1.bf16.msra.mxu0 %v1882
    %2755 = vmatprep.subr.bf16.mxu0 %v1891
    %2756 = vmatpush1.bf16.msra.mxu0 %v1890
    %2757 = vmatprep.subr.bf16.mxu0 %v1899
    %2758 = vmatpush1.bf16.msra.mxu0 %v1898
    %2759 = vmatprep.subr.bf16.mxu0 %v1907
    %2760 = vmatpush1.bf16.msra.mxu0 %v1906
    %2761 = vmatprep.subr.bf16.mxu0 %v1915
    %2762 = vmatpush1.bf16.msra.mxu0 %v1914
    %2763 = vmatprep.subr.bf16.mxu0 %v1923
    %2764 = vmatpush1.bf16.msra.mxu0 %v1922
    %2765 = vmatprep.subr.bf16.mxu0 %v1931
    %2766 = vmatpush1.bf16.msra.mxu0 %v1930
    %2767 = vmatprep.mubr.bf16.mxu0 %v219
    %2768 = vmatmul.mubr.bf16.gmra.mrb[0].mxu0 %v218
    %v2769 = vpop.f32.mrb[0].mxu0
    %v2770 = vadd.f32 %v627, %v2769
    %v2771 = vpop.f32.mrb[0].mxu0
    %v2772 = vadd.f32 %v631, %v2771
    %v2773 = vpop.f32.mrb[0].mxu0
    %v2774 = vadd.f32 %v627, %v2773
    %v2775 = vpop.f32.mrb[0].mxu0
    %v2776 = vadd.f32 %v631, %v2775
    %2777 = vmatprep.mubr.bf16.mxu0 %v225
    %2778 = vmatmul.mubr.bf16.gmra.mrb[0].mxu0 %v224
    %v2779 = vpop.f32.mrb[0].mxu0
    %v2780 = vadd.f32 %v627, %v2779
    %v2781 = vpop.f32.mrb[0].mxu0
    %v2782 = vadd.f32 %v631, %v2781
    %v2783 = vpop.f32.mrb[0].mxu0
    %v2784 = vadd.f32 %v627, %v2783
    %v2785 = vpop.f32.mrb[0].mxu0
    %v2786 = vadd.f32 %v631, %v2785
    %2787 = vdwg.mxu0
    %2788 = vmatprep.subr.bf16.mxu0 %v1939
    %2789 = vmatpush1.bf16.msra.mxu0 %v1938
    %2790 = vmatprep.subr.bf16.mxu0 %v1947
    %2791 = vmatpush1.bf16.msra.mxu0 %v1946
    %2792 = vmatprep.subr.bf16.mxu0 %v1955
    %2793 = vmatpush1.bf16.msra.mxu0 %v1954
    %2794 = vmatprep.subr.bf16.mxu0 %v1963
    %2795 = vmatpush1.bf16.msra.mxu0 %v1962
    %2796 = vmatprep.subr.bf16.mxu0 %v1971
    %2797 = vmatpush1.bf16.msra.mxu0 %v1970
    %2798 = vmatprep.subr.bf16.mxu0 %v1979
    %2799 = vmatpush1.bf16.msra.mxu0 %v1978
    %2800 = vmatprep.subr.bf16.mxu0 %v1987
    %2801 = vmatpush1.bf16.msra.mxu0 %v1986
    %2802 = vmatprep.subr.bf16.mxu0 %v1995
    %2803 = vmatpush1.bf16.msra.mxu0 %v1994
    %2804 = vmatprep.subr.bf16.mxu0 %v2003
    %2805 = vmatpush1.bf16.msra.mxu0 %v2002
    %2806 = vmatprep.subr.bf16.mxu0 %v2011
    %2807 = vmatpush1.bf16.msra.mxu0 %v2010
    %2808 = vmatprep.subr.bf16.mxu0 %v2019
    %2809 = vmatpush1.bf16.msra.mxu0 %v2018
    %2810 = vmatprep.subr.bf16.mxu0 %v2027
    %2811 = vmatpush1.bf16.msra.mxu0 %v2026
    %2812 = vmatprep.subr.bf16.mxu0 %v2035
    %2813 = vmatpush1.bf16.msra.mxu0 %v2034
    %2814 = vmatprep.subr.bf16.mxu0 %v2043
    %2815 = vmatpush1.bf16.msra.mxu0 %v2042
    %2816 = vmatprep.subr.bf16.mxu0 %v2051
    %2817 = vmatpush1.bf16.msra.mxu0 %v2050
    %2818 = vmatprep.subr.bf16.mxu0 %v2059
    %2819 = vmatpush1.bf16.msra.mxu0 %v2058
    %2820 = vmatprep.mubr.bf16.mxu0 %v221
    %2821 = vmatmul.mubr.bf16.gmra.mrb[0].mxu0 %v220
    %v2822 = vpop.f32.mrb[0].mxu0
    %v2823 = vadd.f32 %v2770, %v2822
    %v2824 = vpop.f32.mrb[0].mxu0
    %v2825 = vadd.f32 %v2772, %v2824
    %v2826 = vpop.f32.mrb[0].mxu0
    %v2827 = vadd.f32 %v2774, %v2826
    %v2828 = vpop.f32.mrb[0].mxu0
    %v2829 = vadd.f32 %v2776, %v2828
    %2830 = vmatprep.mubr.bf16.mxu0 %v227
    %2831 = vmatmul.mubr.bf16.gmra.mrb[0].mxu0 %v226
    %v2832 = vpop.f32.mrb[0].mxu0
    %v2833 = vadd.f32 %v2780, %v2832
    %v2834 = vpop.f32.mrb[0].mxu0
    %v2835 = vadd.f32 %v2782, %v2834
    %v2836 = vpop.f32.mrb[0].mxu0
    %v2837 = vadd.f32 %v2784, %v2836
    %v2838 = vpop.f32.mrb[0].mxu0
    %v2839 = vadd.f32 %v2786, %v2838
    %2840 = vdwg.mxu0
    %2841 = vmatprep.subr.bf16.mxu0 %v2067
    %2842 = vmatpush1.bf16.msra.mxu0 %v2066
    %2843 = vmatprep.subr.bf16.mxu0 %v2075
    %2844 = vmatpush1.bf16.msra.mxu0 %v2074
    %2845 = vmatprep.subr.bf16.mxu0 %v2083
    %2846 = vmatpush1.bf16.msra.mxu0 %v2082
    %2847 = vmatprep.subr.bf16.mxu0 %v2091
    %2848 = vmatpush1.bf16.msra.mxu0 %v2090
    %2849 = vmatprep.subr.bf16.mxu0 %v2099
    %2850 = vmatpush1.bf16.msra.mxu0 %v2098
    %2851 = vmatprep.subr.bf16.mxu0 %v2107
    %2852 = vmatpush1.bf16.msra.mxu0 %v2106
    %2853 = vmatprep.subr.bf16.mxu0 %v2115
    %2854 = vmatpush1.bf16.msra.mxu0 %v2114
    %2855 = vmatprep.subr.bf16.mxu0 %v2123
    %2856 = vmatpush1.bf16.msra.mxu0 %v2122
    %2857 = vmatprep.subr.bf16.mxu0 %v2131
    %2858 = vmatpush1.bf16.msra.mxu0 %v2130
    %2859 = vmatprep.subr.bf16.mxu0 %v2139
    %2860 = vmatpush1.bf16.msra.mxu0 %v2138
    %2861 = vmatprep.subr.bf16.mxu0 %v2147
    %2862 = vmatpush1.bf16.msra.mxu0 %v2146
    %2863 = vmatprep.subr.bf16.mxu0 %v2155
    %2864 = vmatpush1.bf16.msra.mxu0 %v2154
    %2865 = vmatprep.subr.bf16.mxu0 %v2163
    %2866 = vmatpush1.bf16.msra.mxu0 %v2162
    %2867 = vmatprep.subr.bf16.mxu0 %v2171
    %2868 = vmatpush1.bf16.msra.mxu0 %v2170
    %2869 = vmatprep.subr.bf16.mxu0 %v2179
    %2870 = vmatpush1.bf16.msra.mxu0 %v2178
    %2871 = vmatprep.subr.bf16.mxu0 %v2187
    %2872 = vmatpush1.bf16.msra.mxu0 %v2186
    %2873 = vmatprep.mubr.bf16.mxu0 %v223
    %2874 = vmatmul.mubr.bf16.gmra.mrb[0].mxu0 %v222
    %v2875 = vpop.f32.mrb[0].mxu0
    %v2876 = vadd.f32 %v2823, %v2875
    %v2877 = vpop.f32.mrb[0].mxu0
    %v2878 = vadd.f32 %v2825, %v2877
    %v2879 = vpop.f32.mrb[0].mxu0
    %v2880 = vadd.f32 %v2827, %v2879
    %v2881 = vpop.f32.mrb[0].mxu0
    %v2882 = vadd.f32 %v2829, %v2881
    %2883 = vmatprep.mubr.bf16.mxu0 %v229
    %2884 = vmatmul.mubr.bf16.gmra.mrb[0].mxu0 %v228
    %v2885 = vpop.f32.mrb[0].mxu0
    %v2886 = vadd.f32 %v2833, %v2885
    %v2887 = vpop.f32.mrb[0].mxu0
    %v2888 = vadd.f32 %v2835, %v2887
    %v2889 = vpop.f32.mrb[0].mxu0
    %v2890 = vadd.f32 %v2837, %v2889
    %v2891 = vpop.f32.mrb[0].mxu0
    %v2892 = vadd.f32 %v2839, %v2891
    %2893 = vdwg.mxu0
    %2894 = vmatprep.subr.bf16.mxu0 %v1813
    %2895 = vmatpush1.bf16.msra.mxu0 %v1812
    %2896 = vmatprep.subr.bf16.mxu0 %v1821
    %2897 = vmatpush1.bf16.msra.mxu0 %v1820
    %2898 = vmatprep.subr.bf16.mxu0 %v1829
    %2899 = vmatpush1.bf16.msra.mxu0 %v1828
    %2900 = vmatprep.subr.bf16.mxu0 %v1837
    %2901 = vmatpush1.bf16.msra.mxu0 %v1836
    %2902 = vmatprep.subr.bf16.mxu0 %v1845
    %2903 = vmatpush1.bf16.msra.mxu0 %v1844
    %2904 = vmatprep.subr.bf16.mxu0 %v1853
    %2905 = vmatpush1.bf16.msra.mxu0 %v1852
    %2906 = vmatprep.subr.bf16.mxu0 %v1861
    %2907 = vmatpush1.bf16.msra.mxu0 %v1860
    %2908 = vmatprep.subr.bf16.mxu0 %v1869
    %2909 = vmatpush1.bf16.msra.mxu0 %v1868
    %2910 = vmatprep.subr.bf16.mxu0 %v1877
    %2911 = vmatpush1.bf16.msra.mxu0 %v1876
    %2912 = vmatprep.subr.bf16.mxu0 %v1885
    %2913 = vmatpush1.bf16.msra.mxu0 %v1884
    %2914 = vmatprep.subr.bf16.mxu0 %v1893
    %2915 = vmatpush1.bf16.msra.mxu0 %v1892
    %2916 = vmatprep.subr.bf16.mxu0 %v1901
    %2917 = vmatpush1.bf16.msra.mxu0 %v1900
    %2918 = vmatprep.subr.bf16.mxu0 %v1909
    %2919 = vmatpush1.bf16.msra.mxu0 %v1908
    %2920 = vmatprep.subr.bf16.mxu0 %v1917
    %2921 = vmatpush1.bf16.msra.mxu0 %v1916
    %2922 = vmatprep.subr.bf16.mxu0 %v1925
    %2923 = vmatpush1.bf16.msra.mxu0 %v1924
    %2924 = vmatprep.subr.bf16.mxu0 %v1933
    %2925 = vmatpush1.bf16.msra.mxu0 %v1932
    %2926 = vmatprep.mubr.bf16.mxu0 %v219
    %2927 = vmatmul.mubr.bf16.gmra.mrb[0].mxu0 %v218
    %v2928 = vpop.f32.mrb[0].mxu0
    %v2929 = vadd.f32 %v635, %v2928
    %v2930 = vpop.f32.mrb[0].mxu0
    %v2931 = vadd.f32 %v639, %v2930
    %v2932 = vpop.f32.mrb[0].mxu0
    %v2933 = vadd.f32 %v635, %v2932
    %v2934 = vpop.f32.mrb[0].mxu0
    %v2935 = vadd.f32 %v639, %v2934
    %2936 = vmatprep.mubr.bf16.mxu0 %v225
    %2937 = vmatmul.mubr.bf16.gmra.mrb[0].mxu0 %v224
    %v2938 = vpop.f32.mrb[0].mxu0
    %v2939 = vadd.f32 %v635, %v2938
    %v2940 = vpop.f32.mrb[0].mxu0
    %v2941 = vadd.f32 %v639, %v2940
    %v2942 = vpop.f32.mrb[0].mxu0
    %v2943 = vadd.f32 %v635, %v2942
    %v2944 = vpop.f32.mrb[0].mxu0
    %v2945 = vadd.f32 %v639, %v2944
    %2946 = vdwg.mxu0
    %2947 = vmatprep.subr.bf16.mxu0 %v1941
    %2948 = vmatpush1.bf16.msra.mxu0 %v1940
    %2949 = vmatprep.subr.bf16.mxu0 %v1949
    %2950 = vmatpush1.bf16.msra.mxu0 %v1948
    %2951 = vmatprep.subr.bf16.mxu0 %v1957
    %2952 = vmatpush1.bf16.msra.mxu0 %v1956
    %2953 = vmatprep.subr.bf16.mxu0 %v1965
    %2954 = vmatpush1.bf16.msra.mxu0 %v1964
    %2955 = vmatprep.subr.bf16.mxu0 %v1973
    %2956 = vmatpush1.bf16.msra.mxu0 %v1972
    %2957 = vmatprep.subr.bf16.mxu0 %v1981
    %2958 = vmatpush1.bf16.msra.mxu0 %v1980
    %2959 = vmatprep.subr.bf16.mxu0 %v1989
    %2960 = vmatpush1.bf16.msra.mxu0 %v1988
    %2961 = vmatprep.subr.bf16.mxu0 %v1997
    %2962 = vmatpush1.bf16.msra.mxu0 %v1996
    %2963 = vmatprep.subr.bf16.mxu0 %v2005
    %2964 = vmatpush1.bf16.msra.mxu0 %v2004
    %2965 = vmatprep.subr.bf16.mxu0 %v2013
    %2966 = vmatpush1.bf16.msra.mxu0 %v2012
    %2967 = vmatprep.subr.bf16.mxu0 %v2021
    %2968 = vmatpush1.bf16.msra.mxu0 %v2020
    %2969 = vmatprep.subr.bf16.mxu0 %v2029
    %2970 = vmatpush1.bf16.msra.mxu0 %v2028
    %2971 = vmatprep.subr.bf16.mxu0 %v2037
    %2972 = vmatpush1.bf16.msra.mxu0 %v2036
    %2973 = vmatprep.subr.bf16.mxu0 %v2045
    %2974 = vmatpush1.bf16.msra.mxu0 %v2044
    %2975 = vmatprep.subr.bf16.mxu0 %v2053
    %2976 = vmatpush1.bf16.msra.mxu0 %v2052
    %2977 = vmatprep.subr.bf16.mxu0 %v2061
    %2978 = vmatpush1.bf16.msra.mxu0 %v2060
    %2979 = vmatprep.mubr.bf16.mxu0 %v221
    %2980 = vmatmul.mubr.bf16.gmra.mrb[0].mxu0 %v220
    %v2981 = vpop.f32.mrb[0].mxu0
    %v2982 = vadd.f32 %v2929, %v2981
    %v2983 = vpop.f32.mrb[0].mxu0
    %v2984 = vadd.f32 %v2931, %v2983
    %v2985 = vpop.f32.mrb[0].mxu0
    %v2986 = vadd.f32 %v2933, %v2985
    %v2987 = vpop.f32.mrb[0].mxu0
    %v2988 = vadd.f32 %v2935, %v2987
    %2989 = vmatprep.mubr.bf16.mxu0 %v227
    %2990 = vmatmul.mubr.bf16.gmra.mrb[0].mxu0 %v226
    %v2991 = vpop.f32.mrb[0].mxu0
    %v2992 = vadd.f32 %v2939, %v2991
    %v2993 = vpop.f32.mrb[0].mxu0
    %v2994 = vadd.f32 %v2941, %v2993
    %v2995 = vpop.f32.mrb[0].mxu0
    %v2996 = vadd.f32 %v2943, %v2995
    %v2997 = vpop.f32.mrb[0].mxu0
    %v2998 = vadd.f32 %v2945, %v2997
    %2999 = vdwg.mxu0
    %3000 = vmatprep.subr.bf16.mxu0 %v2069
    %3001 = vmatpush1.bf16.msra.mxu0 %v2068
    %3002 = vmatprep.subr.bf16.mxu0 %v2077
    %3003 = vmatpush1.bf16.msra.mxu0 %v2076
    %3004 = vmatprep.subr.bf16.mxu0 %v2085
    %3005 = vmatpush1.bf16.msra.mxu0 %v2084
    %3006 = vmatprep.subr.bf16.mxu0 %v2093
    %3007 = vmatpush1.bf16.msra.mxu0 %v2092
    %3008 = vmatprep.subr.bf16.mxu0 %v2101
    %3009 = vmatpush1.bf16.msra.mxu0 %v2100
    %3010 = vmatprep.subr.bf16.mxu0 %v2109
    %3011 = vmatpush1.bf16.msra.mxu0 %v2108
    %3012 = vmatprep.subr.bf16.mxu0 %v2117
    %3013 = vmatpush1.bf16.msra.mxu0 %v2116
    %3014 = vmatprep.subr.bf16.mxu0 %v2125
    %3015 = vmatpush1.bf16.msra.mxu0 %v2124
    %3016 = vmatprep.subr.bf16.mxu0 %v2133
    %3017 = vmatpush1.bf16.msra.mxu0 %v2132
    %3018 = vmatprep.subr.bf16.mxu0 %v2141
    %3019 = vmatpush1.bf16.msra.mxu0 %v2140
    %3020 = vmatprep.subr.bf16.mxu0 %v2149
    %3021 = vmatpush1.bf16.msra.mxu0 %v2148
    %3022 = vmatprep.subr.bf16.mxu0 %v2157
    %3023 = vmatpush1.bf16.msra.mxu0 %v2156
    %3024 = vmatprep.subr.bf16.mxu0 %v2165
    %3025 = vmatpush1.bf16.msra.mxu0 %v2164
    %3026 = vmatprep.subr.bf16.mxu0 %v2173
    %3027 = vmatpush1.bf16.msra.mxu0 %v2172
    %3028 = vmatprep.subr.bf16.mxu0 %v2181
    %3029 = vmatpush1.bf16.msra.mxu0 %v2180
    %3030 = vmatprep.subr.bf16.mxu0 %v2189
    %3031 = vmatpush1.bf16.msra.mxu0 %v2188
    %3032 = vmatprep.mubr.bf16.mxu0 %v223
    %3033 = vmatmul.mubr.bf16.gmra.mrb[0].mxu0 %v222
    %v3034 = vpop.f32.mrb[0].mxu0
    %v3035 = vadd.f32 %v2982, %v3034
    %v3036 = vpop.f32.mrb[0].mxu0
    %v3037 = vadd.f32 %v2984, %v3036
    %v3038 = vpop.f32.mrb[0].mxu0
    %v3039 = vadd.f32 %v2986, %v3038
    %v3040 = vpop.f32.mrb[0].mxu0
    %v3041 = vadd.f32 %v2988, %v3040
    %3042 = vmatprep.mubr.bf16.mxu0 %v229
    %3043 = vmatmul.mubr.bf16.gmra.mrb[0].mxu0 %v228
    %v3044 = vpop.f32.mrb[0].mxu0
    %v3045 = vadd.f32 %v2992, %v3044
    %v3046 = vpop.f32.mrb[0].mxu0
    %v3047 = vadd.f32 %v2994, %v3046
    %v3048 = vpop.f32.mrb[0].mxu0
    %v3049 = vadd.f32 %v2996, %v3048
    %v3050 = vpop.f32.mrb[0].mxu0
    %v3051 = vadd.f32 %v2998, %v3050
    %3052 = vdwg.mxu0
    %3053 = vmatprep.subr.bf16.mxu0 %v1815
    %3054 = vmatpush1.bf16.msra.mxu0 %v1814
    %3055 = vmatprep.subr.bf16.mxu0 %v1823
    %3056 = vmatpush1.bf16.msra.mxu0 %v1822
    %3057 = vmatprep.subr.bf16.mxu0 %v1831
    %3058 = vmatpush1.bf16.msra.mxu0 %v1830
    %3059 = vmatprep.subr.bf16.mxu0 %v1839
    %3060 = vmatpush1.bf16.msra.mxu0 %v1838
    %3061 = vmatprep.subr.bf16.mxu0 %v1847
    %3062 = vmatpush1.bf16.msra.mxu0 %v1846
    %3063 = vmatprep.subr.bf16.mxu0 %v1855
    %3064 = vmatpush1.bf16.msra.mxu0 %v1854
    %3065 = vmatprep.subr.bf16.mxu0 %v1863
    %3066 = vmatpush1.bf16.msra.mxu0 %v1862
    %3067 = vmatprep.subr.bf16.mxu0 %v1871
    %3068 = vmatpush1.bf16.msra.mxu0 %v1870
    %3069 = vmatprep.subr.bf16.mxu0 %v1879
    %3070 = vmatpush1.bf16.msra.mxu0 %v1878
    %3071 = vmatprep.subr.bf16.mxu0 %v1887
    %3072 = vmatpush1.bf16.msra.mxu0 %v1886
    %3073 = vmatprep.subr.bf16.mxu0 %v1895
    %3074 = vmatpush1.bf16.msra.mxu0 %v1894
    %3075 = vmatprep.subr.bf16.mxu0 %v1903
    %3076 = vmatpush1.bf16.msra.mxu0 %v1902
    %3077 = vmatprep.subr.bf16.mxu0 %v1911
    %3078 = vmatpush1.bf16.msra.mxu0 %v1910
    %3079 = vmatprep.subr.bf16.mxu0 %v1919
    %3080 = vmatpush1.bf16.msra.mxu0 %v1918
    %3081 = vmatprep.subr.bf16.mxu0 %v1927
    %3082 = vmatpush1.bf16.msra.mxu0 %v1926
    %3083 = vmatprep.subr.bf16.mxu0 %v1935
    %3084 = vmatpush1.bf16.msra.mxu0 %v1934
    %3085 = vmatprep.mubr.bf16.mxu0 %v219
    %3086 = vmatmul.mubr.bf16.gmra.mrb[0].mxu0 %v218
    %v3087 = vpop.f32.mrb[0].mxu0
    %v3088 = vadd.f32 %v643, %v3087
    %v3089 = vpop.f32.mrb[0].mxu0
    %v3090 = vadd.f32 %v647, %v3089
    %v3091 = vpop.f32.mrb[0].mxu0
    %v3092 = vadd.f32 %v643, %v3091
    %v3093 = vpop.f32.mrb[0].mxu0
    %v3094 = vadd.f32 %v647, %v3093
    %3095 = vmatprep.mubr.bf16.mxu0 %v225
    %3096 = vmatmul.mubr.bf16.gmra.mrb[0].mxu0 %v224
    %v3097 = vpop.f32.mrb[0].mxu0
    %v3098 = vadd.f32 %v643, %v3097
    %v3099 = vpop.f32.mrb[0].mxu0
    %v3100 = vadd.f32 %v647, %v3099
    %v3101 = vpop.f32.mrb[0].mxu0
    %v3102 = vadd.f32 %v643, %v3101
    %v3103 = vpop.f32.mrb[0].mxu0
    %v3104 = vadd.f32 %v647, %v3103
    %3105 = vdwg.mxu0
    %3106 = vmatprep.subr.bf16.mxu0 %v1943
    %3107 = vmatpush1.bf16.msra.mxu0 %v1942
    %3108 = vmatprep.subr.bf16.mxu0 %v1951
    %3109 = vmatpush1.bf16.msra.mxu0 %v1950
    %3110 = vmatprep.subr.bf16.mxu0 %v1959
    %3111 = vmatpush1.bf16.msra.mxu0 %v1958
    %3112 = vmatprep.subr.bf16.mxu0 %v1967
    %3113 = vmatpush1.bf16.msra.mxu0 %v1966
    %3114 = vmatprep.subr.bf16.mxu0 %v1975
    %3115 = vmatpush1.bf16.msra.mxu0 %v1974
    %3116 = vmatprep.subr.bf16.mxu0 %v1983
    %3117 = vmatpush1.bf16.msra.mxu0 %v1982
    %3118 = vmatprep.subr.bf16.mxu0 %v1991
    %3119 = vmatpush1.bf16.msra.mxu0 %v1990
    %3120 = vmatprep.subr.bf16.mxu0 %v1999
    %3121 = vmatpush1.bf16.msra.mxu0 %v1998
    %3122 = vmatprep.subr.bf16.mxu0 %v2007
    %3123 = vmatpush1.bf16.msra.mxu0 %v2006
    %3124 = vmatprep.subr.bf16.mxu0 %v2015
    %3125 = vmatpush1.bf16.msra.mxu0 %v2014
    %3126 = vmatprep.subr.bf16.mxu0 %v2023
    %3127 = vmatpush1.bf16.msra.mxu0 %v2022
    %3128 = vmatprep.subr.bf16.mxu0 %v2031
    %3129 = vmatpush1.bf16.msra.mxu0 %v2030
    %3130 = vmatprep.subr.bf16.mxu0 %v2039
    %3131 = vmatpush1.bf16.msra.mxu0 %v2038
    %3132 = vmatprep.subr.bf16.mxu0 %v2047
    %3133 = vmatpush1.bf16.msra.mxu0 %v2046
    %3134 = vmatprep.subr.bf16.mxu0 %v2055
    %3135 = vmatpush1.bf16.msra.mxu0 %v2054
    %3136 = vmatprep.subr.bf16.mxu0 %v2063
    %3137 = vmatpush1.bf16.msra.mxu0 %v2062
    %3138 = vmatprep.mubr.bf16.mxu0 %v221
    %3139 = vmatmul.mubr.bf16.gmra.mrb[0].mxu0 %v220
    %v3140 = vpop.f32.mrb[0].mxu0
    %v3141 = vadd.f32 %v3088, %v3140
    %v3142 = vpop.f32.mrb[0].mxu0
    %v3143 = vadd.f32 %v3090, %v3142
    %v3144 = vpop.f32.mrb[0].mxu0
    %v3145 = vadd.f32 %v3092, %v3144
    %v3146 = vpop.f32.mrb[0].mxu0
    %v3147 = vadd.f32 %v3094, %v3146
    %3148 = vmatprep.mubr.bf16.mxu0 %v227
    %3149 = vmatmul.mubr.bf16.gmra.mrb[0].mxu0 %v226
    %v3150 = vpop.f32.mrb[0].mxu0
    %v3151 = vadd.f32 %v3098, %v3150
    %v3152 = vpop.f32.mrb[0].mxu0
    %v3153 = vadd.f32 %v3100, %v3152
    %v3154 = vpop.f32.mrb[0].mxu0
    %v3155 = vadd.f32 %v3102, %v3154
    %v3156 = vpop.f32.mrb[0].mxu0
    %v3157 = vadd.f32 %v3104, %v3156
    %3158 = vdwg.mxu0
    %3159 = vmatprep.subr.bf16.mxu0 %v2071
    %3160 = vmatpush1.bf16.msra.mxu0 %v2070
    %3161 = vmatprep.subr.bf16.mxu0 %v2079
    %3162 = vmatpush1.bf16.msra.mxu0 %v2078
    %3163 = vmatprep.subr.bf16.mxu0 %v2087
    %3164 = vmatpush1.bf16.msra.mxu0 %v2086
    %3165 = vmatprep.subr.bf16.mxu0 %v2095
    %3166 = vmatpush1.bf16.msra.mxu0 %v2094
    %3167 = vmatprep.subr.bf16.mxu0 %v2103
    %3168 = vmatpush1.bf16.msra.mxu0 %v2102
    %3169 = vmatprep.subr.bf16.mxu0 %v2111
    %3170 = vmatpush1.bf16.msra.mxu0 %v2110
    %3171 = vmatprep.subr.bf16.mxu0 %v2119
    %3172 = vmatpush1.bf16.msra.mxu0 %v2118
    %3173 = vmatprep.subr.bf16.mxu0 %v2127
    %3174 = vmatpush1.bf16.msra.mxu0 %v2126
    %3175 = vmatprep.subr.bf16.mxu0 %v2135
    %3176 = vmatpush1.bf16.msra.mxu0 %v2134
    %3177 = vmatprep.subr.bf16.mxu0 %v2143
    %3178 = vmatpush1.bf16.msra.mxu0 %v2142
    %3179 = vmatprep.subr.bf16.mxu0 %v2151
    %3180 = vmatpush1.bf16.msra.mxu0 %v2150
    %3181 = vmatprep.subr.bf16.mxu0 %v2159
    %3182 = vmatpush1.bf16.msra.mxu0 %v2158
    %3183 = vmatprep.subr.bf16.mxu0 %v2167
    %3184 = vmatpush1.bf16.msra.mxu0 %v2166
    %3185 = vmatprep.subr.bf16.mxu0 %v2175
    %3186 = vmatpush1.bf16.msra.mxu0 %v2174
    %3187 = vmatprep.subr.bf16.mxu0 %v2183
    %3188 = vmatpush1.bf16.msra.mxu0 %v2182
    %3189 = vmatprep.subr.bf16.mxu0 %v2191
    %3190 = vmatpush1.bf16.msra.mxu0 %v2190
    %3191 = vmatprep.mubr.bf16.mxu0 %v223
    %3192 = vmatmul.mubr.bf16.gmra.mrb[0].mxu0 %v222
    %v3193 = vpop.f32.mrb[0].mxu0
    %v3194 = vadd.f32 %v3141, %v3193
    %v3195 = vpop.f32.mrb[0].mxu0
    %v3196 = vadd.f32 %v3143, %v3195
    %v3197 = vpop.f32.mrb[0].mxu0
    %v3198 = vadd.f32 %v3145, %v3197
    %v3199 = vpop.f32.mrb[0].mxu0
    %v3200 = vadd.f32 %v3147, %v3199
    %3201 = vmatprep.mubr.bf16.mxu0 %v229
    %3202 = vmatmul.mubr.bf16.gmra.mrb[0].mxu0 %v228
    %v3203 = vpop.f32.mrb[0].mxu0
    %v3204 = vadd.f32 %v3151, %v3203
    %v3205 = vpop.f32.mrb[0].mxu0
    %v3206 = vadd.f32 %v3153, %v3205
    %v3207 = vpop.f32.mrb[0].mxu0
    %v3208 = vadd.f32 %v3155, %v3207
    %v3209 = vpop.f32.mrb[0].mxu0
    %v3210 = vadd.f32 %v3157, %v3209
    %3211 = vdwg.mxu0
    %v3212 = vmax.f32 %v2717, 0.0
    %v3213 = vmax.f32 %v2719, 0.0
    %v3214 = vmax.f32 %v2876, 0.0
    %v3215 = vmax.f32 %v2878, 0.0
    %v3216 = vmax.f32 %v3035, 0.0
    %v3217 = vmax.f32 %v3037, 0.0
    %v3218 = vmax.f32 %v3194, 0.0
    %v3219 = vmax.f32 %v3196, 0.0
    %v3220 = vmax.f32 %v2721, 0.0
    %v3221 = vmax.f32 %v2723, 0.0
    %v3222 = vmax.f32 %v2880, 0.0
    %v3223 = vmax.f32 %v2882, 0.0
    %v3224 = vmax.f32 %v3039, 0.0
    %v3225 = vmax.f32 %v3041, 0.0
    %v3226 = vmax.f32 %v3198, 0.0
    %v3227 = vmax.f32 %v3200, 0.0
    %v3228 = vmax.f32 %v2727, 0.0
    %v3229 = vmax.f32 %v2729, 0.0
    %v3230 = vmax.f32 %v2886, 0.0
    %v3231 = vmax.f32 %v2888, 0.0
    %v3232 = vmax.f32 %v3045, 0.0
    %v3233 = vmax.f32 %v3047, 0.0
    %v3234 = vmax.f32 %v3204, 0.0
    %v3235 = vmax.f32 %v3206, 0.0
    %v3236 = vmax.f32 %v2731, 0.0
    %v3237 = vmax.f32 %v2733, 0.0
    %v3238 = vmax.f32 %v2890, 0.0
    %v3239 = vmax.f32 %v2892, 0.0
    %v3240 = vmax.f32 %v3049, 0.0
    %v3241 = vmax.f32 %v3051, 0.0
    %v3242 = vmax.f32 %v3208, 0.0
    %v3243 = vmax.f32 %v3210, 0.0
    %v3244 = vld [vmem:[#allocation5] sm:$0xff]
    %v3245 = vld [vmem:[#allocation5 + $0x8] sm:$0xff]
    %v3246 = vld [vmem:[#allocation5 + $0x10] sm:$0xff]
    %v3247 = vld [vmem:[#allocation5 + $0x18] sm:$0xff]
    %v3248 = vpack.c.bf16 %v3245, %v3244
    %v3249 = vpack.c.bf16 %v3247, %v3246
    %v3250 = vld [vmem:[#allocation10] sm:$0xf]
    %v3251 = vld [vmem:[#allocation10 + $0x4] sm:$0xf]
    %v3252 = vld [vmem:[#allocation10 + $0x8] sm:$0xf]
    %v3253 = vld [vmem:[#allocation10 + $0xc] sm:$0xf]
    %v3254 = vld [vmem:[#allocation10 + $0x10] sm:$0xf]
    %v3255 = vld [vmem:[#allocation10 + $0x14] sm:$0xf]
    %v3256 = vld [vmem:[#allocation10 + $0x18] sm:$0xf]
    %v3257 = vld [vmem:[#allocation10 + $0x1c] sm:$0xf]
    %v3258 = vld [vmem:[#allocation10 + $0x20] sm:$0xf]
    %v3259 = vld [vmem:[#allocation10 + $0x24] sm:$0xf]
    %v3260 = vld [vmem:[#allocation10 + $0x28] sm:$0xf]
    %v3261 = vld [vmem:[#allocation10 + $0x2c] sm:$0xf]
    %v3262 = vld [vmem:[#allocation10 + $0x30] sm:$0xf]
    %v3263 = vld [vmem:[#allocation10 + $0x34] sm:$0xf]
    %v3264 = vld [vmem:[#allocation10 + $0x38] sm:$0xf]
    %v3265 = vld [vmem:[#allocation10 + $0x3c] sm:$0xf]
    %v3266 = vld [vmem:[#allocation11] sm:$0x1]
    %v3268 = vlaneseq
    %v3269 = vshrl.u32 %v3268, 7
    %v3270 = vsub.s32 0, %v3269
    %v3271 = vrot.slane %v3266, %v3270
    %v3289 = vunpack.c.l.b16 %v3250
    %v3290 = vunpack.c.l.b16 %v3251
    %v3291 = vunpack.c.l.b16 %v3252
    %v3292 = vunpack.c.l.b16 %v3253
    %v3293 = vunpack.c.l.b16 %v3254
    %v3294 = vunpack.c.l.b16 %v3255
    %v3295 = vunpack.c.l.b16 %v3256
    %v3296 = vunpack.c.l.b16 %v3257
    %v3297 = vunpack.c.l.b16 %v3258
    %v3298 = vunpack.c.l.b16 %v3259
    %v3299 = vunpack.c.l.b16 %v3260
    %v3300 = vunpack.c.l.b16 %v3261
    %v3301 = vunpack.c.l.b16 %v3262
    %v3302 = vunpack.c.l.b16 %v3263
    %v3303 = vunpack.c.l.b16 %v3264
    %v3304 = vunpack.c.l.b16 %v3265
    %v3305 = vpack.c.b16 %v3290, %v3289
    %v3306 = vpack.c.b16 %v3292, %v3291
    %v3307 = vpack.c.b16 %v3294, %v3293
    %v3308 = vpack.c.b16 %v3296, %v3295
    %v3309 = vpack.c.b16 %v3298, %v3297
    %v3310 = vpack.c.b16 %v3300, %v3299
    %v3311 = vpack.c.b16 %v3302, %v3301
    %v3312 = vpack.c.b16 %v3304, %v3303
    %3321 = vmatprep.subr.bf16.mxu0 0
    %3322 = vmatpush1.bf16.msra.mxu0 %v3305
    %3323 = vmatprep.subr.bf16.mxu0 0
    %3324 = vmatpush1.bf16.msra.mxu0 %v3306
    %3325 = vmatprep.subr.bf16.mxu0 0
    %3326 = vmatpush1.bf16.msra.mxu0 %v3307
    %3327 = vmatprep.subr.bf16.mxu0 0
    %3328 = vmatpush1.bf16.msra.mxu0 %v3308
    %3329 = vmatprep.subr.bf16.mxu0 0
    %3330 = vmatpush1.bf16.msra.mxu0 %v3309
    %3331 = vmatprep.subr.bf16.mxu0 0
    %3332 = vmatpush1.bf16.msra.mxu0 %v3310
    %3333 = vmatprep.subr.bf16.mxu0 0
    %3334 = vmatpush1.bf16.msra.mxu0 %v3311
    %3335 = vmatprep.subr.bf16.mxu0 0
    %3336 = vmatpush1.bf16.msra.mxu0 %v3312
    %3337 = vmatprep.subr.bf16.mxu0 0
    %3338 = vmatpush1.bf16.msra.mxu0 0
    %3339 = vmatprep.subr.bf16.mxu0 0
    %3340 = vmatpush1.bf16.msra.mxu0 0
    %3341 = vmatprep.subr.bf16.mxu0 0
    %3342 = vmatpush1.bf16.msra.mxu0 0
    %3343 = vmatprep.subr.bf16.mxu0 0
    %3344 = vmatpush1.bf16.msra.mxu0 0
    %3345 = vmatprep.subr.bf16.mxu0 0
    %3346 = vmatpush1.bf16.msra.mxu0 0
    %3347 = vmatprep.subr.bf16.mxu0 0
    %3348 = vmatpush1.bf16.msra.mxu0 0
    %3349 = vmatprep.subr.bf16.mxu0 0
    %3350 = vmatpush1.bf16.msra.mxu0 0
    %3351 = vmatprep.subr.bf16.mxu0 0
    %3352 = vmatpush1.bf16.msra.mxu0 0
    %3353 = vmatprep.mubr.bf16.mxu0 0
    %3354 = vmatmul.mubr.bf16.gmra.mrb[0].mxu0 %v3248
    %v3355 = vpop.f32.mrb[0].mxu0
    %v3356 = vadd.f32 %v3271, %v3355
    %v3357 = vpop.f32.mrb[0].mxu0
    %v3358 = vpop.f32.mrb[0].mxu0
    %v3359 = vadd.f32 %v3271, %v3358
    %v3360 = vpop.f32.mrb[0].mxu0
    %3361 = vmatprep.mubr.bf16.mxu0 0
    %3362 = vmatmul.mubr.bf16.gmra.mrb[0].mxu0 %v3249
    %v3363 = vpop.f32.mrb[0].mxu0
    %v3364 = vadd.f32 %v3271, %v3363
    %v3365 = vpop.f32.mrb[0].mxu0
    %v3366 = vpop.f32.mrb[0].mxu0
    %v3367 = vadd.f32 %v3271, %v3366
    %v3368 = vpop.f32.mrb[0].mxu0
    %3369 = vdwg.mxu0
    %v3370 = vmax.f32 %v3356, 0.0
    %v3371 = vmax.f32 %v3359, 0.0
    %v3372 = vmax.f32 %v3364, 0.0
    %v3373 = vmax.f32 %v3367, 0.0
    %v3374 = vpack.c.bf16 %v3371, %v3370
    %v3375 = vpack.c.bf16 %v3373, %v3372
    %v3376 = vld [vmem:[#allocation13] sm:$0xff]
    %v3377 = vld [vmem:[#allocation13 + $0x8] sm:$0xff]
    %v3378 = vld [vmem:[#allocation13 + $0x10] sm:$0xff]
    %v3379 = vld [vmem:[#allocation13 + $0x18] sm:$0xff]
    %v3380 = vld [vmem:[#allocation13 + $0x20] sm:$0xff]
    %v3381 = vld [vmem:[#allocation13 + $0x28] sm:$0xff]
    %v3382 = vld [vmem:[#allocation13 + $0x30] sm:$0xff]
    %v3383 = vld [vmem:[#allocation13 + $0x38] sm:$0xff]
    %v3384 = vld [vmem:[#allocation13 + $0x40] sm:$0xff]
    %v3385 = vld [vmem:[#allocation13 + $0x48] sm:$0xff]
    %v3386 = vld [vmem:[#allocation13 + $0x50] sm:$0xff]
    %v3387 = vld [vmem:[#allocation13 + $0x58] sm:$0xff]
    %v3388 = vld [vmem:[#allocation13 + $0x60] sm:$0xff]
    %v3389 = vld [vmem:[#allocation13 + $0x68] sm:$0xff]
    %v3390 = vld [vmem:[#allocation13 + $0x70] sm:$0xff]
    %v3391 = vld [vmem:[#allocation13 + $0x78] sm:$0xff]
    %v3392 = vld [vmem:[#allocation13 + $0x80] sm:$0xff]
    %v3393 = vld [vmem:[#allocation13 + $0x88] sm:$0xff]
    %v3394 = vld [vmem:[#allocation13 + $0x90] sm:$0xff]
    %v3395 = vld [vmem:[#allocation13 + $0x98] sm:$0xff]
    %v3396 = vld [vmem:[#allocation13 + $0xa0] sm:$0xff]
    %v3397 = vld [vmem:[#allocation13 + $0xa8] sm:$0xff]
    %v3398 = vld [vmem:[#allocation13 + $0xb0] sm:$0xff]
    %v3399 = vld [vmem:[#allocation13 + $0xb8] sm:$0xff]
    %v3400 = vld [vmem:[#allocation13 + $0xc0] sm:$0xff]
    %v3401 = vld [vmem:[#allocation13 + $0xc8] sm:$0xff]
    %v3402 = vld [vmem:[#allocation13 + $0xd0] sm:$0xff]
    %v3403 = vld [vmem:[#allocation13 + $0xd8] sm:$0xff]
    %v3404 = vld [vmem:[#allocation13 + $0xe0] sm:$0xff]
    %v3405 = vld [vmem:[#allocation13 + $0xe8] sm:$0xff]
    %v3406 = vld [vmem:[#allocation13 + $0xf0] sm:$0xff]
    %v3407 = vld [vmem:[#allocation13 + $0xf8] sm:$0xff]
    %v3408 = vld [vmem:[#allocation13 + $0x100] sm:$0xff]
    %v3409 = vld [vmem:[#allocation13 + $0x108] sm:$0xff]
    %v3410 = vld [vmem:[#allocation13 + $0x110] sm:$0xff]
    %v3411 = vld [vmem:[#allocation13 + $0x118] sm:$0xff]
    %v3412 = vld [vmem:[#allocation13 + $0x120] sm:$0xff]
    %v3413 = vld [vmem:[#allocation13 + $0x128] sm:$0xff]
    %v3414 = vld [vmem:[#allocation13 + $0x130] sm:$0xff]
    %v3415 = vld [vmem:[#allocation13 + $0x138] sm:$0xff]
    %v3416 = vld [vmem:[#allocation13 + $0x140] sm:$0xff]
    %v3417 = vld [vmem:[#allocation13 + $0x148] sm:$0xff]
    %v3418 = vld [vmem:[#allocation13 + $0x150] sm:$0xff]
    %v3419 = vld [vmem:[#allocation13 + $0x158] sm:$0xff]
    %v3420 = vld [vmem:[#allocation13 + $0x160] sm:$0xff]
    %v3421 = vld [vmem:[#allocation13 + $0x168] sm:$0xff]
    %v3422 = vld [vmem:[#allocation13 + $0x170] sm:$0xff]
    %v3423 = vld [vmem:[#allocation13 + $0x178] sm:$0xff]
    %v3424 = vld [vmem:[#allocation13 + $0x180] sm:$0xff]
    %v3425 = vld [vmem:[#allocation13 + $0x188] sm:$0xff]
    %v3426 = vld [vmem:[#allocation13 + $0x190] sm:$0xff]
    %v3427 = vld [vmem:[#allocation13 + $0x198] sm:$0xff]
    %v3428 = vld [vmem:[#allocation13 + $0x1a0] sm:$0xff]
    %v3429 = vld [vmem:[#allocation13 + $0x1a8] sm:$0xff]
    %v3430 = vld [vmem:[#allocation13 + $0x1b0] sm:$0xff]
    %v3431 = vld [vmem:[#allocation13 + $0x1b8] sm:$0xff]
    %v3432 = vld [vmem:[#allocation13 + $0x1c0] sm:$0xff]
    %v3433 = vld [vmem:[#allocation13 + $0x1c8] sm:$0xff]
    %v3434 = vld [vmem:[#allocation13 + $0x1d0] sm:$0xff]
    %v3435 = vld [vmem:[#allocation13 + $0x1d8] sm:$0xff]
    %v3436 = vld [vmem:[#allocation13 + $0x1e0] sm:$0xff]
    %v3437 = vld [vmem:[#allocation13 + $0x1e8] sm:$0xff]
    %v3438 = vld [vmem:[#allocation13 + $0x1f0] sm:$0xff]
    %v3439 = vld [vmem:[#allocation13 + $0x1f8] sm:$0xff]
    %v3440 = vld [vmem:[#allocation14] sm:$0xff]
    %v3442 = vlaneseq
    %v3443 = vshrl.u32 %v3442, 7
    %v3444 = vsub.s32 0, %v3443
    %v3445 = vrot.slane %v3440, %v3444
    %v3446 = vlaneseq
    %v3447 = vshrl.u32 %v3446, 7
    %v3448 = vsub.s32 1, %v3447
    %v3449 = vrot.slane %v3440, %v3448
    %v3450 = vlaneseq
    %v3451 = vshrl.u32 %v3450, 7
    %v3452 = vsub.s32 2, %v3451
    %v3453 = vrot.slane %v3440, %v3452
    %v3454 = vlaneseq
    %v3455 = vshrl.u32 %v3454, 7
    %v3456 = vsub.s32 3, %v3455
    %v3457 = vrot.slane %v3440, %v3456
    %v3458 = vlaneseq
    %v3459 = vshrl.u32 %v3458, 7
    %v3460 = vsub.s32 4, %v3459
    %v3461 = vrot.slane %v3440, %v3460
    %v3462 = vlaneseq
    %v3463 = vshrl.u32 %v3462, 7
    %v3464 = vsub.s32 5, %v3463
    %v3465 = vrot.slane %v3440, %v3464
    %v3466 = vlaneseq
    %v3467 = vshrl.u32 %v3466, 7
    %v3468 = vsub.s32 6, %v3467
    %v3469 = vrot.slane %v3440, %v3468
    %v3470 = vlaneseq
    %v3471 = vshrl.u32 %v3470, 7
    %v3472 = vsub.s32 7, %v3471
    %v3473 = vrot.slane %v3440, %v3472
    %v3546 = vunpack.c.l.b16 %v3376
    %v3547 = vunpack.c.h.b16 %v3376
    %v3548 = vunpack.c.l.b16 %v3377
    %v3549 = vunpack.c.h.b16 %v3377
    %v3550 = vunpack.c.l.b16 %v3378
    %v3551 = vunpack.c.h.b16 %v3378
    %v3552 = vunpack.c.l.b16 %v3379
    %v3553 = vunpack.c.h.b16 %v3379
    %v3554 = vunpack.c.l.b16 %v3380
    %v3555 = vunpack.c.h.b16 %v3380
    %v3556 = vunpack.c.l.b16 %v3381
    %v3557 = vunpack.c.h.b16 %v3381
    %v3558 = vunpack.c.l.b16 %v3382
    %v3559 = vunpack.c.h.b16 %v3382
    %v3560 = vunpack.c.l.b16 %v3383
    %v3561 = vunpack.c.h.b16 %v3383
    %v3562 = vunpack.c.l.b16 %v3384
    %v3563 = vunpack.c.h.b16 %v3384
    %v3564 = vunpack.c.l.b16 %v3385
    %v3565 = vunpack.c.h.b16 %v3385
    %v3566 = vunpack.c.l.b16 %v3386
    %v3567 = vunpack.c.h.b16 %v3386
    %v3568 = vunpack.c.l.b16 %v3387
    %v3569 = vunpack.c.h.b16 %v3387
    %v3570 = vunpack.c.l.b16 %v3388
    %v3571 = vunpack.c.h.b16 %v3388
    %v3572 = vunpack.c.l.b16 %v3389
    %v3573 = vunpack.c.h.b16 %v3389
    %v3574 = vunpack.c.l.b16 %v3390
    %v3575 = vunpack.c.h.b16 %v3390
    %v3576 = vunpack.c.l.b16 %v3391
    %v3577 = vunpack.c.h.b16 %v3391
    %v3578 = vunpack.c.l.b16 %v3392
    %v3579 = vunpack.c.h.b16 %v3392
    %v3580 = vunpack.c.l.b16 %v3393
    %v3581 = vunpack.c.h.b16 %v3393
    %v3582 = vunpack.c.l.b16 %v3394
    %v3583 = vunpack.c.h.b16 %v3394
    %v3584 = vunpack.c.l.b16 %v3395
    %v3585 = vunpack.c.h.b16 %v3395
    %v3586 = vunpack.c.l.b16 %v3396
    %v3587 = vunpack.c.h.b16 %v3396
    %v3588 = vunpack.c.l.b16 %v3397
    %v3589 = vunpack.c.h.b16 %v3397
    %v3590 = vunpack.c.l.b16 %v3398
    %v3591 = vunpack.c.h.b16 %v3398
    %v3592 = vunpack.c.l.b16 %v3399
    %v3593 = vunpack.c.h.b16 %v3399
    %v3594 = vunpack.c.l.b16 %v3400
    %v3595 = vunpack.c.h.b16 %v3400
    %v3596 = vunpack.c.l.b16 %v3401
    %v3597 = vunpack.c.h.b16 %v3401
    %v3598 = vunpack.c.l.b16 %v3402
    %v3599 = vunpack.c.h.b16 %v3402
    %v3600 = vunpack.c.l.b16 %v3403
    %v3601 = vunpack.c.h.b16 %v3403
    %v3602 = vunpack.c.l.b16 %v3404
    %v3603 = vunpack.c.h.b16 %v3404
    %v3604 = vunpack.c.l.b16 %v3405
    %v3605 = vunpack.c.h.b16 %v3405
    %v3606 = vunpack.c.l.b16 %v3406
    %v3607 = vunpack.c.h.b16 %v3406
    %v3608 = vunpack.c.l.b16 %v3407
    %v3609 = vunpack.c.h.b16 %v3407
    %v3610 = vunpack.c.l.b16 %v3408
    %v3611 = vunpack.c.h.b16 %v3408
    %v3612 = vunpack.c.l.b16 %v3409
    %v3613 = vunpack.c.h.b16 %v3409
    %v3614 = vunpack.c.l.b16 %v3410
    %v3615 = vunpack.c.h.b16 %v3410
    %v3616 = vunpack.c.l.b16 %v3411
    %v3617 = vunpack.c.h.b16 %v3411
    %v3618 = vunpack.c.l.b16 %v3412
    %v3619 = vunpack.c.h.b16 %v3412
    %v3620 = vunpack.c.l.b16 %v3413
    %v3621 = vunpack.c.h.b16 %v3413
    %v3622 = vunpack.c.l.b16 %v3414
    %v3623 = vunpack.c.h.b16 %v3414
    %v3624 = vunpack.c.l.b16 %v3415
    %v3625 = vunpack.c.h.b16 %v3415
    %v3626 = vunpack.c.l.b16 %v3416
    %v3627 = vunpack.c.h.b16 %v3416
    %v3628 = vunpack.c.l.b16 %v3417
    %v3629 = vunpack.c.h.b16 %v3417
    %v3630 = vunpack.c.l.b16 %v3418
    %v3631 = vunpack.c.h.b16 %v3418
    %v3632 = vunpack.c.l.b16 %v3419
    %v3633 = vunpack.c.h.b16 %v3419
    %v3634 = vunpack.c.l.b16 %v3420
    %v3635 = vunpack.c.h.b16 %v3420
    %v3636 = vunpack.c.l.b16 %v3421
    %v3637 = vunpack.c.h.b16 %v3421
    %v3638 = vunpack.c.l.b16 %v3422
    %v3639 = vunpack.c.h.b16 %v3422
    %v3640 = vunpack.c.l.b16 %v3423
    %v3641 = vunpack.c.h.b16 %v3423
    %v3642 = vunpack.c.l.b16 %v3424
    %v3643 = vunpack.c.h.b16 %v3424
    %v3644 = vunpack.c.l.b16 %v3425
    %v3645 = vunpack.c.h.b16 %v3425
    %v3646 = vunpack.c.l.b16 %v3426
    %v3647 = vunpack.c.h.b16 %v3426
    %v3648 = vunpack.c.l.b16 %v3427
    %v3649 = vunpack.c.h.b16 %v3427
    %v3650 = vunpack.c.l.b16 %v3428
    %v3651 = vunpack.c.h.b16 %v3428
    %v3652 = vunpack.c.l.b16 %v3429
    %v3653 = vunpack.c.h.b16 %v3429
    %v3654 = vunpack.c.l.b16 %v3430
    %v3655 = vunpack.c.h.b16 %v3430
    %v3656 = vunpack.c.l.b16 %v3431
    %v3657 = vunpack.c.h.b16 %v3431
    %v3658 = vunpack.c.l.b16 %v3432
    %v3659 = vunpack.c.h.b16 %v3432
    %v3660 = vunpack.c.l.b16 %v3433
    %v3661 = vunpack.c.h.b16 %v3433
    %v3662 = vunpack.c.l.b16 %v3434
    %v3663 = vunpack.c.h.b16 %v3434
    %v3664 = vunpack.c.l.b16 %v3435
    %v3665 = vunpack.c.h.b16 %v3435
    %v3666 = vunpack.c.l.b16 %v3436
    %v3667 = vunpack.c.h.b16 %v3436
    %v3668 = vunpack.c.l.b16 %v3437
    %v3669 = vunpack.c.h.b16 %v3437
    %v3670 = vunpack.c.l.b16 %v3438
    %v3671 = vunpack.c.h.b16 %v3438
    %v3672 = vunpack.c.l.b16 %v3439
    %v3673 = vunpack.c.h.b16 %v3439
    %v3674 = vpack.c.b16 %v3554, %v3546
    %v3675 = vpack.c.b16 %v3555, %v3547
    %v3676 = vpack.c.b16 %v3556, %v3548
    %v3677 = vpack.c.b16 %v3557, %v3549
    %v3678 = vpack.c.b16 %v3558, %v3550
    %v3679 = vpack.c.b16 %v3559, %v3551
    %v3680 = vpack.c.b16 %v3560, %v3552
    %v3681 = vpack.c.b16 %v3561, %v3553
    %v3682 = vpack.c.b16 %v3570, %v3562
    %v3683 = vpack.c.b16 %v3571, %v3563
    %v3684 = vpack.c.b16 %v3572, %v3564
    %v3685 = vpack.c.b16 %v3573, %v3565
    %v3686 = vpack.c.b16 %v3574, %v3566
    %v3687 = vpack.c.b16 %v3575, %v3567
    %v3688 = vpack.c.b16 %v3576, %v3568
    %v3689 = vpack.c.b16 %v3577, %v3569
    %v3690 = vpack.c.b16 %v3586, %v3578
    %v3691 = vpack.c.b16 %v3587, %v3579
    %v3692 = vpack.c.b16 %v3588, %v3580
    %v3693 = vpack.c.b16 %v3589, %v3581
    %v3694 = vpack.c.b16 %v3590, %v3582
    %v3695 = vpack.c.b16 %v3591, %v3583
    %v3696 = vpack.c.b16 %v3592, %v3584
    %v3697 = vpack.c.b16 %v3593, %v3585
    %v3698 = vpack.c.b16 %v3602, %v3594
    %v3699 = vpack.c.b16 %v3603, %v3595
    %v3700 = vpack.c.b16 %v3604, %v3596
    %v3701 = vpack.c.b16 %v3605, %v3597
    %v3702 = vpack.c.b16 %v3606, %v3598
    %v3703 = vpack.c.b16 %v3607, %v3599
    %v3704 = vpack.c.b16 %v3608, %v3600
    %v3705 = vpack.c.b16 %v3609, %v3601
    %v3706 = vpack.c.b16 %v3618, %v3610
    %v3707 = vpack.c.b16 %v3619, %v3611
    %v3708 = vpack.c.b16 %v3620, %v3612
    %v3709 = vpack.c.b16 %v3621, %v3613
    %v3710 = vpack.c.b16 %v3622, %v3614
    %v3711 = vpack.c.b16 %v3623, %v3615
    %v3712 = vpack.c.b16 %v3624, %v3616
    %v3713 = vpack.c.b16 %v3625, %v3617
    %v3714 = vpack.c.b16 %v3634, %v3626
    %v3715 = vpack.c.b16 %v3635, %v3627
    %v3716 = vpack.c.b16 %v3636, %v3628
    %v3717 = vpack.c.b16 %v3637, %v3629
    %v3718 = vpack.c.b16 %v3638, %v3630
    %v3719 = vpack.c.b16 %v3639, %v3631
    %v3720 = vpack.c.b16 %v3640, %v3632
    %v3721 = vpack.c.b16 %v3641, %v3633
    %v3722 = vpack.c.b16 %v3650, %v3642
    %v3723 = vpack.c.b16 %v3651, %v3643
    %v3724 = vpack.c.b16 %v3652, %v3644
    %v3725 = vpack.c.b16 %v3653, %v3645
    %v3726 = vpack.c.b16 %v3654, %v3646
    %v3727 = vpack.c.b16 %v3655, %v3647
    %v3728 = vpack.c.b16 %v3656, %v3648
    %v3729 = vpack.c.b16 %v3657, %v3649
    %v3730 = vpack.c.b16 %v3666, %v3658
    %v3731 = vpack.c.b16 %v3667, %v3659
    %v3732 = vpack.c.b16 %v3668, %v3660
    %v3733 = vpack.c.b16 %v3669, %v3661
    %v3734 = vpack.c.b16 %v3670, %v3662
    %v3735 = vpack.c.b16 %v3671, %v3663
    %v3736 = vpack.c.b16 %v3672, %v3664
    %v3737 = vpack.c.b16 %v3673, %v3665
    %3802 = vmatprep.subr.bf16.mxu0 %v3675
    %3803 = vmatpush1.bf16.msra.mxu0 %v3674
    %3804 = vmatprep.subr.bf16.mxu0 %v3683
    %3805 = vmatpush1.bf16.msra.mxu0 %v3682
    %3806 = vmatprep.subr.bf16.mxu0 %v3691
    %3807 = vmatpush1.bf16.msra.mxu0 %v3690
    %3808 = vmatprep.subr.bf16.mxu0 %v3699
    %3809 = vmatpush1.bf16.msra.mxu0 %v3698
    %3810 = vmatprep.subr.bf16.mxu0 %v3707
    %3811 = vmatpush1.bf16.msra.mxu0 %v3706
    %3812 = vmatprep.subr.bf16.mxu0 %v3715
    %3813 = vmatpush1.bf16.msra.mxu0 %v3714
    %3814 = vmatprep.subr.bf16.mxu0 %v3723
    %3815 = vmatpush1.bf16.msra.mxu0 %v3722
    %3816 = vmatprep.subr.bf16.mxu0 %v3731
    %3817 = vmatpush1.bf16.msra.mxu0 %v3730
    %3818 = vmatprep.subr.bf16.mxu0 0
    %3819 = vmatpush1.bf16.msra.mxu0 0
    %3820 = vmatprep.subr.bf16.mxu0 0
    %3821 = vmatpush1.bf16.msra.mxu0 0
    %3822 = vmatprep.subr.bf16.mxu0 0
    %3823 = vmatpush1.bf16.msra.mxu0 0
    %3824 = vmatprep.subr.bf16.mxu0 0
    %3825 = vmatpush1.bf16.msra.mxu0 0
    %3826 = vmatprep.subr.bf16.mxu0 0
    %3827 = vmatpush1.bf16.msra.mxu0 0
    %3828 = vmatprep.subr.bf16.mxu0 0
    %3829 = vmatpush1.bf16.msra.mxu0 0
    %3830 = vmatprep.subr.bf16.mxu0 0
    %3831 = vmatpush1.bf16.msra.mxu0 0
    %3832 = vmatprep.subr.bf16.mxu0 0
    %3833 = vmatpush1.bf16.msra.mxu0 0
    %3834 = vmatprep.mubr.bf16.mxu0 0
    %3835 = vmatmul.mubr.bf16.gmra.mrb[0].mxu0 %v3374
    %v3836 = vpop.f32.mrb[0].mxu0
    %v3837 = vadd.f32 %v3445, %v3836
    %v3838 = vpop.f32.mrb[0].mxu0
    %v3839 = vadd.f32 %v3449, %v3838
    %v3840 = vpop.f32.mrb[0].mxu0
    %v3841 = vadd.f32 %v3445, %v3840
    %v3842 = vpop.f32.mrb[0].mxu0
    %v3843 = vadd.f32 %v3449, %v3842
    %3844 = vmatprep.mubr.bf16.mxu0 0
    %3845 = vmatmul.mubr.bf16.gmra.mrb[0].mxu0 %v3375
    %v3846 = vpop.f32.mrb[0].mxu0
    %v3847 = vadd.f32 %v3445, %v3846
    %v3848 = vpop.f32.mrb[0].mxu0
    %v3849 = vadd.f32 %v3449, %v3848
    %v3850 = vpop.f32.mrb[0].mxu0
    %v3851 = vadd.f32 %v3445, %v3850
    %v3852 = vpop.f32.mrb[0].mxu0
    %v3853 = vadd.f32 %v3449, %v3852
    %3854 = vdwg.mxu0
    %3855 = vmatprep.subr.bf16.mxu0 %v3677
    %3856 = vmatpush1.bf16.msra.mxu0 %v3676
    %3857 = vmatprep.subr.bf16.mxu0 %v3685
    %3858 = vmatpush1.bf16.msra.mxu0 %v3684
    %3859 = vmatprep.subr.bf16.mxu0 %v3693
    %3860 = vmatpush1.bf16.msra.mxu0 %v3692
    %3861 = vmatprep.subr.bf16.mxu0 %v3701
    %3862 = vmatpush1.bf16.msra.mxu0 %v3700
    %3863 = vmatprep.subr.bf16.mxu0 %v3709
    %3864 = vmatpush1.bf16.msra.mxu0 %v3708
    %3865 = vmatprep.subr.bf16.mxu0 %v3717
    %3866 = vmatpush1.bf16.msra.mxu0 %v3716
    %3867 = vmatprep.subr.bf16.mxu0 %v3725
    %3868 = vmatpush1.bf16.msra.mxu0 %v3724
    %3869 = vmatprep.subr.bf16.mxu0 %v3733
    %3870 = vmatpush1.bf16.msra.mxu0 %v3732
    %3871 = vmatprep.subr.bf16.mxu0 0
    %3872 = vmatpush1.bf16.msra.mxu0 0
    %3873 = vmatprep.subr.bf16.mxu0 0
    %3874 = vmatpush1.bf16.msra.mxu0 0
    %3875 = vmatprep.subr.bf16.mxu0 0
    %3876 = vmatpush1.bf16.msra.mxu0 0
    %3877 = vmatprep.subr.bf16.mxu0 0
    %3878 = vmatpush1.bf16.msra.mxu0 0
    %3879 = vmatprep.subr.bf16.mxu0 0
    %3880 = vmatpush1.bf16.msra.mxu0 0
    %3881 = vmatprep.subr.bf16.mxu0 0
    %3882 = vmatpush1.bf16.msra.mxu0 0
    %3883 = vmatprep.subr.bf16.mxu0 0
    %3884 = vmatpush1.bf16.msra.mxu0 0
    %3885 = vmatprep.subr.bf16.mxu0 0
    %3886 = vmatpush1.bf16.msra.mxu0 0
    %3887 = vmatprep.mubr.bf16.mxu0 0
    %3888 = vmatmul.mubr.bf16.gmra.mrb[0].mxu0 %v3374
    %v3889 = vpop.f32.mrb[0].mxu0
    %v3890 = vadd.f32 %v3453, %v3889
    %v3891 = vpop.f32.mrb[0].mxu0
    %v3892 = vadd.f32 %v3457, %v3891
    %v3893 = vpop.f32.mrb[0].mxu0
    %v3894 = vadd.f32 %v3453, %v3893
    %v3895 = vpop.f32.mrb[0].mxu0
    %v3896 = vadd.f32 %v3457, %v3895
    %3897 = vmatprep.mubr.bf16.mxu0 0
    %3898 = vmatmul.mubr.bf16.gmra.mrb[0].mxu0 %v3375
    %v3899 = vpop.f32.mrb[0].mxu0
    %v3900 = vadd.f32 %v3453, %v3899
    %v3901 = vpop.f32.mrb[0].mxu0
    %v3902 = vadd.f32 %v3457, %v3901
    %v3903 = vpop.f32.mrb[0].mxu0
    %v3904 = vadd.f32 %v3453, %v3903
    %v3905 = vpop.f32.mrb[0].mxu0
    %v3906 = vadd.f32 %v3457, %v3905
    %3907 = vdwg.mxu0
    %3908 = vmatprep.subr.bf16.mxu0 %v3679
    %3909 = vmatpush1.bf16.msra.mxu0 %v3678
    %3910 = vmatprep.subr.bf16.mxu0 %v3687
    %3911 = vmatpush1.bf16.msra.mxu0 %v3686
    %3912 = vmatprep.subr.bf16.mxu0 %v3695
    %3913 = vmatpush1.bf16.msra.mxu0 %v3694
    %3914 = vmatprep.subr.bf16.mxu0 %v3703
    %3915 = vmatpush1.bf16.msra.mxu0 %v3702
    %3916 = vmatprep.subr.bf16.mxu0 %v3711
    %3917 = vmatpush1.bf16.msra.mxu0 %v3710
    %3918 = vmatprep.subr.bf16.mxu0 %v3719
    %3919 = vmatpush1.bf16.msra.mxu0 %v3718
    %3920 = vmatprep.subr.bf16.mxu0 %v3727
    %3921 = vmatpush1.bf16.msra.mxu0 %v3726
    %3922 = vmatprep.subr.bf16.mxu0 %v3735
    %3923 = vmatpush1.bf16.msra.mxu0 %v3734
    %3924 = vmatprep.subr.bf16.mxu0 0
    %3925 = vmatpush1.bf16.msra.mxu0 0
    %3926 = vmatprep.subr.bf16.mxu0 0
    %3927 = vmatpush1.bf16.msra.mxu0 0
    %3928 = vmatprep.subr.bf16.mxu0 0
    %3929 = vmatpush1.bf16.msra.mxu0 0
    %3930 = vmatprep.subr.bf16.mxu0 0
    %3931 = vmatpush1.bf16.msra.mxu0 0
    %3932 = vmatprep.subr.bf16.mxu0 0
    %3933 = vmatpush1.bf16.msra.mxu0 0
    %3934 = vmatprep.subr.bf16.mxu0 0
    %3935 = vmatpush1.bf16.msra.mxu0 0
    %3936 = vmatprep.subr.bf16.mxu0 0
    %3937 = vmatpush1.bf16.msra.mxu0 0
    %3938 = vmatprep.subr.bf16.mxu0 0
    %3939 = vmatpush1.bf16.msra.mxu0 0
    %3940 = vmatprep.mubr.bf16.mxu0 0
    %3941 = vmatmul.mubr.bf16.gmra.mrb[0].mxu0 %v3374
    %v3942 = vpop.f32.mrb[0].mxu0
    %v3943 = vadd.f32 %v3461, %v3942
    %v3944 = vpop.f32.mrb[0].mxu0
    %v3945 = vadd.f32 %v3465, %v3944
    %v3946 = vpop.f32.mrb[0].mxu0
    %v3947 = vadd.f32 %v3461, %v3946
    %v3948 = vpop.f32.mrb[0].mxu0
    %v3949 = vadd.f32 %v3465, %v3948
    %3950 = vmatprep.mubr.bf16.mxu0 0
    %3951 = vmatmul.mubr.bf16.gmra.mrb[0].mxu0 %v3375
    %v3952 = vpop.f32.mrb[0].mxu0
    %v3953 = vadd.f32 %v3461, %v3952
    %v3954 = vpop.f32.mrb[0].mxu0
    %v3955 = vadd.f32 %v3465, %v3954
    %v3956 = vpop.f32.mrb[0].mxu0
    %v3957 = vadd.f32 %v3461, %v3956
    %v3958 = vpop.f32.mrb[0].mxu0
    %v3959 = vadd.f32 %v3465, %v3958
    %3960 = vdwg.mxu0
    %3961 = vmatprep.subr.bf16.mxu0 %v3681
    %3962 = vmatpush1.bf16.msra.mxu0 %v3680
    %3963 = vmatprep.subr.bf16.mxu0 %v3689
    %3964 = vmatpush1.bf16.msra.mxu0 %v3688
    %3965 = vmatprep.subr.bf16.mxu0 %v3697
    %3966 = vmatpush1.bf16.msra.mxu0 %v3696
    %3967 = vmatprep.subr.bf16.mxu0 %v3705
    %3968 = vmatpush1.bf16.msra.mxu0 %v3704
    %3969 = vmatprep.subr.bf16.mxu0 %v3713
    %3970 = vmatpush1.bf16.msra.mxu0 %v3712
    %3971 = vmatprep.subr.bf16.mxu0 %v3721
    %3972 = vmatpush1.bf16.msra.mxu0 %v3720
    %3973 = vmatprep.subr.bf16.mxu0 %v3729
    %3974 = vmatpush1.bf16.msra.mxu0 %v3728
    %3975 = vmatprep.subr.bf16.mxu0 %v3737
    %3976 = vmatpush1.bf16.msra.mxu0 %v3736
    %3977 = vmatprep.subr.bf16.mxu0 0
    %3978 = vmatpush1.bf16.msra.mxu0 0
    %3979 = vmatprep.subr.bf16.mxu0 0
    %3980 = vmatpush1.bf16.msra.mxu0 0
    %3981 = vmatprep.subr.bf16.mxu0 0
    %3982 = vmatpush1.bf16.msra.mxu0 0
    %3983 = vmatprep.subr.bf16.mxu0 0
    %3984 = vmatpush1.bf16.msra.mxu0 0
    %3985 = vmatprep.subr.bf16.mxu0 0
    %3986 = vmatpush1.bf16.msra.mxu0 0
    %3987 = vmatprep.subr.bf16.mxu0 0
    %3988 = vmatpush1.bf16.msra.mxu0 0
    %3989 = vmatprep.subr.bf16.mxu0 0
    %3990 = vmatpush1.bf16.msra.mxu0 0
    %3991 = vmatprep.subr.bf16.mxu0 0
    %3992 = vmatpush1.bf16.msra.mxu0 0
    %3993 = vmatprep.mubr.bf16.mxu0 0
    %3994 = vmatmul.mubr.bf16.gmra.mrb[0].mxu0 %v3374
    %v3995 = vpop.f32.mrb[0].mxu0
    %v3996 = vadd.f32 %v3469, %v3995
    %v3997 = vpop.f32.mrb[0].mxu0
    %v3998 = vadd.f32 %v3473, %v3997
    %v3999 = vpop.f32.mrb[0].mxu0
    %v4000 = vadd.f32 %v3469, %v3999
    %v4001 = vpop.f32.mrb[0].mxu0
    %v4002 = vadd.f32 %v3473, %v4001
    %4003 = vmatprep.mubr.bf16.mxu0 0
    %4004 = vmatmul.mubr.bf16.gmra.mrb[0].mxu0 %v3375
    %v4005 = vpop.f32.mrb[0].mxu0
    %v4006 = vadd.f32 %v3469, %v4005
    %v4007 = vpop.f32.mrb[0].mxu0
    %v4008 = vadd.f32 %v3473, %v4007
    %v4009 = vpop.f32.mrb[0].mxu0
    %v4010 = vadd.f32 %v3469, %v4009
    %v4011 = vpop.f32.mrb[0].mxu0
    %v4012 = vadd.f32 %v3473, %v4011
    %4013 = vdwg.mxu0
    %v4014 = vld [vmem:[#allocation16] sm:$0xff]
    %v4015 = vld [vmem:[#allocation16 + $0x8] sm:$0xff]
    %v4016 = vld [vmem:[#allocation16 + $0x10] sm:$0xff]
    %v4017 = vld [vmem:[#allocation16 + $0x18] sm:$0xff]
    %v4023 = vunpack.c.l.s4 1966171168
    %v4024 = vunpack.c.0.s8 %v4023
    %v4025 = vlaneseq
    %v4026 = vshrl.u32 %v4025, 7
    %v4027 = vsub.s32 %v4024, %v4026
    %v4028 = vrot.slane %v4014, %v4027
    %v4030 = vunpack.c.l.s4 1966171168
    %v4031 = vunpack.c.0.s8 %v4030
    %v4032 = vlaneseq
    %v4033 = vshrl.u32 %v4032, 7
    %v4034 = vsub.s32 %v4031, %v4033
    %v4035 = vrot.slane %v4015, %v4034
    %v4037 = vunpack.c.l.s4 1966171168
    %v4038 = vunpack.c.0.s8 %v4037
    %v4039 = vlaneseq
    %v4040 = vshrl.u32 %v4039, 7
    %v4041 = vsub.s32 %v4038, %v4040
    %v4042 = vrot.slane %v4016, %v4041
    %v4044 = vunpack.c.l.s4 1966171168
    %v4045 = vunpack.c.0.s8 %v4044
    %v4046 = vlaneseq
    %v4047 = vshrl.u32 %v4046, 7
    %v4048 = vsub.s32 %v4045, %v4047
    %v4049 = vrot.slane %v4017, %v4048
    %v4050 = vcombine.low %v4028, %v4035
    %v4051 = vcombine.high %v4028, %v4035
    %v4052 = vcombine.low %v4042, %v4049
    %v4053 = vcombine.high %v4042, %v4049
    %v4055 = vunpack.c.l.s4 1966171168
    %v4056 = vunpack.c.0.s8 %v4055
    %v4057 = vlaneseq
    %v4058 = vshrl.u32 %v4057, 7
    %v4059 = vsub.s32 %v4056, %v4058
    %v4060 = vrot.slane %v4050, %v4059
    %v4062 = vunpack.c.l.s4 1966171168
    %v4063 = vunpack.c.0.s8 %v4062
    %v4064 = vlaneseq
    %v4065 = vshrl.u32 %v4064, 7
    %v4066 = vsub.s32 %v4063, %v4065
    %v4067 = vrot.slane %v4051, %v4066
    %v4069 = vunpack.c.l.s4 1966171168
    %v4070 = vunpack.c.0.s8 %v4069
    %v4071 = vlaneseq
    %v4072 = vshrl.u32 %v4071, 7
    %v4073 = vsub.s32 %v4070, %v4072
    %v4074 = vrot.slane %v4052, %v4073
    %v4076 = vunpack.c.l.s4 1966171168
    %v4077 = vunpack.c.0.s8 %v4076
    %v4078 = vlaneseq
    %v4079 = vshrl.u32 %v4078, 7
    %v4080 = vsub.s32 %v4077, %v4079
    %v4081 = vrot.slane %v4053, %v4080
    %v4082 = vcombine.low %v4060, %v4074
    %v4083 = vcombine.high %v4060, %v4074
    %v4084 = vcombine.low %v4067, %v4081
    %v4085 = vcombine.high %v4067, %v4081
    %v4086 = vld [vmem:[#allocation17] sm:$0xff]
    %v4087 = vld [vmem:[#allocation17 + $0x8] sm:$0xff]
    %v4088 = vld [vmem:[#allocation17 + $0x10] sm:$0xff]
    %v4089 = vld [vmem:[#allocation17 + $0x18] sm:$0xff]
    %v4095 = vunpack.c.l.s4 1966171168
    %v4096 = vunpack.c.0.s8 %v4095
    %v4097 = vlaneseq
    %v4098 = vshrl.u32 %v4097, 7
    %v4099 = vsub.s32 %v4096, %v4098
    %v4100 = vrot.slane %v4086, %v4099
    %v4102 = vunpack.c.l.s4 1966171168
    %v4103 = vunpack.c.0.s8 %v4102
    %v4104 = vlaneseq
    %v4105 = vshrl.u32 %v4104, 7
    %v4106 = vsub.s32 %v4103, %v4105
    %v4107 = vrot.slane %v4087, %v4106
    %v4109 = vunpack.c.l.s4 1966171168
    %v4110 = vunpack.c.0.s8 %v4109
    %v4111 = vlaneseq
    %v4112 = vshrl.u32 %v4111, 7
    %v4113 = vsub.s32 %v4110, %v4112
    %v4114 = vrot.slane %v4088, %v4113
    %v4116 = vunpack.c.l.s4 1966171168
    %v4117 = vunpack.c.0.s8 %v4116
    %v4118 = vlaneseq
    %v4119 = vshrl.u32 %v4118, 7
    %v4120 = vsub.s32 %v4117, %v4119
    %v4121 = vrot.slane %v4089, %v4120
    %v4122 = vcombine.low %v4100, %v4107
    %v4123 = vcombine.high %v4100, %v4107
    %v4124 = vcombine.low %v4114, %v4121
    %v4125 = vcombine.high %v4114, %v4121
    %v4127 = vunpack.c.l.s4 1966171168
    %v4128 = vunpack.c.0.s8 %v4127
    %v4129 = vlaneseq
    %v4130 = vshrl.u32 %v4129, 7
    %v4131 = vsub.s32 %v4128, %v4130
    %v4132 = vrot.slane %v4122, %v4131
    %v4134 = vunpack.c.l.s4 1966171168
    %v4135 = vunpack.c.0.s8 %v4134
    %v4136 = vlaneseq
    %v4137 = vshrl.u32 %v4136, 7
    %v4138 = vsub.s32 %v4135, %v4137
    %v4139 = vrot.slane %v4123, %v4138
    %v4141 = vunpack.c.l.s4 1966171168
    %v4142 = vunpack.c.0.s8 %v4141
    %v4143 = vlaneseq
    %v4144 = vshrl.u32 %v4143, 7
    %v4145 = vsub.s32 %v4142, %v4144
    %v4146 = vrot.slane %v4124, %v4145
    %v4148 = vunpack.c.l.s4 1966171168
    %v4149 = vunpack.c.0.s8 %v4148
    %v4150 = vlaneseq
    %v4151 = vshrl.u32 %v4150, 7
    %v4152 = vsub.s32 %v4149, %v4151
    %v4153 = vrot.slane %v4125, %v4152
    %v4154 = vcombine.low %v4132, %v4146
    %v4155 = vcombine.high %v4132, %v4146
    %v4156 = vcombine.low %v4139, %v4153
    %v4157 = vcombine.high %v4139, %v4153
    %v4158 = vlaneseq
    %v4159 = vshrl.u32 %v4158, 7
    %v4160 = vsub.s32 0, %v4159
    %v4161 = vrot.slane %v4082, %v4160
    %v4162 = vlaneseq
    %v4163 = vshrl.u32 %v4162, 7
    %v4164 = vsub.s32 1, %v4163
    %v4165 = vrot.slane %v4082, %v4164
    %v4166 = vlaneseq
    %v4167 = vshrl.u32 %v4166, 7
    %v4168 = vsub.s32 2, %v4167
    %v4169 = vrot.slane %v4082, %v4168
    %v4170 = vlaneseq
    %v4171 = vshrl.u32 %v4170, 7
    %v4172 = vsub.s32 3, %v4171
    %v4173 = vrot.slane %v4082, %v4172
    %v4174 = vlaneseq
    %v4175 = vshrl.u32 %v4174, 7
    %v4176 = vsub.s32 4, %v4175
    %v4177 = vrot.slane %v4082, %v4176
    %v4178 = vlaneseq
    %v4179 = vshrl.u32 %v4178, 7
    %v4180 = vsub.s32 5, %v4179
    %v4181 = vrot.slane %v4082, %v4180
    %v4182 = vlaneseq
    %v4183 = vshrl.u32 %v4182, 7
    %v4184 = vsub.s32 6, %v4183
    %v4185 = vrot.slane %v4082, %v4184
    %v4186 = vlaneseq
    %v4187 = vshrl.u32 %v4186, 7
    %v4188 = vsub.s32 7, %v4187
    %v4189 = vrot.slane %v4082, %v4188
    %v4190 = vlaneseq
    %v4191 = vshrl.u32 %v4190, 7
    %v4192 = vsub.s32 0, %v4191
    %v4193 = vrot.slane %v4084, %v4192
    %v4194 = vlaneseq
    %v4195 = vshrl.u32 %v4194, 7
    %v4196 = vsub.s32 1, %v4195
    %v4197 = vrot.slane %v4084, %v4196
    %v4198 = vlaneseq
    %v4199 = vshrl.u32 %v4198, 7
    %v4200 = vsub.s32 2, %v4199
    %v4201 = vrot.slane %v4084, %v4200
    %v4202 = vlaneseq
    %v4203 = vshrl.u32 %v4202, 7
    %v4204 = vsub.s32 3, %v4203
    %v4205 = vrot.slane %v4084, %v4204
    %v4206 = vlaneseq
    %v4207 = vshrl.u32 %v4206, 7
    %v4208 = vsub.s32 4, %v4207
    %v4209 = vrot.slane %v4084, %v4208
    %v4210 = vlaneseq
    %v4211 = vshrl.u32 %v4210, 7
    %v4212 = vsub.s32 5, %v4211
    %v4213 = vrot.slane %v4084, %v4212
    %v4214 = vlaneseq
    %v4215 = vshrl.u32 %v4214, 7
    %v4216 = vsub.s32 6, %v4215
    %v4217 = vrot.slane %v4084, %v4216
    %v4218 = vlaneseq
    %v4219 = vshrl.u32 %v4218, 7
    %v4220 = vsub.s32 7, %v4219
    %v4221 = vrot.slane %v4084, %v4220
    %v4222 = vlaneseq
    %v4223 = vshrl.u32 %v4222, 7
    %v4224 = vsub.s32 0, %v4223
    %v4225 = vrot.slane %v4083, %v4224
    %v4226 = vlaneseq
    %v4227 = vshrl.u32 %v4226, 7
    %v4228 = vsub.s32 1, %v4227
    %v4229 = vrot.slane %v4083, %v4228
    %v4230 = vlaneseq
    %v4231 = vshrl.u32 %v4230, 7
    %v4232 = vsub.s32 2, %v4231
    %v4233 = vrot.slane %v4083, %v4232
    %v4234 = vlaneseq
    %v4235 = vshrl.u32 %v4234, 7
    %v4236 = vsub.s32 3, %v4235
    %v4237 = vrot.slane %v4083, %v4236
    %v4238 = vlaneseq
    %v4239 = vshrl.u32 %v4238, 7
    %v4240 = vsub.s32 4, %v4239
    %v4241 = vrot.slane %v4083, %v4240
    %v4242 = vlaneseq
    %v4243 = vshrl.u32 %v4242, 7
    %v4244 = vsub.s32 5, %v4243
    %v4245 = vrot.slane %v4083, %v4244
    %v4246 = vlaneseq
    %v4247 = vshrl.u32 %v4246, 7
    %v4248 = vsub.s32 6, %v4247
    %v4249 = vrot.slane %v4083, %v4248
    %v4250 = vlaneseq
    %v4251 = vshrl.u32 %v4250, 7
    %v4252 = vsub.s32 7, %v4251
    %v4253 = vrot.slane %v4083, %v4252
    %v4254 = vlaneseq
    %v4255 = vshrl.u32 %v4254, 7
    %v4256 = vsub.s32 0, %v4255
    %v4257 = vrot.slane %v4085, %v4256
    %v4258 = vlaneseq
    %v4259 = vshrl.u32 %v4258, 7
    %v4260 = vsub.s32 1, %v4259
    %v4261 = vrot.slane %v4085, %v4260
    %v4262 = vlaneseq
    %v4263 = vshrl.u32 %v4262, 7
    %v4264 = vsub.s32 2, %v4263
    %v4265 = vrot.slane %v4085, %v4264
    %v4266 = vlaneseq
    %v4267 = vshrl.u32 %v4266, 7
    %v4268 = vsub.s32 3, %v4267
    %v4269 = vrot.slane %v4085, %v4268
    %v4270 = vlaneseq
    %v4271 = vshrl.u32 %v4270, 7
    %v4272 = vsub.s32 4, %v4271
    %v4273 = vrot.slane %v4085, %v4272
    %v4274 = vlaneseq
    %v4275 = vshrl.u32 %v4274, 7
    %v4276 = vsub.s32 5, %v4275
    %v4277 = vrot.slane %v4085, %v4276
    %v4278 = vlaneseq
    %v4279 = vshrl.u32 %v4278, 7
    %v4280 = vsub.s32 6, %v4279
    %v4281 = vrot.slane %v4085, %v4280
    %v4282 = vlaneseq
    %v4283 = vshrl.u32 %v4282, 7
    %v4284 = vsub.s32 7, %v4283
    %v4285 = vrot.slane %v4085, %v4284
    %v4318 = vmul.f32 %v3212, %v4161
    %v4319 = vmul.f32 %v3213, %v4165
    %v4320 = vmul.f32 %v3214, %v4169
    %v4321 = vmul.f32 %v3215, %v4173
    %v4322 = vmul.f32 %v3216, %v4177
    %v4323 = vmul.f32 %v3217, %v4181
    %v4324 = vmul.f32 %v3218, %v4185
    %v4325 = vmul.f32 %v3219, %v4189
    %v4326 = vmul.f32 %v3220, %v4193
    %v4327 = vmul.f32 %v3221, %v4197
    %v4328 = vmul.f32 %v3222, %v4201
    %v4329 = vmul.f32 %v3223, %v4205
    %v4330 = vmul.f32 %v3224, %v4209
    %v4331 = vmul.f32 %v3225, %v4213
    %v4332 = vmul.f32 %v3226, %v4217
    %v4333 = vmul.f32 %v3227, %v4221
    %v4334 = vmul.f32 %v3228, %v4225
    %v4335 = vmul.f32 %v3229, %v4229
    %v4336 = vmul.f32 %v3230, %v4233
    %v4337 = vmul.f32 %v3231, %v4237
    %v4338 = vmul.f32 %v3232, %v4241
    %v4339 = vmul.f32 %v3233, %v4245
    %v4340 = vmul.f32 %v3234, %v4249
    %v4341 = vmul.f32 %v3235, %v4253
    %v4342 = vmul.f32 %v3236, %v4257
    %v4343 = vmul.f32 %v3237, %v4261
    %v4344 = vmul.f32 %v3238, %v4265
    %v4345 = vmul.f32 %v3239, %v4269
    %v4346 = vmul.f32 %v3240, %v4273
    %v4347 = vmul.f32 %v3241, %v4277
    %v4348 = vmul.f32 %v3242, %v4281
    %v4349 = vmul.f32 %v3243, %v4285
    %v4350 = vlaneseq
    %v4351 = vshrl.u32 %v4350, 7
    %v4352 = vsub.s32 0, %v4351
    %v4353 = vrot.slane %v4154, %v4352
    %v4354 = vlaneseq
    %v4355 = vshrl.u32 %v4354, 7
    %v4356 = vsub.s32 1, %v4355
    %v4357 = vrot.slane %v4154, %v4356
    %v4358 = vlaneseq
    %v4359 = vshrl.u32 %v4358, 7
    %v4360 = vsub.s32 2, %v4359
    %v4361 = vrot.slane %v4154, %v4360
    %v4362 = vlaneseq
    %v4363 = vshrl.u32 %v4362, 7
    %v4364 = vsub.s32 3, %v4363
    %v4365 = vrot.slane %v4154, %v4364
    %v4366 = vlaneseq
    %v4367 = vshrl.u32 %v4366, 7
    %v4368 = vsub.s32 4, %v4367
    %v4369 = vrot.slane %v4154, %v4368
    %v4370 = vlaneseq
    %v4371 = vshrl.u32 %v4370, 7
    %v4372 = vsub.s32 5, %v4371
    %v4373 = vrot.slane %v4154, %v4372
    %v4374 = vlaneseq
    %v4375 = vshrl.u32 %v4374, 7
    %v4376 = vsub.s32 6, %v4375
    %v4377 = vrot.slane %v4154, %v4376
    %v4378 = vlaneseq
    %v4379 = vshrl.u32 %v4378, 7
    %v4380 = vsub.s32 7, %v4379
    %v4381 = vrot.slane %v4154, %v4380
    %v4382 = vlaneseq
    %v4383 = vshrl.u32 %v4382, 7
    %v4384 = vsub.s32 0, %v4383
    %v4385 = vrot.slane %v4156, %v4384
    %v4386 = vlaneseq
    %v4387 = vshrl.u32 %v4386, 7
    %v4388 = vsub.s32 1, %v4387
    %v4389 = vrot.slane %v4156, %v4388
    %v4390 = vlaneseq
    %v4391 = vshrl.u32 %v4390, 7
    %v4392 = vsub.s32 2, %v4391
    %v4393 = vrot.slane %v4156, %v4392
    %v4394 = vlaneseq
    %v4395 = vshrl.u32 %v4394, 7
    %v4396 = vsub.s32 3, %v4395
    %v4397 = vrot.slane %v4156, %v4396
    %v4398 = vlaneseq
    %v4399 = vshrl.u32 %v4398, 7
    %v4400 = vsub.s32 4, %v4399
    %v4401 = vrot.slane %v4156, %v4400
    %v4402 = vlaneseq
    %v4403 = vshrl.u32 %v4402, 7
    %v4404 = vsub.s32 5, %v4403
    %v4405 = vrot.slane %v4156, %v4404
    %v4406 = vlaneseq
    %v4407 = vshrl.u32 %v4406, 7
    %v4408 = vsub.s32 6, %v4407
    %v4409 = vrot.slane %v4156, %v4408
    %v4410 = vlaneseq
    %v4411 = vshrl.u32 %v4410, 7
    %v4412 = vsub.s32 7, %v4411
    %v4413 = vrot.slane %v4156, %v4412
    %v4414 = vlaneseq
    %v4415 = vshrl.u32 %v4414, 7
    %v4416 = vsub.s32 0, %v4415
    %v4417 = vrot.slane %v4155, %v4416
    %v4418 = vlaneseq
    %v4419 = vshrl.u32 %v4418, 7
    %v4420 = vsub.s32 1, %v4419
    %v4421 = vrot.slane %v4155, %v4420
    %v4422 = vlaneseq
    %v4423 = vshrl.u32 %v4422, 7
    %v4424 = vsub.s32 2, %v4423
    %v4425 = vrot.slane %v4155, %v4424
    %v4426 = vlaneseq
    %v4427 = vshrl.u32 %v4426, 7
    %v4428 = vsub.s32 3, %v4427
    %v4429 = vrot.slane %v4155, %v4428
    %v4430 = vlaneseq
    %v4431 = vshrl.u32 %v4430, 7
    %v4432 = vsub.s32 4, %v4431
    %v4433 = vrot.slane %v4155, %v4432
    %v4434 = vlaneseq
    %v4435 = vshrl.u32 %v4434, 7
    %v4436 = vsub.s32 5, %v4435
    %v4437 = vrot.slane %v4155, %v4436
    %v4438 = vlaneseq
    %v4439 = vshrl.u32 %v4438, 7
    %v4440 = vsub.s32 6, %v4439
    %v4441 = vrot.slane %v4155, %v4440
    %v4442 = vlaneseq
    %v4443 = vshrl.u32 %v4442, 7
    %v4444 = vsub.s32 7, %v4443
    %v4445 = vrot.slane %v4155, %v4444
    %v4446 = vlaneseq
    %v4447 = vshrl.u32 %v4446, 7
    %v4448 = vsub.s32 0, %v4447
    %v4449 = vrot.slane %v4157, %v4448
    %v4450 = vlaneseq
    %v4451 = vshrl.u32 %v4450, 7
    %v4452 = vsub.s32 1, %v4451
    %v4453 = vrot.slane %v4157, %v4452
    %v4454 = vlaneseq
    %v4455 = vshrl.u32 %v4454, 7
    %v4456 = vsub.s32 2, %v4455
    %v4457 = vrot.slane %v4157, %v4456
    %v4458 = vlaneseq
    %v4459 = vshrl.u32 %v4458, 7
    %v4460 = vsub.s32 3, %v4459
    %v4461 = vrot.slane %v4157, %v4460
    %v4462 = vlaneseq
    %v4463 = vshrl.u32 %v4462, 7
    %v4464 = vsub.s32 4, %v4463
    %v4465 = vrot.slane %v4157, %v4464
    %v4466 = vlaneseq
    %v4467 = vshrl.u32 %v4466, 7
    %v4468 = vsub.s32 5, %v4467
    %v4469 = vrot.slane %v4157, %v4468
    %v4470 = vlaneseq
    %v4471 = vshrl.u32 %v4470, 7
    %v4472 = vsub.s32 6, %v4471
    %v4473 = vrot.slane %v4157, %v4472
    %v4474 = vlaneseq
    %v4475 = vshrl.u32 %v4474, 7
    %v4476 = vsub.s32 7, %v4475
    %v4477 = vrot.slane %v4157, %v4476
    %v4510 = vmul.f32 %v3837, %v4353
    %v4511 = vmul.f32 %v3839, %v4357
    %v4512 = vmul.f32 %v3890, %v4361
    %v4513 = vmul.f32 %v3892, %v4365
    %v4514 = vmul.f32 %v3943, %v4369
    %v4515 = vmul.f32 %v3945, %v4373
    %v4516 = vmul.f32 %v3996, %v4377
    %v4517 = vmul.f32 %v3998, %v4381
    %v4518 = vmul.f32 %v3841, %v4385
    %v4519 = vmul.f32 %v3843, %v4389
    %v4520 = vmul.f32 %v3894, %v4393
    %v4521 = vmul.f32 %v3896, %v4397
    %v4522 = vmul.f32 %v3947, %v4401
    %v4523 = vmul.f32 %v3949, %v4405
    %v4524 = vmul.f32 %v4000, %v4409
    %v4525 = vmul.f32 %v4002, %v4413
    %v4526 = vmul.f32 %v3847, %v4417
    %v4527 = vmul.f32 %v3849, %v4421
    %v4528 = vmul.f32 %v3900, %v4425
    %v4529 = vmul.f32 %v3902, %v4429
    %v4530 = vmul.f32 %v3953, %v4433
    %v4531 = vmul.f32 %v3955, %v4437
    %v4532 = vmul.f32 %v4006, %v4441
    %v4533 = vmul.f32 %v4008, %v4445
    %v4534 = vmul.f32 %v3851, %v4449
    %v4535 = vmul.f32 %v3853, %v4453
    %v4536 = vmul.f32 %v3904, %v4457
    %v4537 = vmul.f32 %v3906, %v4461
    %v4538 = vmul.f32 %v3957, %v4465
    %v4539 = vmul.f32 %v3959, %v4469
    %v4540 = vmul.f32 %v4010, %v4473
    %v4541 = vmul.f32 %v4012, %v4477
    %v4542 = vadd.f32 %v4318, %v4510
    %v4543 = vadd.f32 %v4319, %v4511
    %v4544 = vadd.f32 %v4320, %v4512
    %v4545 = vadd.f32 %v4321, %v4513
    %v4546 = vadd.f32 %v4322, %v4514
    %v4547 = vadd.f32 %v4323, %v4515
    %v4548 = vadd.f32 %v4324, %v4516
    %v4549 = vadd.f32 %v4325, %v4517
    %v4550 = vadd.f32 %v4326, %v4518
    %v4551 = vadd.f32 %v4327, %v4519
    %v4552 = vadd.f32 %v4328, %v4520
    %v4553 = vadd.f32 %v4329, %v4521
    %v4554 = vadd.f32 %v4330, %v4522
    %v4555 = vadd.f32 %v4331, %v4523
    %v4556 = vadd.f32 %v4332, %v4524
    %v4557 = vadd.f32 %v4333, %v4525
    %v4558 = vadd.f32 %v4334, %v4526
    %v4559 = vadd.f32 %v4335, %v4527
    %v4560 = vadd.f32 %v4336, %v4528
    %v4561 = vadd.f32 %v4337, %v4529
    %v4562 = vadd.f32 %v4338, %v4530
    %v4563 = vadd.f32 %v4339, %v4531
    %v4564 = vadd.f32 %v4340, %v4532
    %v4565 = vadd.f32 %v4341, %v4533
    %v4566 = vadd.f32 %v4342, %v4534
    %v4567 = vadd.f32 %v4343, %v4535
    %v4568 = vadd.f32 %v4344, %v4536
    %v4569 = vadd.f32 %v4345, %v4537
    %v4570 = vadd.f32 %v4346, %v4538
    %v4571 = vadd.f32 %v4347, %v4539
    %v4572 = vadd.f32 %v4348, %v4540
    %v4573 = vadd.f32 %v4349, %v4541
    %v4574 = vpack.c.bf16 %v4550, %v4542
    %v4575 = vpack.c.bf16 %v4551, %v4543
    %v4576 = vpack.c.bf16 %v4552, %v4544
    %v4577 = vpack.c.bf16 %v4553, %v4545
    %v4578 = vpack.c.bf16 %v4554, %v4546
    %v4579 = vpack.c.bf16 %v4555, %v4547
    %v4580 = vpack.c.bf16 %v4556, %v4548
    %v4581 = vpack.c.bf16 %v4557, %v4549
    %v4582 = vpack.c.bf16 %v4566, %v4558
    %v4583 = vpack.c.bf16 %v4567, %v4559
    %v4584 = vpack.c.bf16 %v4568, %v4560
    %v4585 = vpack.c.bf16 %v4569, %v4561
    %v4586 = vpack.c.bf16 %v4570, %v4562
    %v4587 = vpack.c.bf16 %v4571, %v4563
    %v4588 = vpack.c.bf16 %v4572, %v4564
    %v4589 = vpack.c.bf16 %v4573, %v4565
    %v4590 = vld [vmem:[#allocation19] sm:$0xf]
    %v4591 = vld [vmem:[#allocation19 + $0x4] sm:$0xf]
    %v4592 = vld [vmem:[#allocation19 + $0x8] sm:$0xf]
    %v4593 = vld [vmem:[#allocation19 + $0xc] sm:$0xf]
    %v4594 = vld [vmem:[#allocation19 + $0x10] sm:$0xf]
    %v4595 = vld [vmem:[#allocation19 + $0x14] sm:$0xf]
    %v4596 = vld [vmem:[#allocation19 + $0x18] sm:$0xf]
    %v4597 = vld [vmem:[#allocation19 + $0x1c] sm:$0xf]
    %v4598 = vld [vmem:[#allocation19 + $0x20] sm:$0xf]
    %v4599 = vld [vmem:[#allocation19 + $0x24] sm:$0xf]
    %v4600 = vld [vmem:[#allocation19 + $0x28] sm:$0xf]
    %v4601 = vld [vmem:[#allocation19 + $0x2c] sm:$0xf]
    %v4602 = vld [vmem:[#allocation19 + $0x30] sm:$0xf]
    %v4603 = vld [vmem:[#allocation19 + $0x34] sm:$0xf]
    %v4604 = vld [vmem:[#allocation19 + $0x38] sm:$0xf]
    %v4605 = vld [vmem:[#allocation19 + $0x3c] sm:$0xf]
    %v4606 = vld [vmem:[#allocation19 + $0x40] sm:$0xf]
    %v4607 = vld [vmem:[#allocation19 + $0x44] sm:$0xf]
    %v4608 = vld [vmem:[#allocation19 + $0x48] sm:$0xf]
    %v4609 = vld [vmem:[#allocation19 + $0x4c] sm:$0xf]
    %v4610 = vld [vmem:[#allocation19 + $0x50] sm:$0xf]
    %v4611 = vld [vmem:[#allocation19 + $0x54] sm:$0xf]
    %v4612 = vld [vmem:[#allocation19 + $0x58] sm:$0xf]
    %v4613 = vld [vmem:[#allocation19 + $0x5c] sm:$0xf]
    %v4614 = vld [vmem:[#allocation19 + $0x60] sm:$0xf]
    %v4615 = vld [vmem:[#allocation19 + $0x64] sm:$0xf]
    %v4616 = vld [vmem:[#allocation19 + $0x68] sm:$0xf]
    %v4617 = vld [vmem:[#allocation19 + $0x6c] sm:$0xf]
    %v4618 = vld [vmem:[#allocation19 + $0x70] sm:$0xf]
    %v4619 = vld [vmem:[#allocation19 + $0x74] sm:$0xf]
    %v4620 = vld [vmem:[#allocation19 + $0x78] sm:$0xf]
    %v4621 = vld [vmem:[#allocation19 + $0x7c] sm:$0xf]
    %v4622 = vld [vmem:[#allocation19 + $0x80] sm:$0xf]
    %v4623 = vld [vmem:[#allocation19 + $0x84] sm:$0xf]
    %v4624 = vld [vmem:[#allocation19 + $0x88] sm:$0xf]
    %v4625 = vld [vmem:[#allocation19 + $0x8c] sm:$0xf]
    %v4626 = vld [vmem:[#allocation19 + $0x90] sm:$0xf]
    %v4627 = vld [vmem:[#allocation19 + $0x94] sm:$0xf]
    %v4628 = vld [vmem:[#allocation19 + $0x98] sm:$0xf]
    %v4629 = vld [vmem:[#allocation19 + $0x9c] sm:$0xf]
    %v4630 = vld [vmem:[#allocation19 + $0xa0] sm:$0xf]
    %v4631 = vld [vmem:[#allocation19 + $0xa4] sm:$0xf]
    %v4632 = vld [vmem:[#allocation19 + $0xa8] sm:$0xf]
    %v4633 = vld [vmem:[#allocation19 + $0xac] sm:$0xf]
    %v4634 = vld [vmem:[#allocation19 + $0xb0] sm:$0xf]
    %v4635 = vld [vmem:[#allocation19 + $0xb4] sm:$0xf]
    %v4636 = vld [vmem:[#allocation19 + $0xb8] sm:$0xf]
    %v4637 = vld [vmem:[#allocation19 + $0xbc] sm:$0xf]
    %v4638 = vld [vmem:[#allocation19 + $0xc0] sm:$0xf]
    %v4639 = vld [vmem:[#allocation19 + $0xc4] sm:$0xf]
    %v4640 = vld [vmem:[#allocation19 + $0xc8] sm:$0xf]
    %v4641 = vld [vmem:[#allocation19 + $0xcc] sm:$0xf]
    %v4642 = vld [vmem:[#allocation19 + $0xd0] sm:$0xf]
    %v4643 = vld [vmem:[#allocation19 + $0xd4] sm:$0xf]
    %v4644 = vld [vmem:[#allocation19 + $0xd8] sm:$0xf]
    %v4645 = vld [vmem:[#allocation19 + $0xdc] sm:$0xf]
    %v4646 = vld [vmem:[#allocation19 + $0xe0] sm:$0xf]
    %v4647 = vld [vmem:[#allocation19 + $0xe4] sm:$0xf]
    %v4648 = vld [vmem:[#allocation19 + $0xe8] sm:$0xf]
    %v4649 = vld [vmem:[#allocation19 + $0xec] sm:$0xf]
    %v4650 = vld [vmem:[#allocation19 + $0xf0] sm:$0xf]
    %v4651 = vld [vmem:[#allocation19 + $0xf4] sm:$0xf]
    %v4652 = vld [vmem:[#allocation19 + $0xf8] sm:$0xf]
    %v4653 = vld [vmem:[#allocation19 + $0xfc] sm:$0xf]
    %v4654 = vld [vmem:[#allocation19 + $0x100] sm:$0xf]
    %v4655 = vld [vmem:[#allocation19 + $0x104] sm:$0xf]
    %v4656 = vld [vmem:[#allocation19 + $0x108] sm:$0xf]
    %v4657 = vld [vmem:[#allocation19 + $0x10c] sm:$0xf]
    %v4658 = vld [vmem:[#allocation19 + $0x110] sm:$0xf]
    %v4659 = vld [vmem:[#allocation19 + $0x114] sm:$0xf]
    %v4660 = vld [vmem:[#allocation19 + $0x118] sm:$0xf]
    %v4661 = vld [vmem:[#allocation19 + $0x11c] sm:$0xf]
    %v4662 = vld [vmem:[#allocation19 + $0x120] sm:$0xf]
    %v4663 = vld [vmem:[#allocation19 + $0x124] sm:$0xf]
    %v4664 = vld [vmem:[#allocation19 + $0x128] sm:$0xf]
    %v4665 = vld [vmem:[#allocation19 + $0x12c] sm:$0xf]
    %v4666 = vld [vmem:[#allocation19 + $0x130] sm:$0xf]
    %v4667 = vld [vmem:[#allocation19 + $0x134] sm:$0xf]
    %v4668 = vld [vmem:[#allocation19 + $0x138] sm:$0xf]
    %v4669 = vld [vmem:[#allocation19 + $0x13c] sm:$0xf]
    %v4670 = vld [vmem:[#allocation19 + $0x140] sm:$0xf]
    %v4671 = vld [vmem:[#allocation19 + $0x144] sm:$0xf]
    %v4672 = vld [vmem:[#allocation19 + $0x148] sm:$0xf]
    %v4673 = vld [vmem:[#allocation19 + $0x14c] sm:$0xf]
    %v4674 = vld [vmem:[#allocation19 + $0x150] sm:$0xf]
    %v4675 = vld [vmem:[#allocation19 + $0x154] sm:$0xf]
    %v4676 = vld [vmem:[#allocation19 + $0x158] sm:$0xf]
    %v4677 = vld [vmem:[#allocation19 + $0x15c] sm:$0xf]
    %v4678 = vld [vmem:[#allocation19 + $0x160] sm:$0xf]
    %v4679 = vld [vmem:[#allocation19 + $0x164] sm:$0xf]
    %v4680 = vld [vmem:[#allocation19 + $0x168] sm:$0xf]
    %v4681 = vld [vmem:[#allocation19 + $0x16c] sm:$0xf]
    %v4682 = vld [vmem:[#allocation19 + $0x170] sm:$0xf]
    %v4683 = vld [vmem:[#allocation19 + $0x174] sm:$0xf]
    %v4684 = vld [vmem:[#allocation19 + $0x178] sm:$0xf]
    %v4685 = vld [vmem:[#allocation19 + $0x17c] sm:$0xf]
    %v4686 = vld [vmem:[#allocation19 + $0x180] sm:$0xf]
    %v4687 = vld [vmem:[#allocation19 + $0x184] sm:$0xf]
    %v4688 = vld [vmem:[#allocation19 + $0x188] sm:$0xf]
    %v4689 = vld [vmem:[#allocation19 + $0x18c] sm:$0xf]
    %v4690 = vld [vmem:[#allocation19 + $0x190] sm:$0xf]
    %v4691 = vld [vmem:[#allocation19 + $0x194] sm:$0xf]
    %v4692 = vld [vmem:[#allocation19 + $0x198] sm:$0xf]
    %v4693 = vld [vmem:[#allocation19 + $0x19c] sm:$0xf]
    %v4694 = vld [vmem:[#allocation19 + $0x1a0] sm:$0xf]
    %v4695 = vld [vmem:[#allocation19 + $0x1a4] sm:$0xf]
    %v4696 = vld [vmem:[#allocation19 + $0x1a8] sm:$0xf]
    %v4697 = vld [vmem:[#allocation19 + $0x1ac] sm:$0xf]
    %v4698 = vld [vmem:[#allocation19 + $0x1b0] sm:$0xf]
    %v4699 = vld [vmem:[#allocation19 + $0x1b4] sm:$0xf]
    %v4700 = vld [vmem:[#allocation19 + $0x1b8] sm:$0xf]
    %v4701 = vld [vmem:[#allocation19 + $0x1bc] sm:$0xf]
    %v4702 = vld [vmem:[#allocation19 + $0x1c0] sm:$0xf]
    %v4703 = vld [vmem:[#allocation19 + $0x1c4] sm:$0xf]
    %v4704 = vld [vmem:[#allocation19 + $0x1c8] sm:$0xf]
    %v4705 = vld [vmem:[#allocation19 + $0x1cc] sm:$0xf]
    %v4706 = vld [vmem:[#allocation19 + $0x1d0] sm:$0xf]
    %v4707 = vld [vmem:[#allocation19 + $0x1d4] sm:$0xf]
    %v4708 = vld [vmem:[#allocation19 + $0x1d8] sm:$0xf]
    %v4709 = vld [vmem:[#allocation19 + $0x1dc] sm:$0xf]
    %v4710 = vld [vmem:[#allocation19 + $0x1e0] sm:$0xf]
    %v4711 = vld [vmem:[#allocation19 + $0x1e4] sm:$0xf]
    %v4712 = vld [vmem:[#allocation19 + $0x1e8] sm:$0xf]
    %v4713 = vld [vmem:[#allocation19 + $0x1ec] sm:$0xf]
    %v4714 = vld [vmem:[#allocation19 + $0x1f0] sm:$0xf]
    %v4715 = vld [vmem:[#allocation19 + $0x1f4] sm:$0xf]
    %v4716 = vld [vmem:[#allocation19 + $0x1f8] sm:$0xf]
    %v4717 = vld [vmem:[#allocation19 + $0x1fc] sm:$0xf]
    %v4718 = vld [vmem:[#allocation20] sm:$0x1]
    %v4720 = vlaneseq
    %v4721 = vshrl.u32 %v4720, 7
    %v4722 = vsub.s32 0, %v4721
    %v4723 = vrot.slane %v4718, %v4722
    %v4853 = vunpack.c.l.b16 %v4590
    %v4854 = vunpack.c.l.b16 %v4591
    %v4855 = vunpack.c.l.b16 %v4592
    %v4856 = vunpack.c.l.b16 %v4593
    %v4857 = vunpack.c.l.b16 %v4594
    %v4858 = vunpack.c.l.b16 %v4595
    %v4859 = vunpack.c.l.b16 %v4596
    %v4860 = vunpack.c.l.b16 %v4597
    %v4861 = vunpack.c.l.b16 %v4598
    %v4862 = vunpack.c.l.b16 %v4599
    %v4863 = vunpack.c.l.b16 %v4600
    %v4864 = vunpack.c.l.b16 %v4601
    %v4865 = vunpack.c.l.b16 %v4602
    %v4866 = vunpack.c.l.b16 %v4603
    %v4867 = vunpack.c.l.b16 %v4604
    %v4868 = vunpack.c.l.b16 %v4605
    %v4869 = vunpack.c.l.b16 %v4606
    %v4870 = vunpack.c.l.b16 %v4607
    %v4871 = vunpack.c.l.b16 %v4608
    %v4872 = vunpack.c.l.b16 %v4609
    %v4873 = vunpack.c.l.b16 %v4610
    %v4874 = vunpack.c.l.b16 %v4611
    %v4875 = vunpack.c.l.b16 %v4612
    %v4876 = vunpack.c.l.b16 %v4613
    %v4877 = vunpack.c.l.b16 %v4614
    %v4878 = vunpack.c.l.b16 %v4615
    %v4879 = vunpack.c.l.b16 %v4616
    %v4880 = vunpack.c.l.b16 %v4617
    %v4881 = vunpack.c.l.b16 %v4618
    %v4882 = vunpack.c.l.b16 %v4619
    %v4883 = vunpack.c.l.b16 %v4620
    %v4884 = vunpack.c.l.b16 %v4621
    %v4885 = vunpack.c.l.b16 %v4622
    %v4886 = vunpack.c.l.b16 %v4623
    %v4887 = vunpack.c.l.b16 %v4624
    %v4888 = vunpack.c.l.b16 %v4625
    %v4889 = vunpack.c.l.b16 %v4626
    %v4890 = vunpack.c.l.b16 %v4627
    %v4891 = vunpack.c.l.b16 %v4628
    %v4892 = vunpack.c.l.b16 %v4629
    %v4893 = vunpack.c.l.b16 %v4630
    %v4894 = vunpack.c.l.b16 %v4631
    %v4895 = vunpack.c.l.b16 %v4632
    %v4896 = vunpack.c.l.b16 %v4633
    %v4897 = vunpack.c.l.b16 %v4634
    %v4898 = vunpack.c.l.b16 %v4635
    %v4899 = vunpack.c.l.b16 %v4636
    %v4900 = vunpack.c.l.b16 %v4637
    %v4901 = vunpack.c.l.b16 %v4638
    %v4902 = vunpack.c.l.b16 %v4639
    %v4903 = vunpack.c.l.b16 %v4640
    %v4904 = vunpack.c.l.b16 %v4641
    %v4905 = vunpack.c.l.b16 %v4642
    %v4906 = vunpack.c.l.b16 %v4643
    %v4907 = vunpack.c.l.b16 %v4644
    %v4908 = vunpack.c.l.b16 %v4645
    %v4909 = vunpack.c.l.b16 %v4646
    %v4910 = vunpack.c.l.b16 %v4647
    %v4911 = vunpack.c.l.b16 %v4648
    %v4912 = vunpack.c.l.b16 %v4649
    %v4913 = vunpack.c.l.b16 %v4650
    %v4914 = vunpack.c.l.b16 %v4651
    %v4915 = vunpack.c.l.b16 %v4652
    %v4916 = vunpack.c.l.b16 %v4653
    %v4917 = vunpack.c.l.b16 %v4654
    %v4918 = vunpack.c.l.b16 %v4655
    %v4919 = vunpack.c.l.b16 %v4656
    %v4920 = vunpack.c.l.b16 %v4657
    %v4921 = vunpack.c.l.b16 %v4658
    %v4922 = vunpack.c.l.b16 %v4659
    %v4923 = vunpack.c.l.b16 %v4660
    %v4924 = vunpack.c.l.b16 %v4661
    %v4925 = vunpack.c.l.b16 %v4662
    %v4926 = vunpack.c.l.b16 %v4663
    %v4927 = vunpack.c.l.b16 %v4664
    %v4928 = vunpack.c.l.b16 %v4665
    %v4929 = vunpack.c.l.b16 %v4666
    %v4930 = vunpack.c.l.b16 %v4667
    %v4931 = vunpack.c.l.b16 %v4668
    %v4932 = vunpack.c.l.b16 %v4669
    %v4933 = vunpack.c.l.b16 %v4670
    %v4934 = vunpack.c.l.b16 %v4671
    %v4935 = vunpack.c.l.b16 %v4672
    %v4936 = vunpack.c.l.b16 %v4673
    %v4937 = vunpack.c.l.b16 %v4674
    %v4938 = vunpack.c.l.b16 %v4675
    %v4939 = vunpack.c.l.b16 %v4676
    %v4940 = vunpack.c.l.b16 %v4677
    %v4941 = vunpack.c.l.b16 %v4678
    %v4942 = vunpack.c.l.b16 %v4679
    %v4943 = vunpack.c.l.b16 %v4680
    %v4944 = vunpack.c.l.b16 %v4681
    %v4945 = vunpack.c.l.b16 %v4682
    %v4946 = vunpack.c.l.b16 %v4683
    %v4947 = vunpack.c.l.b16 %v4684
    %v4948 = vunpack.c.l.b16 %v4685
    %v4949 = vunpack.c.l.b16 %v4686
    %v4950 = vunpack.c.l.b16 %v4687
    %v4951 = vunpack.c.l.b16 %v4688
    %v4952 = vunpack.c.l.b16 %v4689
    %v4953 = vunpack.c.l.b16 %v4690
    %v4954 = vunpack.c.l.b16 %v4691
    %v4955 = vunpack.c.l.b16 %v4692
    %v4956 = vunpack.c.l.b16 %v4693
    %v4957 = vunpack.c.l.b16 %v4694
    %v4958 = vunpack.c.l.b16 %v4695
    %v4959 = vunpack.c.l.b16 %v4696
    %v4960 = vunpack.c.l.b16 %v4697
    %v4961 = vunpack.c.l.b16 %v4698
    %v4962 = vunpack.c.l.b16 %v4699
    %v4963 = vunpack.c.l.b16 %v4700
    %v4964 = vunpack.c.l.b16 %v4701
    %v4965 = vunpack.c.l.b16 %v4702
    %v4966 = vunpack.c.l.b16 %v4703
    %v4967 = vunpack.c.l.b16 %v4704
    %v4968 = vunpack.c.l.b16 %v4705
    %v4969 = vunpack.c.l.b16 %v4706
    %v4970 = vunpack.c.l.b16 %v4707
    %v4971 = vunpack.c.l.b16 %v4708
    %v4972 = vunpack.c.l.b16 %v4709
    %v4973 = vunpack.c.l.b16 %v4710
    %v4974 = vunpack.c.l.b16 %v4711
    %v4975 = vunpack.c.l.b16 %v4712
    %v4976 = vunpack.c.l.b16 %v4713
    %v4977 = vunpack.c.l.b16 %v4714
    %v4978 = vunpack.c.l.b16 %v4715
    %v4979 = vunpack.c.l.b16 %v4716
    %v4980 = vunpack.c.l.b16 %v4717
    %v4981 = vpack.c.b16 %v4854, %v4853
    %v4982 = vpack.c.b16 %v4856, %v4855
    %v4983 = vpack.c.b16 %v4858, %v4857
    %v4984 = vpack.c.b16 %v4860, %v4859
    %v4985 = vpack.c.b16 %v4862, %v4861
    %v4986 = vpack.c.b16 %v4864, %v4863
    %v4987 = vpack.c.b16 %v4866, %v4865
    %v4988 = vpack.c.b16 %v4868, %v4867
    %v4989 = vpack.c.b16 %v4870, %v4869
    %v4990 = vpack.c.b16 %v4872, %v4871
    %v4991 = vpack.c.b16 %v4874, %v4873
    %v4992 = vpack.c.b16 %v4876, %v4875
    %v4993 = vpack.c.b16 %v4878, %v4877
    %v4994 = vpack.c.b16 %v4880, %v4879
    %v4995 = vpack.c.b16 %v4882, %v4881
    %v4996 = vpack.c.b16 %v4884, %v4883
    %v4997 = vpack.c.b16 %v4886, %v4885
    %v4998 = vpack.c.b16 %v4888, %v4887
    %v4999 = vpack.c.b16 %v4890, %v4889
    %v5000 = vpack.c.b16 %v4892, %v4891
    %v5001 = vpack.c.b16 %v4894, %v4893
    %v5002 = vpack.c.b16 %v4896, %v4895
    %v5003 = vpack.c.b16 %v4898, %v4897
    %v5004 = vpack.c.b16 %v4900, %v4899
    %v5005 = vpack.c.b16 %v4902, %v4901
    %v5006 = vpack.c.b16 %v4904, %v4903
    %v5007 = vpack.c.b16 %v4906, %v4905
    %v5008 = vpack.c.b16 %v4908, %v4907
    %v5009 = vpack.c.b16 %v4910, %v4909
    %v5010 = vpack.c.b16 %v4912, %v4911
    %v5011 = vpack.c.b16 %v4914, %v4913
    %v5012 = vpack.c.b16 %v4916, %v4915
    %v5013 = vpack.c.b16 %v4918, %v4917
    %v5014 = vpack.c.b16 %v4920, %v4919
    %v5015 = vpack.c.b16 %v4922, %v4921
    %v5016 = vpack.c.b16 %v4924, %v4923
    %v5017 = vpack.c.b16 %v4926, %v4925
    %v5018 = vpack.c.b16 %v4928, %v4927
    %v5019 = vpack.c.b16 %v4930, %v4929
    %v5020 = vpack.c.b16 %v4932, %v4931
    %v5021 = vpack.c.b16 %v4934, %v4933
    %v5022 = vpack.c.b16 %v4936, %v4935
    %v5023 = vpack.c.b16 %v4938, %v4937
    %v5024 = vpack.c.b16 %v4940, %v4939
    %v5025 = vpack.c.b16 %v4942, %v4941
    %v5026 = vpack.c.b16 %v4944, %v4943
    %v5027 = vpack.c.b16 %v4946, %v4945
    %v5028 = vpack.c.b16 %v4948, %v4947
    %v5029 = vpack.c.b16 %v4950, %v4949
    %v5030 = vpack.c.b16 %v4952, %v4951
    %v5031 = vpack.c.b16 %v4954, %v4953
    %v5032 = vpack.c.b16 %v4956, %v4955
    %v5033 = vpack.c.b16 %v4958, %v4957
    %v5034 = vpack.c.b16 %v4960, %v4959
    %v5035 = vpack.c.b16 %v4962, %v4961
    %v5036 = vpack.c.b16 %v4964, %v4963
    %v5037 = vpack.c.b16 %v4966, %v4965
    %v5038 = vpack.c.b16 %v4968, %v4967
    %v5039 = vpack.c.b16 %v4970, %v4969
    %v5040 = vpack.c.b16 %v4972, %v4971
    %v5041 = vpack.c.b16 %v4974, %v4973
    %v5042 = vpack.c.b16 %v4976, %v4975
    %v5043 = vpack.c.b16 %v4978, %v4977
    %v5044 = vpack.c.b16 %v4980, %v4979
    %5109 = vmatprep.subr.bf16.mxu0 0
    %5110 = vmatpush1.bf16.msra.mxu0 %v4981
    %5111 = vmatprep.subr.bf16.mxu0 0
    %5112 = vmatpush1.bf16.msra.mxu0 %v4982
    %5113 = vmatprep.subr.bf16.mxu0 0
    %5114 = vmatpush1.bf16.msra.mxu0 %v4983
    %5115 = vmatprep.subr.bf16.mxu0 0
    %5116 = vmatpush1.bf16.msra.mxu0 %v4984
    %5117 = vmatprep.subr.bf16.mxu0 0
    %5118 = vmatpush1.bf16.msra.mxu0 %v4985
    %5119 = vmatprep.subr.bf16.mxu0 0
    %5120 = vmatpush1.bf16.msra.mxu0 %v4986
    %5121 = vmatprep.subr.bf16.mxu0 0
    %5122 = vmatpush1.bf16.msra.mxu0 %v4987
    %5123 = vmatprep.subr.bf16.mxu0 0
    %5124 = vmatpush1.bf16.msra.mxu0 %v4988
    %5125 = vmatprep.subr.bf16.mxu0 0
    %5126 = vmatpush1.bf16.msra.mxu0 %v4989
    %5127 = vmatprep.subr.bf16.mxu0 0
    %5128 = vmatpush1.bf16.msra.mxu0 %v4990
    %5129 = vmatprep.subr.bf16.mxu0 0
    %5130 = vmatpush1.bf16.msra.mxu0 %v4991
    %5131 = vmatprep.subr.bf16.mxu0 0
    %5132 = vmatpush1.bf16.msra.mxu0 %v4992
    %5133 = vmatprep.subr.bf16.mxu0 0
    %5134 = vmatpush1.bf16.msra.mxu0 %v4993
    %5135 = vmatprep.subr.bf16.mxu0 0
    %5136 = vmatpush1.bf16.msra.mxu0 %v4994
    %5137 = vmatprep.subr.bf16.mxu0 0
    %5138 = vmatpush1.bf16.msra.mxu0 %v4995
    %5139 = vmatprep.subr.bf16.mxu0 0
    %5140 = vmatpush1.bf16.msra.mxu0 %v4996
    %5141 = vmatprep.mubr.bf16.mxu0 %v4575
    %5142 = vmatmul.mubr.bf16.gmra.mrb[0].mxu0 %v4574
    %v5143 = vpop.f32.mrb[0].mxu0
    %v5144 = vadd.f32 %v4723, %v5143
    %v5145 = vpop.f32.mrb[0].mxu0
    %v5146 = vpop.f32.mrb[0].mxu0
    %v5147 = vadd.f32 %v4723, %v5146
    %v5148 = vpop.f32.mrb[0].mxu0
    %5149 = vmatprep.mubr.bf16.mxu0 %v4583
    %5150 = vmatmul.mubr.bf16.gmra.mrb[0].mxu0 %v4582
    %v5151 = vpop.f32.mrb[0].mxu0
    %v5152 = vadd.f32 %v4723, %v5151
    %v5153 = vpop.f32.mrb[0].mxu0
    %v5154 = vpop.f32.mrb[0].mxu0
    %v5155 = vadd.f32 %v4723, %v5154
    %v5156 = vpop.f32.mrb[0].mxu0
    %5157 = vdwg.mxu0
    %5158 = vmatprep.subr.bf16.mxu0 0
    %5159 = vmatpush1.bf16.msra.mxu0 %v4997
    %5160 = vmatprep.subr.bf16.mxu0 0
    %5161 = vmatpush1.bf16.msra.mxu0 %v4998
    %5162 = vmatprep.subr.bf16.mxu0 0
    %5163 = vmatpush1.bf16.msra.mxu0 %v4999
    %5164 = vmatprep.subr.bf16.mxu0 0
    %5165 = vmatpush1.bf16.msra.mxu0 %v5000
    %5166 = vmatprep.subr.bf16.mxu0 0
    %5167 = vmatpush1.bf16.msra.mxu0 %v5001
    %5168 = vmatprep.subr.bf16.mxu0 0
    %5169 = vmatpush1.bf16.msra.mxu0 %v5002
    %5170 = vmatprep.subr.bf16.mxu0 0
    %5171 = vmatpush1.bf16.msra.mxu0 %v5003
    %5172 = vmatprep.subr.bf16.mxu0 0
    %5173 = vmatpush1.bf16.msra.mxu0 %v5004
    %5174 = vmatprep.subr.bf16.mxu0 0
    %5175 = vmatpush1.bf16.msra.mxu0 %v5005
    %5176 = vmatprep.subr.bf16.mxu0 0
    %5177 = vmatpush1.bf16.msra.mxu0 %v5006
    %5178 = vmatprep.subr.bf16.mxu0 0
    %5179 = vmatpush1.bf16.msra.mxu0 %v5007
    %5180 = vmatprep.subr.bf16.mxu0 0
    %5181 = vmatpush1.bf16.msra.mxu0 %v5008
    %5182 = vmatprep.subr.bf16.mxu0 0
    %5183 = vmatpush1.bf16.msra.mxu0 %v5009
    %5184 = vmatprep.subr.bf16.mxu0 0
    %5185 = vmatpush1.bf16.msra.mxu0 %v5010
    %5186 = vmatprep.subr.bf16.mxu0 0
    %5187 = vmatpush1.bf16.msra.mxu0 %v5011
    %5188 = vmatprep.subr.bf16.mxu0 0
    %5189 = vmatpush1.bf16.msra.mxu0 %v5012
    %5190 = vmatprep.mubr.bf16.mxu0 %v4577
    %5191 = vmatmul.mubr.bf16.gmra.mrb[0].mxu0 %v4576
    %v5192 = vpop.f32.mrb[0].mxu0
    %v5193 = vadd.f32 %v5144, %v5192
    %v5194 = vpop.f32.mrb[0].mxu0
    %v5195 = vpop.f32.mrb[0].mxu0
    %v5196 = vadd.f32 %v5147, %v5195
    %v5197 = vpop.f32.mrb[0].mxu0
    %5198 = vmatprep.mubr.bf16.mxu0 %v4585
    %5199 = vmatmul.mubr.bf16.gmra.mrb[0].mxu0 %v4584
    %v5200 = vpop.f32.mrb[0].mxu0
    %v5201 = vadd.f32 %v5152, %v5200
    %v5202 = vpop.f32.mrb[0].mxu0
    %v5203 = vpop.f32.mrb[0].mxu0
    %v5204 = vadd.f32 %v5155, %v5203
    %v5205 = vpop.f32.mrb[0].mxu0
    %5206 = vdwg.mxu0
    %5207 = vmatprep.subr.bf16.mxu0 0
    %5208 = vmatpush1.bf16.msra.mxu0 %v5013
    %5209 = vmatprep.subr.bf16.mxu0 0
    %5210 = vmatpush1.bf16.msra.mxu0 %v5014
    %5211 = vmatprep.subr.bf16.mxu0 0
    %5212 = vmatpush1.bf16.msra.mxu0 %v5015
    %5213 = vmatprep.subr.bf16.mxu0 0
    %5214 = vmatpush1.bf16.msra.mxu0 %v5016
    %5215 = vmatprep.subr.bf16.mxu0 0
    %5216 = vmatpush1.bf16.msra.mxu0 %v5017
    %5217 = vmatprep.subr.bf16.mxu0 0
    %5218 = vmatpush1.bf16.msra.mxu0 %v5018
    %5219 = vmatprep.subr.bf16.mxu0 0
    %5220 = vmatpush1.bf16.msra.mxu0 %v5019
    %5221 = vmatprep.subr.bf16.mxu0 0
    %5222 = vmatpush1.bf16.msra.mxu0 %v5020
    %5223 = vmatprep.subr.bf16.mxu0 0
    %5224 = vmatpush1.bf16.msra.mxu0 %v5021
    %5225 = vmatprep.subr.bf16.mxu0 0
    %5226 = vmatpush1.bf16.msra.mxu0 %v5022
    %5227 = vmatprep.subr.bf16.mxu0 0
    %5228 = vmatpush1.bf16.msra.mxu0 %v5023
    %5229 = vmatprep.subr.bf16.mxu0 0
    %5230 = vmatpush1.bf16.msra.mxu0 %v5024
    %5231 = vmatprep.subr.bf16.mxu0 0
    %5232 = vmatpush1.bf16.msra.mxu0 %v5025
    %5233 = vmatprep.subr.bf16.mxu0 0
    %5234 = vmatpush1.bf16.msra.mxu0 %v5026
    %5235 = vmatprep.subr.bf16.mxu0 0
    %5236 = vmatpush1.bf16.msra.mxu0 %v5027
    %5237 = vmatprep.subr.bf16.mxu0 0
    %5238 = vmatpush1.bf16.msra.mxu0 %v5028
    %5239 = vmatprep.mubr.bf16.mxu0 %v4579
    %5240 = vmatmul.mubr.bf16.gmra.mrb[0].mxu0 %v4578
    %v5241 = vpop.f32.mrb[0].mxu0
    %v5242 = vadd.f32 %v5193, %v5241
    %v5243 = vpop.f32.mrb[0].mxu0
    %v5244 = vpop.f32.mrb[0].mxu0
    %v5245 = vadd.f32 %v5196, %v5244
    %v5246 = vpop.f32.mrb[0].mxu0
    %5247 = vmatprep.mubr.bf16.mxu0 %v4587
    %5248 = vmatmul.mubr.bf16.gmra.mrb[0].mxu0 %v4586
    %v5249 = vpop.f32.mrb[0].mxu0
    %v5250 = vadd.f32 %v5201, %v5249
    %v5251 = vpop.f32.mrb[0].mxu0
    %v5252 = vpop.f32.mrb[0].mxu0
    %v5253 = vadd.f32 %v5204, %v5252
    %v5254 = vpop.f32.mrb[0].mxu0
    %5255 = vdwg.mxu0
    %5256 = vmatprep.subr.bf16.mxu0 0
    %5257 = vmatpush1.bf16.msra.mxu0 %v5029
    %5258 = vmatprep.subr.bf16.mxu0 0
    %5259 = vmatpush1.bf16.msra.mxu0 %v5030
    %5260 = vmatprep.subr.bf16.mxu0 0
    %5261 = vmatpush1.bf16.msra.mxu0 %v5031
    %5262 = vmatprep.subr.bf16.mxu0 0
    %5263 = vmatpush1.bf16.msra.mxu0 %v5032
    %5264 = vmatprep.subr.bf16.mxu0 0
    %5265 = vmatpush1.bf16.msra.mxu0 %v5033
    %5266 = vmatprep.subr.bf16.mxu0 0
    %5267 = vmatpush1.bf16.msra.mxu0 %v5034
    %5268 = vmatprep.subr.bf16.mxu0 0
    %5269 = vmatpush1.bf16.msra.mxu0 %v5035
    %5270 = vmatprep.subr.bf16.mxu0 0
    %5271 = vmatpush1.bf16.msra.mxu0 %v5036
    %5272 = vmatprep.subr.bf16.mxu0 0
    %5273 = vmatpush1.bf16.msra.mxu0 %v5037
    %5274 = vmatprep.subr.bf16.mxu0 0
    %5275 = vmatpush1.bf16.msra.mxu0 %v5038
    %5276 = vmatprep.subr.bf16.mxu0 0
    %5277 = vmatpush1.bf16.msra.mxu0 %v5039
    %5278 = vmatprep.subr.bf16.mxu0 0
    %5279 = vmatpush1.bf16.msra.mxu0 %v5040
    %5280 = vmatprep.subr.bf16.mxu0 0
    %5281 = vmatpush1.bf16.msra.mxu0 %v5041
    %5282 = vmatprep.subr.bf16.mxu0 0
    %5283 = vmatpush1.bf16.msra.mxu0 %v5042
    %5284 = vmatprep.subr.bf16.mxu0 0
    %5285 = vmatpush1.bf16.msra.mxu0 %v5043
    %5286 = vmatprep.subr.bf16.mxu0 0
    %5287 = vmatpush1.bf16.msra.mxu0 %v5044
    %5288 = vmatprep.mubr.bf16.mxu0 %v4581
    %5289 = vmatmul.mubr.bf16.gmra.mrb[0].mxu0 %v4580
    %v5290 = vpop.f32.mrb[0].mxu0
    %v5291 = vadd.f32 %v5242, %v5290
    %v5292 = vpop.f32.mrb[0].mxu0
    %v5293 = vpop.f32.mrb[0].mxu0
    %v5294 = vadd.f32 %v5245, %v5293
    %v5295 = vpop.f32.mrb[0].mxu0
    %5296 = vmatprep.mubr.bf16.mxu0 %v4589
    %5297 = vmatmul.mubr.bf16.gmra.mrb[0].mxu0 %v4588
    %v5298 = vpop.f32.mrb[0].mxu0
    %v5299 = vadd.f32 %v5250, %v5298
    %v5300 = vpop.f32.mrb[0].mxu0
    %v5301 = vpop.f32.mrb[0].mxu0
    %v5302 = vadd.f32 %v5253, %v5301
    %v5303 = vpop.f32.mrb[0].mxu0
    %5304 = vdwg.mxu0
    %5305 = vst [vmem:[#allocation22] sm:$0xff] %v5291
    %5306 = vst [vmem:[#allocation22 + $0x8] sm:$0xff] %v5294
    %5307 = vst [vmem:[#allocation22 + $0x10] sm:$0xff] %v5299
    %5308 = vst [vmem:[#allocation22 + $0x18] sm:$0xff] %v5302
    // Predicated region
    $region98: #{tpu_custom_call.1} parent=1 // pred_check
      _
    $region99: #{tpu_custom_call.1} parent=1 // pred_check_branch
      %5310 = sbr.rel (0) target = $region101
    $region100: #{tpu_custom_call.1} parent=1 // pred_region
      %s5312 = ssub.s32 512, 512
      %5313 = vsyncadd [#allocation4], %s5312
      %s5314 = sshll.u32 [#allocation22], 4
      %s5315 = int_to_ptr.vmem [resolvable:$true] %s5314
      %5320 = dma.vmem_to_hbm [thread:$0]  %s5315, 512, %s12, [#allocation4], 128, 128, 8
    $region101: #{tpu_custom_call.1} parent=1 // pred_fallthru
      _
    // Predicated region
    $region102: #{tpu_custom_call.1} parent=1 // pred_check
      _
    $region103: #{tpu_custom_call.1} parent=1 // pred_check_branch
      %5322 = sbr.rel (0) target = $region105
    $region104: #{tpu_custom_call.1} parent=1 // pred_region
      %5323 = dma.done [#allocation4], 512
    $region105: #{tpu_custom_call.1} parent=1 // pred_fallthru
      _
    %5324 = vsyncpa [#allocation3], 1
    %5325 = vsyncpa [#allocation6], 1
    %5326 = vsyncpa [#allocation9], 1
    %5327 = vsyncpa [#allocation12], 1
    %5328 = vsyncpa [#allocation15], 1
    %5329 = vsyncpa [#allocation18], 1
    %5330 = vsyncpa [#allocation21], 1
    %5331 = vsyncpa [#allocation4], 1

</llo_original>
